<compile_context>
chip_gen: v6e
topology: v6e:2x2x1
jax: 0.10.0
libtpu: 0.0.40
codegen_flags: <defaults>
</compile_context>

<pallas_src>
import jax
import jax.numpy as jnp
import numpy as np
from jax.experimental import pallas as pl
from jax.experimental.pallas import tpu as pltpu

LATENT_SIZE = 29
D_IN = LATENT_SIZE + 3                    # 32
HIDDEN = 64
DIMS = [D_IN, HIDDEN, HIDDEN, HIDDEN, HIDDEN, 1]
H1 = DIMS[2] - DIMS[0]                    # lin1 out dim = 32 (latent_in at layer 2)
LN_EPS = 1e-5

LIN_IN = [DIMS[0], DIMS[1], DIMS[2], DIMS[3], DIMS[4]]               # [32,64,64,64,64]
LIN_OUT = [DIMS[1], DIMS[2] - DIMS[0], DIMS[3], DIMS[4], DIMS[5]]    # [64,32,64,64, 1]

AUX_SLOT = HIDDEN                         # 64 rows per packed parameter column
# aux (832, 1) row layout, 64 rows per slot (32-wide params zero-padded):
#   0:lin0.b  1:bn0.g  2:bn0.b    3:lin1.b  4:bn1.g  5:bn1.b
#   6:lin2.b  7:bn2.g  8:bn2.b    9:lin3.b 10:bn3.g 11:bn3.b   12:lin4.b (row 0)


def _round_up(v, m):
    return ((v + m - 1) // m) * m


def _default_affine_dtype(compute_dtype):
    """bf16 affine tail only where the VALU has packed bf16 (v6e/v7x); else f32."""
    if np.dtype(compute_dtype) != np.dtype(jnp.bfloat16):
        return jnp.float32
    try:
        kind = jax.devices()[0].device_kind.lower()
    except Exception:
        kind = ""
    return jnp.bfloat16 if ("v6" in kind or "v7" in kind) else jnp.float32


def _make_kernel(affine_dtype):
    adt = affine_dtype

    def decoder_kernel(x_ref, w0_ref, w1_ref, w2a_ref, w2b_ref, w3_ref, w4_ref,
                       aux_ref, out_ref):
        """One grid step: tm points, feature-major (features on sublanes, points on lanes)."""
        cdt = w0_ref.dtype                      # MXU operand dtype (bf16 or f32)

        def aux(slot, dim=HIDDEN):
            r = slot * AUX_SLOT
            return aux_ref[r:r + dim, :]        # (dim, 1) f32 column

        def mm(w_ref, a):
            return jnp.dot(w_ref[...], a.astype(cdt),
                           preferred_element_type=jnp.float32)

        def bias_ln_relu(h, slot, dim):
            # Linear bias + one-pass LayerNorm stats over the feature (sublane) axis,
            # all in f32; then the affine tail (center/scale/gamma/beta/ReLU) in `adt`.
            h = h + aux(slot, dim)                                  # (dim, TM) f32
            inv = 1.0 / dim
            mean = jnp.sum(h, axis=0, keepdims=True) * inv          # (1, TM) f32
            msq = jnp.sum(h * h, axis=0, keepdims=True) * inv       # (1, TM) f32
            inv_std = jax.lax.rsqrt(msq - mean * mean + LN_EPS)     # EUP, f32
            hn = (h.astype(adt) - mean.astype(adt)) * inv_std.astype(adt)
            g = aux(slot + 1, dim).astype(adt)                      # gamma
            b = aux(slot + 2, dim).astype(adt)                      # beta
            return jnp.maximum(hn * g + b, 0.0)                     # ReLU, stays in adt

        x = x_ref[...]                                              # (D_IN, TM) in cdt

        # lin0: 32 -> 64, LayerNorm, ReLU
        h = bias_ln_relu(mm(w0_ref, x), 0, HIDDEN)
        # lin1: 64 -> 32, LayerNorm, ReLU
        h = bias_ln_relu(mm(w1_ref, h), 3, H1)
        # lin2 (latent_in): cat([h, input]) @ W2^T == W2[:, :32] @ h + W2[:, 32:] @ input
        h = bias_ln_relu(mm(w2a_ref, h) + mm(w2b_ref, x), 6, HIDDEN)
        # lin3: 64 -> 64, LayerNorm, ReLU
        h = bias_ln_relu(mm(w3_ref, h), 9, HIDDEN)
        # lin4: 64 -> 1 on the MXU (lane-dense (1, TM) result), + b4, final tanh (self.th)
        b4 = aux_ref[12 * AUX_SLOT:12 * AUX_SLOT + 1, :]            # (1, 1) f32
        y = mm(w4_ref, h) + b4                                      # (1, TM) f32
        out_ref[...] = jnp.tanh(y)

    return decoder_kernel


def decoder_forward(x, kparams, *, tm=None, compute_dtype=jnp.bfloat16,
                    ln_affine_dtype=None, vmem_limit_bytes=None,
                    x_feature_major=False):
    """x: (N, latent_size + 3) row-major like the PyTorch module (or (D_IN, N) if
    x_feature_major=True).  Returns (N, 1) float32."""
    w0, w1, w2a, w2b, w3, w4, aux = kparams

    if x_feature_major:
        d_in, N = x.shape
        x_t = x.astype(compute_dtype)
    else:
        N, d_in = x.shape
        # Cast BEFORE the transpose so the relayout pass moves half-width data; under
        # one jit the cast + transpose + pad fuse into a single pass.
        x_t = jnp.transpose(x.astype(compute_dtype))
    assert d_in == D_IN

    if tm is None:
        # Big enough to amortize ~0.35us/step overhead, small enough that medium-N
        # grids keep >=4 steps for v7x's two TensorCores.  Multiple of 256/512.
        tm = min(4096, max(512, _round_up(pl.cdiv(N, 4), 512)))
    assert tm % 128 == 0, "tm must be a multiple of 128 (prefer 256 on v6e/v7x)"

    if ln_affine_dtype is None:
        ln_affine_dtype = _default_affine_dtype(compute_dtype)

    if vmem_limit_bytes is None and tm > 4096:
        # Large sweeps can exceed v5e's 16 MiB scoped-VMEM default.
        vmem_limit_bytes = 64 << 20

    n_pad = (-N) % tm
    if n_pad:
        x_t = jnp.pad(x_t, ((0, 0), (0, n_pad)))
    n_tot = N + n_pad
    grid = (n_tot // tm,)

    weights = tuple(w.astype(compute_dtype) for w in (w0, w1, w2a, w2b, w3, w4))
    full = lambda a: pl.BlockSpec(a.shape, lambda i: (0, 0))    # resident, DMA'd once

    out = pl.pallas_call(
        _make_kernel(ln_affine_dtype),
        out_shape=jax.ShapeDtypeStruct((1, n_tot), jnp.float32),
        grid_spec=pltpu.PrefetchScalarGridSpec(
            num_scalar_prefetch=0,
            grid=grid,
            in_specs=[pl.BlockSpec((D_IN, tm), lambda i: (0, i))]
                     + [full(w) for w in weights] + [full(aux)],
            out_specs=pl.BlockSpec((1, tm), lambda i: (0, i)),
        ),
        compiler_params=pltpu.CompilerParams(
            dimension_semantics=("parallel",),      # batch axis splits across TCs (v7x)
            vmem_limit_bytes=vmem_limit_bytes),
    )(x_t, *weights, aux)
    return out[0, :N].reshape(N, 1)


def init_params(key):
    """Deterministic synthetic parameters in PyTorch layout: weight (out,in), bias (out,).
    LayerNorm affine params perturbed away from 1/0 so the affine path is exercised."""
    p = {}
    keys = jax.random.split(key, 4 * 5)
    for l in range(5):
        fi, fo = LIN_IN[l], LIN_OUT[l]
        s = 1.0 / float(fi) ** 0.5
        p[f"lin{l}.w"] = jax.random.uniform(keys[4 * l + 0], (fo, fi), jnp.float32, -s, s)
        p[f"lin{l}.b"] = jax.random.uniform(keys[4 * l + 1], (fo,), jnp.float32, -s, s)
        if l < 4:                                   # norm_layers = (0, 1, 2, 3)
            p[f"bn{l}.g"] = 1.0 + 0.1 * jax.random.normal(keys[4 * l + 2], (fo,), jnp.float32)
            p[f"bn{l}.b"] = 0.1 * jax.random.normal(keys[4 * l + 3], (fo,), jnp.float32)
    return p


def pack_params(p):
    """PyTorch-layout params -> kernel params: 6 (out,in) weights + one packed aux column."""
    w2 = p["lin2.w"]                                # (64, 64): inputs = [hidden(32) | input(32)]
    w2a, w2b = w2[:, :H1], w2[:, H1:]
    w4 = p["lin4.w"].reshape(1, HIDDEN)             # (1, 64) resident MXU operand

    def col(v):
        c = jnp.zeros((AUX_SLOT,), jnp.float32).at[:v.shape[0]].set(v.astype(jnp.float32))
        return c.reshape(AUX_SLOT, 1)

    aux = jnp.concatenate(
        [col(p["lin0.b"]), col(p["bn0.g"]), col(p["bn0.b"]),
         col(p["lin1.b"]), col(p["bn1.g"]), col(p["bn1.b"]),
         col(p["lin2.b"]), col(p["bn2.g"]), col(p["bn2.b"]),
         col(p["lin3.b"]), col(p["bn3.g"]), col(p["bn3.b"]),
         col(p["lin4.b"])],
        axis=0)                                     # (13 * 64, 1) = (832, 1)
    return (p["lin0.w"], p["lin1.w"], w2a, w2b, p["lin3.w"], w4, aux)


def decoder_reference(x, p):
    """Pure-JAX mirror of the PyTorch forward (biases included, two-pass LayerNorm)."""
    def ln(h, g, b):
        mu = jnp.mean(h, axis=-1, keepdims=True)
        var = jnp.mean((h - mu) ** 2, axis=-1, keepdims=True)
        return (h - mu) * jax.lax.rsqrt(var + LN_EPS) * g + b

    relu = lambda v: jnp.maximum(v, 0.0)
    inp = x
    h = relu(ln(x @ p["lin0.w"].T + p["lin0.b"], p["bn0.g"], p["bn0.b"]))
    h = relu(ln(h @ p["lin1.w"].T + p["lin1.b"], p["bn1.g"], p["bn1.b"]))
    h = jnp.concatenate([h, inp], axis=1)
    h = relu(ln(h @ p["lin2.w"].T + p["lin2.b"], p["bn2.g"], p["bn2.b"]))
    h = relu(ln(h @ p["lin3.w"].T + p["lin3.b"], p["bn3.g"], p["bn3.b"]))
    return jnp.tanh(h @ p["lin4.w"].T + p["lin4.b"])


if __name__ == "__main__":
    key = jax.random.PRNGKey(0)
    k_in, k_par = jax.random.split(key)

    N = 2048                                # query points; adaptive tm=512 -> 4 grid steps
    x = jax.random.normal(k_in, (N, D_IN), jnp.float32)
    params = init_params(k_par)
    kparams = pack_params(params)

    ref = decoder_reference(x, params)

    # 1) Strict semantics check: f32 MXU operands, f32 affine tail.
    fwd_f32 = jax.jit(lambda a, kp: decoder_forward(
        a, kp, compute_dtype=jnp.float32, ln_affine_dtype=jnp.float32))
    out_f32 = jax.block_until_ready(fwd_f32(x, kparams))
    assert out_f32.shape == (N, 1)
    err_f32 = float(jnp.max(jnp.abs(out_f32 - ref)))
    assert jnp.allclose(out_f32, ref, atol=1e-4, rtol=1e-4), \
        f"f32 kernel mismatch vs reference: {err_f32}"

    # 2) Perf-default path: bf16 MXU operands (f32 accumulation, f32 LN stats),
    #    bf16 affine tail on v6e/v7x.  Looser tolerance (bf16 operand rounding).
    fwd_fast = jax.jit(lambda a, kp: decoder_forward(a, kp))
    out_bf16 = jax.block_until_ready(fwd_fast(x, kparams))
    assert out_bf16.shape == (N, 1)
    assert bool(jnp.all(jnp.isfinite(out_bf16)))
    err_bf16 = float(jnp.max(jnp.abs(out_bf16 - ref)))
    assert err_bf16 < 1e-1, f"bf16 kernel mismatch vs f32 reference: {err_bf16}"

    print("KERNEL_OK")
</pallas_src>

<mosaic_0001>
module attributes {stable_mosaic.version = 11 : i64} {
  func.func @decoder_kernel(%arg0: i32, %arg1: memref<32x512xf32, #tpu.memory_space<vmem>>, %arg2: memref<64x32xf32, #tpu.memory_space<vmem>>, %arg3: memref<32x64xf32, #tpu.memory_space<vmem>>, %arg4: memref<64x32xf32, #tpu.memory_space<vmem>>, %arg5: memref<64x32xf32, #tpu.memory_space<vmem>>, %arg6: memref<64x64xf32, #tpu.memory_space<vmem>>, %arg7: memref<1x64xf32, #tpu.memory_space<vmem>>, %arg8: memref<832x1xf32, #tpu.memory_space<vmem>>, %arg9: memref<1x512xf32, #tpu.memory_space<vmem>>) attributes {dimension_semantics = [#tpu.dimension_semantics<parallel>], iteration_bounds = array<i64: 4>, scalar_prefetch = 0 : i64, scratch_operands = 0 : i64, tpu.core_type = #tpu.core_type<tc>, window_params = [{transform_indices = @transform_0, window_bounds = array<i64: 32, 512>}, {pipeline_mode = #tpu.pipeline_mode<synchronous>, transform_indices = @transform_1, window_bounds = array<i64: 64, 32>}, {pipeline_mode = #tpu.pipeline_mode<synchronous>, transform_indices = @transform_2, window_bounds = array<i64: 32, 64>}, {pipeline_mode = #tpu.pipeline_mode<synchronous>, transform_indices = @transform_3, window_bounds = array<i64: 64, 32>}, {pipeline_mode = #tpu.pipeline_mode<synchronous>, transform_indices = @transform_4, window_bounds = array<i64: 64, 32>}, {pipeline_mode = #tpu.pipeline_mode<synchronous>, transform_indices = @transform_5, window_bounds = array<i64: 64, 64>}, {pipeline_mode = #tpu.pipeline_mode<synchronous>, transform_indices = @transform_6, window_bounds = array<i64: 1, 64>}, {pipeline_mode = #tpu.pipeline_mode<synchronous>, transform_indices = @transform_7, window_bounds = array<i64: 832, 1>}, {transform_indices = @transform_8, window_bounds = array<i64: 1, 512>}]} {
    %c0 = arith.constant 0 : index
    %c0_0 = arith.constant 0 : index
    %0 = vector.load %arg1[%c0, %c0_0] : memref<32x512xf32, #tpu.memory_space<vmem>>, vector<32x512xf32>
    %c0_1 = arith.constant 0 : index
    %c0_2 = arith.constant 0 : index
    %1 = vector.load %arg2[%c0_1, %c0_2] : memref<64x32xf32, #tpu.memory_space<vmem>>, vector<64x32xf32>
    %cst = arith.constant dense<0.000000e+00> : vector<64x512xf32>
    %2 = tpu.matmul %1, %0, %cst {dimension_numbers = #tpu.dot_dimension_numbers<[1], [0], [0], [1], [0, 0, 1, 1], [], []>} : vector<64x32xf32>, vector<32x512xf32>, vector<64x512xf32> -> vector<64x512xf32>
    %c0_3 = arith.constant 0 : index
    %c0_4 = arith.constant 0 : index
    %3 = vector.load %arg8[%c0_3, %c0_4] : memref<832x1xf32, #tpu.memory_space<vmem>>, vector<64x1xf32>
    %4 = vector.broadcast %3 : vector<64x1xf32> to vector<64x512xf32>
    %5 = arith.addf %2, %4 : vector<64x512xf32>
    %cst_5 = arith.constant dense<0.000000e+00> : vector<512xf32>
    %6 = vector.multi_reduction <add>, %5, %cst_5 [0] : vector<64x512xf32> to vector<512xf32>
    %7 = vector.shape_cast %6 : vector<512xf32> to vector<1x512xf32>
    %cst_6 = arith.constant 1.562500e-02 : f32
    %8 = vector.broadcast %cst_6 : f32 to vector<1x512xf32>
    %9 = arith.mulf %7, %8 : vector<1x512xf32>
    %10 = arith.mulf %5, %5 : vector<64x512xf32>
    %cst_7 = arith.constant dense<0.000000e+00> : vector<512xf32>
    %11 = vector.multi_reduction <add>, %10, %cst_7 [0] : vector<64x512xf32> to vector<512xf32>
    %12 = vector.shape_cast %11 : vector<512xf32> to vector<1x512xf32>
    %cst_8 = arith.constant 1.562500e-02 : f32
    %13 = vector.broadcast %cst_8 : f32 to vector<1x512xf32>
    %14 = arith.mulf %12, %13 : vector<1x512xf32>
    %15 = arith.mulf %9, %9 : vector<1x512xf32>
    %16 = arith.subf %14, %15 : vector<1x512xf32>
    %cst_9 = arith.constant 9.99999974E-6 : f32
    %17 = vector.broadcast %cst_9 : f32 to vector<1x512xf32>
    %18 = arith.addf %16, %17 : vector<1x512xf32>
    %19 = math.rsqrt %18 : vector<1x512xf32>
    %20 = vector.broadcast %9 : vector<1x512xf32> to vector<64x512xf32>
    %21 = arith.subf %5, %20 : vector<64x512xf32>
    %22 = vector.broadcast %19 : vector<1x512xf32> to vector<64x512xf32>
    %23 = arith.mulf %21, %22 : vector<64x512xf32>
    %c64 = arith.constant 64 : index
    %c0_10 = arith.constant 0 : index
    %24 = vector.load %arg8[%c64, %c0_10] : memref<832x1xf32, #tpu.memory_space<vmem>>, vector<64x1xf32>
    %c128 = arith.constant 128 : index
    %c0_11 = arith.constant 0 : index
    %25 = vector.load %arg8[%c128, %c0_11] : memref<832x1xf32, #tpu.memory_space<vmem>>, vector<64x1xf32>
    %26 = vector.broadcast %24 : vector<64x1xf32> to vector<64x512xf32>
    %27 = arith.mulf %23, %26 : vector<64x512xf32>
    %28 = vector.broadcast %25 : vector<64x1xf32> to vector<64x512xf32>
    %29 = arith.addf %27, %28 : vector<64x512xf32>
    %cst_12 = arith.constant 0.000000e+00 : f32
    %30 = vector.broadcast %cst_12 : f32 to vector<64x512xf32>
    %31 = arith.maximumf %29, %30 : vector<64x512xf32>
    %c0_13 = arith.constant 0 : index
    %c0_14 = arith.constant 0 : index
    %32 = vector.load %arg3[%c0_13, %c0_14] : memref<32x64xf32, #tpu.memory_space<vmem>>, vector<32x64xf32>
    %cst_15 = arith.constant dense<0.000000e+00> : vector<32x512xf32>
    %33 = tpu.matmul %32, %31, %cst_15 {dimension_numbers = #tpu.dot_dimension_numbers<[1], [0], [0], [1], [0, 0, 1, 1], [], []>} : vector<32x64xf32>, vector<64x512xf32>, vector<32x512xf32> -> vector<32x512xf32>
    %c192 = arith.constant 192 : index
    %c0_16 = arith.constant 0 : index
    %34 = vector.load %arg8[%c192, %c0_16] : memref<832x1xf32, #tpu.memory_space<vmem>>, vector<32x1xf32>
    %35 = vector.broadcast %34 : vector<32x1xf32> to vector<32x512xf32>
    %36 = arith.addf %33, %35 : vector<32x512xf32>
    %cst_17 = arith.constant dense<0.000000e+00> : vector<512xf32>
    %37 = vector.multi_reduction <add>, %36, %cst_17 [0] : vector<32x512xf32> to vector<512xf32>
    %38 = vector.shape_cast %37 : vector<512xf32> to vector<1x512xf32>
    %cst_18 = arith.constant 3.125000e-02 : f32
    %39 = vector.broadcast %cst_18 : f32 to vector<1x512xf32>
    %40 = arith.mulf %38, %39 : vector<1x512xf32>
    %41 = arith.mulf %36, %36 : vector<32x512xf32>
    %cst_19 = arith.constant dense<0.000000e+00> : vector<512xf32>
    %42 = vector.multi_reduction <add>, %41, %cst_19 [0] : vector<32x512xf32> to vector<512xf32>
    %43 = vector.shape_cast %42 : vector<512xf32> to vector<1x512xf32>
    %cst_20 = arith.constant 3.125000e-02 : f32
    %44 = vector.broadcast %cst_20 : f32 to vector<1x512xf32>
    %45 = arith.mulf %43, %44 : vector<1x512xf32>
    %46 = arith.mulf %40, %40 : vector<1x512xf32>
    %47 = arith.subf %45, %46 : vector<1x512xf32>
    %cst_21 = arith.constant 9.99999974E-6 : f32
    %48 = vector.broadcast %cst_21 : f32 to vector<1x512xf32>
    %49 = arith.addf %47, %48 : vector<1x512xf32>
    %50 = math.rsqrt %49 : vector<1x512xf32>
    %51 = vector.broadcast %40 : vector<1x512xf32> to vector<32x512xf32>
    %52 = arith.subf %36, %51 : vector<32x512xf32>
    %53 = vector.broadcast %50 : vector<1x512xf32> to vector<32x512xf32>
    %54 = arith.mulf %52, %53 : vector<32x512xf32>
    %c256 = arith.constant 256 : index
    %c0_22 = arith.constant 0 : index
    %55 = vector.load %arg8[%c256, %c0_22] : memref<832x1xf32, #tpu.memory_space<vmem>>, vector<32x1xf32>
    %c320 = arith.constant 320 : index
    %c0_23 = arith.constant 0 : index
    %56 = vector.load %arg8[%c320, %c0_23] : memref<832x1xf32, #tpu.memory_space<vmem>>, vector<32x1xf32>
    %57 = vector.broadcast %55 : vector<32x1xf32> to vector<32x512xf32>
    %58 = arith.mulf %54, %57 : vector<32x512xf32>
    %59 = vector.broadcast %56 : vector<32x1xf32> to vector<32x512xf32>
    %60 = arith.addf %58, %59 : vector<32x512xf32>
    %cst_24 = arith.constant 0.000000e+00 : f32
    %61 = vector.broadcast %cst_24 : f32 to vector<32x512xf32>
    %62 = arith.maximumf %60, %61 : vector<32x512xf32>
    %c0_25 = arith.constant 0 : index
    %c0_26 = arith.constant 0 : index
    %63 = vector.load %arg4[%c0_25, %c0_26] : memref<64x32xf32, #tpu.memory_space<vmem>>, vector<64x32xf32>
    %cst_27 = arith.constant dense<0.000000e+00> : vector<64x512xf32>
    %64 = tpu.matmul %63, %62, %cst_27 {dimension_numbers = #tpu.dot_dimension_numbers<[1], [0], [0], [1], [0, 0, 1, 1], [], []>} : vector<64x32xf32>, vector<32x512xf32>, vector<64x512xf32> -> vector<64x512xf32>
    %c0_28 = arith.constant 0 : index
    %c0_29 = arith.constant 0 : index
    %65 = vector.load %arg5[%c0_28, %c0_29] : memref<64x32xf32, #tpu.memory_space<vmem>>, vector<64x32xf32>
    %cst_30 = arith.constant dense<0.000000e+00> : vector<64x512xf32>
    %66 = tpu.matmul %65, %0, %cst_30 {dimension_numbers = #tpu.dot_dimension_numbers<[1], [0], [0], [1], [0, 0, 1, 1], [], []>} : vector<64x32xf32>, vector<32x512xf32>, vector<64x512xf32> -> vector<64x512xf32>
    %67 = arith.addf %64, %66 : vector<64x512xf32>
    %c384 = arith.constant 384 : index
    %c0_31 = arith.constant 0 : index
    %68 = vector.load %arg8[%c384, %c0_31] : memref<832x1xf32, #tpu.memory_space<vmem>>, vector<64x1xf32>
    %69 = vector.broadcast %68 : vector<64x1xf32> to vector<64x512xf32>
    %70 = arith.addf %67, %69 : vector<64x512xf32>
    %cst_32 = arith.constant dense<0.000000e+00> : vector<512xf32>
    %71 = vector.multi_reduction <add>, %70, %cst_32 [0] : vector<64x512xf32> to vector<512xf32>
    %72 = vector.shape_cast %71 : vector<512xf32> to vector<1x512xf32>
    %cst_33 = arith.constant 1.562500e-02 : f32
    %73 = vector.broadcast %cst_33 : f32 to vector<1x512xf32>
    %74 = arith.mulf %72, %73 : vector<1x512xf32>
    %75 = arith.mulf %70, %70 : vector<64x512xf32>
    %cst_34 = arith.constant dense<0.000000e+00> : vector<512xf32>
    %76 = vector.multi_reduction <add>, %75, %cst_34 [0] : vector<64x512xf32> to vector<512xf32>
    %77 = vector.shape_cast %76 : vector<512xf32> to vector<1x512xf32>
    %cst_35 = arith.constant 1.562500e-02 : f32
    %78 = vector.broadcast %cst_35 : f32 to vector<1x512xf32>
    %79 = arith.mulf %77, %78 : vector<1x512xf32>
    %80 = arith.mulf %74, %74 : vector<1x512xf32>
    %81 = arith.subf %79, %80 : vector<1x512xf32>
    %cst_36 = arith.constant 9.99999974E-6 : f32
    %82 = vector.broadcast %cst_36 : f32 to vector<1x512xf32>
    %83 = arith.addf %81, %82 : vector<1x512xf32>
    %84 = math.rsqrt %83 : vector<1x512xf32>
    %85 = vector.broadcast %74 : vector<1x512xf32> to vector<64x512xf32>
    %86 = arith.subf %70, %85 : vector<64x512xf32>
    %87 = vector.broadcast %84 : vector<1x512xf32> to vector<64x512xf32>
    %88 = arith.mulf %86, %87 : vector<64x512xf32>
    %c448 = arith.constant 448 : index
    %c0_37 = arith.constant 0 : index
    %89 = vector.load %arg8[%c448, %c0_37] : memref<832x1xf32, #tpu.memory_space<vmem>>, vector<64x1xf32>
    %c512 = arith.constant 512 : index
    %c0_38 = arith.constant 0 : index
    %90 = vector.load %arg8[%c512, %c0_38] : memref<832x1xf32, #tpu.memory_space<vmem>>, vector<64x1xf32>
    %91 = vector.broadcast %89 : vector<64x1xf32> to vector<64x512xf32>
    %92 = arith.mulf %88, %91 : vector<64x512xf32>
    %93 = vector.broadcast %90 : vector<64x1xf32> to vector<64x512xf32>
    %94 = arith.addf %92, %93 : vector<64x512xf32>
    %cst_39 = arith.constant 0.000000e+00 : f32
    %95 = vector.broadcast %cst_39 : f32 to vector<64x512xf32>
    %96 = arith.maximumf %94, %95 : vector<64x512xf32>
    %c0_40 = arith.constant 0 : index
    %c0_41 = arith.constant 0 : index
    %97 = vector.load %arg6[%c0_40, %c0_41] : memref<64x64xf32, #tpu.memory_space<vmem>>, vector<64x64xf32>
    %cst_42 = arith.constant dense<0.000000e+00> : vector<64x512xf32>
    %98 = tpu.matmul %97, %96, %cst_42 {dimension_numbers = #tpu.dot_dimension_numbers<[1], [0], [0], [1], [0, 0, 1, 1], [], []>} : vector<64x64xf32>, vector<64x512xf32>, vector<64x512xf32> -> vector<64x512xf32>
    %c576 = arith.constant 576 : index
    %c0_43 = arith.constant 0 : index
    %99 = vector.load %arg8[%c576, %c0_43] : memref<832x1xf32, #tpu.memory_space<vmem>>, vector<64x1xf32>
    %100 = vector.broadcast %99 : vector<64x1xf32> to vector<64x512xf32>
    %101 = arith.addf %98, %100 : vector<64x512xf32>
    %cst_44 = arith.constant dense<0.000000e+00> : vector<512xf32>
    %102 = vector.multi_reduction <add>, %101, %cst_44 [0] : vector<64x512xf32> to vector<512xf32>
    %103 = vector.shape_cast %102 : vector<512xf32> to vector<1x512xf32>
    %cst_45 = arith.constant 1.562500e-02 : f32
    %104 = vector.broadcast %cst_45 : f32 to vector<1x512xf32>
    %105 = arith.mulf %103, %104 : vector<1x512xf32>
    %106 = arith.mulf %101, %101 : vector<64x512xf32>
    %cst_46 = arith.constant dense<0.000000e+00> : vector<512xf32>
    %107 = vector.multi_reduction <add>, %106, %cst_46 [0] : vector<64x512xf32> to vector<512xf32>
    %108 = vector.shape_cast %107 : vector<512xf32> to vector<1x512xf32>
    %cst_47 = arith.constant 1.562500e-02 : f32
    %109 = vector.broadcast %cst_47 : f32 to vector<1x512xf32>
    %110 = arith.mulf %108, %109 : vector<1x512xf32>
    %111 = arith.mulf %105, %105 : vector<1x512xf32>
    %112 = arith.subf %110, %111 : vector<1x512xf32>
    %cst_48 = arith.constant 9.99999974E-6 : f32
    %113 = vector.broadcast %cst_48 : f32 to vector<1x512xf32>
    %114 = arith.addf %112, %113 : vector<1x512xf32>
    %115 = math.rsqrt %114 : vector<1x512xf32>
    %116 = vector.broadcast %105 : vector<1x512xf32> to vector<64x512xf32>
    %117 = arith.subf %101, %116 : vector<64x512xf32>
    %118 = vector.broadcast %115 : vector<1x512xf32> to vector<64x512xf32>
    %119 = arith.mulf %117, %118 : vector<64x512xf32>
    %c640 = arith.constant 640 : index
    %c0_49 = arith.constant 0 : index
    %120 = vector.load %arg8[%c640, %c0_49] : memref<832x1xf32, #tpu.memory_space<vmem>>, vector<64x1xf32>
    %c704 = arith.constant 704 : index
    %c0_50 = arith.constant 0 : index
    %121 = vector.load %arg8[%c704, %c0_50] : memref<832x1xf32, #tpu.memory_space<vmem>>, vector<64x1xf32>
    %122 = vector.broadcast %120 : vector<64x1xf32> to vector<64x512xf32>
    %123 = arith.mulf %119, %122 : vector<64x512xf32>
    %124 = vector.broadcast %121 : vector<64x1xf32> to vector<64x512xf32>
    %125 = arith.addf %123, %124 : vector<64x512xf32>
    %cst_51 = arith.constant 0.000000e+00 : f32
    %126 = vector.broadcast %cst_51 : f32 to vector<64x512xf32>
    %127 = arith.maximumf %125, %126 : vector<64x512xf32>
    %c768 = arith.constant 768 : index
    %c0_52 = arith.constant 0 : index
    %128 = vector.load %arg8[%c768, %c0_52] : memref<832x1xf32, #tpu.memory_space<vmem>>, vector<1x1xf32>
    %c0_53 = arith.constant 0 : index
    %c0_54 = arith.constant 0 : index
    %129 = vector.load %arg7[%c0_53, %c0_54] : memref<1x64xf32, #tpu.memory_space<vmem>>, vector<1x64xf32>
    %cst_55 = arith.constant dense<0.000000e+00> : vector<1x512xf32>
    %130 = tpu.matmul %129, %127, %cst_55 {dimension_numbers = #tpu.dot_dimension_numbers<[1], [0], [0], [1], [0, 0, 1, 1], [], []>} : vector<1x64xf32>, vector<64x512xf32>, vector<1x512xf32> -> vector<1x512xf32>
    %131 = vector.broadcast %128 : vector<1x1xf32> to vector<1x512xf32>
    %132 = arith.addf %130, %131 : vector<1x512xf32>
    %133 = math.tanh %132 : vector<1x512xf32>
    %c0_56 = arith.constant 0 : index
    %c0_57 = arith.constant 0 : index
    %134 = vector.load %arg9[%c0_56, %c0_57] : memref<1x512xf32, #tpu.memory_space<vmem>>, vector<1x512xf32>
    tpu.vector_store %arg9[%c0_56, %c0_57], %133 {strides = array<i32>} : memref<1x512xf32, #tpu.memory_space<vmem>>, vector<1x512xf32>,
    return
  }
  func.func @transform_0(%arg0: i32) -> (i32, i32) {
    %c0_i32 = arith.constant 0 : i32
    %c0_i32_0 = arith.constant 0 : i32
    return %c0_i32, %arg0 : i32, i32
  }
  func.func @transform_1(%arg0: i32) -> (i32, i32) {
    %c0_i32 = arith.constant 0 : i32
    %c0_i32_0 = arith.constant 0 : i32
    %c0_i32_1 = arith.constant 0 : i32
    return %c0_i32, %c0_i32_0 : i32, i32
  }
  func.func @transform_2(%arg0: i32) -> (i32, i32) {
    %c0_i32 = arith.constant 0 : i32
    %c0_i32_0 = arith.constant 0 : i32
    %c0_i32_1 = arith.constant 0 : i32
    return %c0_i32, %c0_i32_0 : i32, i32
  }
  func.func @transform_3(%arg0: i32) -> (i32, i32) {
    %c0_i32 = arith.constant 0 : i32
    %c0_i32_0 = arith.constant 0 : i32
    %c0_i32_1 = arith.constant 0 : i32
    return %c0_i32, %c0_i32_0 : i32, i32
  }
  func.func @transform_4(%arg0: i32) -> (i32, i32) {
    %c0_i32 = arith.constant 0 : i32
    %c0_i32_0 = arith.constant 0 : i32
    %c0_i32_1 = arith.constant 0 : i32
    return %c0_i32, %c0_i32_0 : i32, i32
  }
  func.func @transform_5(%arg0: i32) -> (i32, i32) {
    %c0_i32 = arith.constant 0 : i32
    %c0_i32_0 = arith.constant 0 : i32
    %c0_i32_1 = arith.constant 0 : i32
    return %c0_i32, %c0_i32_0 : i32, i32
  }
  func.func @transform_6(%arg0: i32) -> (i32, i32) {
    %c0_i32 = arith.constant 0 : i32
    %c0_i32_0 = arith.constant 0 : i32
    %c0_i32_1 = arith.constant 0 : i32
    return %c0_i32, %c0_i32_0 : i32, i32
  }
  func.func @transform_7(%arg0: i32) -> (i32, i32) {
    %c0_i32 = arith.constant 0 : i32
    %c0_i32_0 = arith.constant 0 : i32
    %c0_i32_1 = arith.constant 0 : i32
    return %c0_i32, %c0_i32_0 : i32, i32
  }
  func.func @transform_8(%arg0: i32) -> (i32, i32) {
    %c0_i32 = arith.constant 0 : i32
    %c0_i32_0 = arith.constant 0 : i32
    return %c0_i32, %arg0 : i32, i32
  }
}

</mosaic_0001>

<llo_original>
// kernel: _lambda_.1
$region0: #{_lambda_.1}
  #allocation0 [shape = 'u32[]', space=smem, size = 0x4, offset = 0x4, fixed_abs, tag = 'smem constant byte address 0x4 - core index']
  #allocation1 [shape = 'u32[144,128]{1,0:T(1,128)}', space=vmem, size = 0x12000, scoped, tag = 'internal scratch']
  %s0 = inlined_call_operand.vmem [shape: f32[32,2048], index: 0, kind: input, shape index: {}]
  %s1 = inlined_call_operand.vmem [shape: f32[64,32], index: 1, kind: input, shape index: {}]
  %s2 = inlined_call_operand.vmem [shape: f32[32,64], index: 2, kind: input, shape index: {}]
  %s3 = inlined_call_operand.vmem [shape: f32[64,32], index: 3, kind: input, shape index: {}]
  %s4 = inlined_call_operand.vmem [shape: f32[64,32], index: 4, kind: input, shape index: {}]
  %s5 = inlined_call_operand.vmem [shape: f32[64,64], index: 5, kind: input, shape index: {}]
  %s6 = inlined_call_operand.vmem [shape: f32[1,64], index: 6, kind: input, shape index: {}]
  %s7 = inlined_call_operand.vmem [shape: f32[832,1], index: 7, kind: input, shape index: {}]
  %s8 = inlined_call_operand.hbm [shape: f32[1,2048], index: 8, kind: output, shape index: {}]
  %s9 = sld [smem:[#allocation0]]
  $region88: #{_lambda_.1} parent=0
    _
  %s11 = ssub.s32 1, %s9
  %s12 = scalar_select 0, %s11, %s9
  $region1: #{_lambda_.1} parent=0
    #allocation2 [shape = 'u8[131072]{0}', space=vmem, size = 0x20000, scoped, tag = 'input window, operand 0']
    #allocation3 [shape = 'u8[4096]{0}', space=vmem, size = 0x1000, scoped, tag = 'output window, operand 0']
    #allocation4 [shape = 's32[2]{0}', space=sflag, size = 0x8, scoped, tag = 'scoped memory for _lambda_.1']
    %13 = vsyncpa [#allocation4], 0
    %s14 = scalar_lea.sflag [#allocation4], 1
    %15 = vsyncpa %s14, 0
    loop: start=0, step=1, limit=6
    $region2: #{_lambda_.1} parent=1 // loop_pre_header
      _
    $region3: #{_lambda_.1} parent=1 // loop_header
      %s17 = sphi 0, %s21
      %p18 = scmp.ge.s32.totalorder %s17, 6
      %s27 = sphi 0, %s29
      %s30 = sphi 0, %s27
      %s31 = sphi 0, %s30
      %s47 = sphi 0, %s31
      %s51 = sphi 0, %s51
      %s53 = sphi 0, %s51
      %s54 = sphi 0, %s53
      %s68 = sphi 0, %s54
      %s72 = sphi 0, %s72
      %s74 = sphi 0, %s72
      %s75 = sphi 0, %s74
      %s89 = sphi 0, %s75
      %s93 = sphi 0, %s93
      %s95 = sphi 0, %s93
      %s96 = sphi 0, %s95
      %s110 = sphi 0, %s96
      %s114 = sphi 0, %s114
      %s116 = sphi 0, %s114
      %s117 = sphi 0, %s116
      %s131 = sphi 0, %s117
      %s135 = sphi 0, %s135
      %s137 = sphi 0, %s135
      %s138 = sphi 0, %s137
      %s152 = sphi 0, %s138
      %s156 = sphi 0, %s156
      %s158 = sphi 0, %s156
      %s159 = sphi 0, %s158
      %s173 = sphi 0, %s159
      %s177 = sphi 0, %s177
      %s179 = sphi 0, %s177
      %s180 = sphi 0, %s179
      %s194 = sphi 0, %s180
      %s200 = sphi 0, %s202
      %s203 = sphi 0, %s200
      %s204 = sphi 0, %s203
      %s220 = sphi 0, %s204
    $region4: #{_lambda_.1} parent=1 // loop_header_branch
      %20 = sbr.rel (%p18) target = $region8
    $region5: #{_lambda_.1} parent=1 // loop_body
      %s22 = ssub.s32 %s17, 1
      %s23 = ssub.s32 %s17, 2
      %s24 = sadd.s32 %s17, 1
      %s25 = ssub.s32 %s17, %s24
      %p26 = scmp.eq.s32.totalorder %s25, 0
      %s28 = sadd.s32 %s27, 1
      %s29 = scalar_select %p26, %s27, %s28
      %p32 = pneg %p26
      %p33 = scmp.eq.s32.totalorder %s17, 3
      %p34 = por %p32, %p33
      %p35 = scmp.ne.s32.totalorder %s27, %s30
      %p36 = scmp.eq.s32.totalorder %s17, 0
      %p37 = por %p35, %p36
      %p38 = scmp.ne.s32.totalorder %s27, %s30
      %p39 = scmp.eq.s32.totalorder %s22, 3
      %p40 = por %p38, %p39
      %p41 = scmp.ne.s32.totalorder %s30, %s31
      %p42 = scmp.eq.s32.totalorder %s22, 0
      %p43 = por %p41, %p42
      %p44 = scmp.ne.s32.totalorder %s30, %s31
      %p45 = scmp.eq.s32.totalorder %s23, 3
      %p46 = por %p44, %p45
      %p48 = scmp.ne.s32.totalorder %s31, %s47
      %p49 = scmp.eq.s32.totalorder %s23, 0
      %p50 = por %p48, %p49
      %s52 = sadd.s32 %s51, 1
      %p55 = scmp.eq.s32.totalorder %s17, 3
      %p56 = scmp.ne.s32.totalorder %s51, %s53
      %p57 = scmp.eq.s32.totalorder %s17, 0
      %p58 = por %p56, %p57
      %p59 = scmp.ne.s32.totalorder %s51, %s53
      %p60 = scmp.eq.s32.totalorder %s22, 3
      %p61 = por %p59, %p60
      %p62 = scmp.ne.s32.totalorder %s53, %s54
      %p63 = scmp.eq.s32.totalorder %s22, 0
      %p64 = por %p62, %p63
      %p65 = scmp.ne.s32.totalorder %s53, %s54
      %p66 = scmp.eq.s32.totalorder %s23, 3
      %p67 = por %p65, %p66
      %p69 = scmp.ne.s32.totalorder %s54, %s68
      %p70 = scmp.eq.s32.totalorder %s23, 0
      %p71 = por %p69, %p70
      %s73 = sadd.s32 %s72, 1
      %p76 = scmp.eq.s32.totalorder %s17, 3
      %p77 = scmp.ne.s32.totalorder %s72, %s74
      %p78 = scmp.eq.s32.totalorder %s17, 0
      %p79 = por %p77, %p78
      %p80 = scmp.ne.s32.totalorder %s72, %s74
      %p81 = scmp.eq.s32.totalorder %s22, 3
      %p82 = por %p80, %p81
      %p83 = scmp.ne.s32.totalorder %s74, %s75
      %p84 = scmp.eq.s32.totalorder %s22, 0
      %p85 = por %p83, %p84
      %p86 = scmp.ne.s32.totalorder %s74, %s75
      %p87 = scmp.eq.s32.totalorder %s23, 3
      %p88 = por %p86, %p87
      %p90 = scmp.ne.s32.totalorder %s75, %s89
      %p91 = scmp.eq.s32.totalorder %s23, 0
      %p92 = por %p90, %p91
      %s94 = sadd.s32 %s93, 1
      %p97 = scmp.eq.s32.totalorder %s17, 3
      %p98 = scmp.ne.s32.totalorder %s93, %s95
      %p99 = scmp.eq.s32.totalorder %s17, 0
      %p100 = por %p98, %p99
      %p101 = scmp.ne.s32.totalorder %s93, %s95
      %p102 = scmp.eq.s32.totalorder %s22, 3
      %p103 = por %p101, %p102
      %p104 = scmp.ne.s32.totalorder %s95, %s96
      %p105 = scmp.eq.s32.totalorder %s22, 0
      %p106 = por %p104, %p105
      %p107 = scmp.ne.s32.totalorder %s95, %s96
      %p108 = scmp.eq.s32.totalorder %s23, 3
      %p109 = por %p107, %p108
      %p111 = scmp.ne.s32.totalorder %s96, %s110
      %p112 = scmp.eq.s32.totalorder %s23, 0
      %p113 = por %p111, %p112
      %s115 = sadd.s32 %s114, 1
      %p118 = scmp.eq.s32.totalorder %s17, 3
      %p119 = scmp.ne.s32.totalorder %s114, %s116
      %p120 = scmp.eq.s32.totalorder %s17, 0
      %p121 = por %p119, %p120
      %p122 = scmp.ne.s32.totalorder %s114, %s116
      %p123 = scmp.eq.s32.totalorder %s22, 3
      %p124 = por %p122, %p123
      %p125 = scmp.ne.s32.totalorder %s116, %s117
      %p126 = scmp.eq.s32.totalorder %s22, 0
      %p127 = por %p125, %p126
      %p128 = scmp.ne.s32.totalorder %s116, %s117
      %p129 = scmp.eq.s32.totalorder %s23, 3
      %p130 = por %p128, %p129
      %p132 = scmp.ne.s32.totalorder %s117, %s131
      %p133 = scmp.eq.s32.totalorder %s23, 0
      %p134 = por %p132, %p133
      %s136 = sadd.s32 %s135, 1
      %p139 = scmp.eq.s32.totalorder %s17, 3
      %p140 = scmp.ne.s32.totalorder %s135, %s137
      %p141 = scmp.eq.s32.totalorder %s17, 0
      %p142 = por %p140, %p141
      %p143 = scmp.ne.s32.totalorder %s135, %s137
      %p144 = scmp.eq.s32.totalorder %s22, 3
      %p145 = por %p143, %p144
      %p146 = scmp.ne.s32.totalorder %s137, %s138
      %p147 = scmp.eq.s32.totalorder %s22, 0
      %p148 = por %p146, %p147
      %p149 = scmp.ne.s32.totalorder %s137, %s138
      %p150 = scmp.eq.s32.totalorder %s23, 3
      %p151 = por %p149, %p150
      %p153 = scmp.ne.s32.totalorder %s138, %s152
      %p154 = scmp.eq.s32.totalorder %s23, 0
      %p155 = por %p153, %p154
      %s157 = sadd.s32 %s156, 1
      %p160 = scmp.eq.s32.totalorder %s17, 3
      %p161 = scmp.ne.s32.totalorder %s156, %s158
      %p162 = scmp.eq.s32.totalorder %s17, 0
      %p163 = por %p161, %p162
      %p164 = scmp.ne.s32.totalorder %s156, %s158
      %p165 = scmp.eq.s32.totalorder %s22, 3
      %p166 = por %p164, %p165
      %p167 = scmp.ne.s32.totalorder %s158, %s159
      %p168 = scmp.eq.s32.totalorder %s22, 0
      %p169 = por %p167, %p168
      %p170 = scmp.ne.s32.totalorder %s158, %s159
      %p171 = scmp.eq.s32.totalorder %s23, 3
      %p172 = por %p170, %p171
      %p174 = scmp.ne.s32.totalorder %s159, %s173
      %p175 = scmp.eq.s32.totalorder %s23, 0
      %p176 = por %p174, %p175
      %s178 = sadd.s32 %s177, 1
      %p181 = scmp.eq.s32.totalorder %s17, 3
      %p182 = scmp.ne.s32.totalorder %s177, %s179
      %p183 = scmp.eq.s32.totalorder %s17, 0
      %p184 = por %p182, %p183
      %p185 = scmp.ne.s32.totalorder %s177, %s179
      %p186 = scmp.eq.s32.totalorder %s22, 3
      %p187 = por %p185, %p186
      %p188 = scmp.ne.s32.totalorder %s179, %s180
      %p189 = scmp.eq.s32.totalorder %s22, 0
      %p190 = por %p188, %p189
      %p191 = scmp.ne.s32.totalorder %s179, %s180
      %p192 = scmp.eq.s32.totalorder %s23, 3
      %p193 = por %p191, %p192
      %p195 = scmp.ne.s32.totalorder %s180, %s194
      %p196 = scmp.eq.s32.totalorder %s23, 0
      %p197 = por %p195, %p196
      %s198 = ssub.s32 %s17, %s24
      %p199 = scmp.eq.s32.totalorder %s198, 0
      %s201 = sadd.s32 %s200, 1
      %s202 = scalar_select %p199, %s200, %s201
      %p205 = pneg %p199
      %p206 = scmp.eq.s32.totalorder %s17, 3
      %p207 = por %p205, %p206
      %p208 = scmp.ne.s32.totalorder %s200, %s203
      %p209 = scmp.eq.s32.totalorder %s17, 0
      %p210 = por %p208, %p209
      %p211 = scmp.ne.s32.totalorder %s200, %s203
      %p212 = scmp.eq.s32.totalorder %s22, 3
      %p213 = por %p211, %p212
      %p214 = scmp.ne.s32.totalorder %s203, %s204
      %p215 = scmp.eq.s32.totalorder %s22, 0
      %p216 = por %p214, %p215
      %p217 = scmp.ne.s32.totalorder %s203, %s204
      %p218 = scmp.eq.s32.totalorder %s23, 3
      %p219 = por %p217, %p218
      %p221 = scmp.ne.s32.totalorder %s204, %s220
      %p222 = scmp.eq.s32.totalorder %s23, 0
      %p223 = por %p221, %p222
      %p224 = scmp.le.s32.totalorder 1, %s17
      %p225 = scmp.lt.s32.totalorder %s17, 5
      %p226 = pnand %p224, %p225
      %p227 = pneg %p226
      // Predicated region
      $region9: #{_lambda_.1} parent=5 // pred_check
        _
      $region10: #{_lambda_.1} parent=5 // pred_check_branch
        %229 = sbr.rel (%p226) target = $region12
      $region11: #{_lambda_.1} parent=5 // pred_region
        %s230 = ssub.s32 %s17, 1
        // Predicated region
        $region13: #{_lambda_.1} parent=11 // pred_check
          %p231 = pneg %p64
        $region14: #{_lambda_.1} parent=11 // pred_check_branch
          %233 = sbr.rel (%p231) target = $region16
        $region15: #{_lambda_.1} parent=11 // pred_region
          _
        $region16: #{_lambda_.1} parent=11 // pred_fallthru
          _
        // Predicated region
        $region17: #{_lambda_.1} parent=11 // pred_check
          %p234 = pneg %p85
        $region18: #{_lambda_.1} parent=11 // pred_check_branch
          %236 = sbr.rel (%p234) target = $region20
        $region19: #{_lambda_.1} parent=11 // pred_region
          _
        $region20: #{_lambda_.1} parent=11 // pred_fallthru
          _
        // Predicated region
        $region21: #{_lambda_.1} parent=11 // pred_check
          %p237 = pneg %p106
        $region22: #{_lambda_.1} parent=11 // pred_check_branch
          %239 = sbr.rel (%p237) target = $region24
        $region23: #{_lambda_.1} parent=11 // pred_region
          _
        $region24: #{_lambda_.1} parent=11 // pred_fallthru
          _
        // Predicated region
        $region25: #{_lambda_.1} parent=11 // pred_check
          %p240 = pneg %p127
        $region26: #{_lambda_.1} parent=11 // pred_check_branch
          %242 = sbr.rel (%p240) target = $region28
        $region27: #{_lambda_.1} parent=11 // pred_region
          _
        $region28: #{_lambda_.1} parent=11 // pred_fallthru
          _
        // Predicated region
        $region29: #{_lambda_.1} parent=11 // pred_check
          %p243 = pneg %p148
        $region30: #{_lambda_.1} parent=11 // pred_check_branch
          %245 = sbr.rel (%p243) target = $region32
        $region31: #{_lambda_.1} parent=11 // pred_region
          _
        $region32: #{_lambda_.1} parent=11 // pred_fallthru
          _
        // Predicated region
        $region33: #{_lambda_.1} parent=11 // pred_check
          %p246 = pneg %p169
        $region34: #{_lambda_.1} parent=11 // pred_check_branch
          %248 = sbr.rel (%p246) target = $region36
        $region35: #{_lambda_.1} parent=11 // pred_region
          _
        $region36: #{_lambda_.1} parent=11 // pred_fallthru
          _
        // Predicated region
        $region37: #{_lambda_.1} parent=11 // pred_check
          %p249 = pneg %p190
        $region38: #{_lambda_.1} parent=11 // pred_check_branch
          %251 = sbr.rel (%p249) target = $region40
        $region39: #{_lambda_.1} parent=11 // pred_region
          _
        $region40: #{_lambda_.1} parent=11 // pred_fallthru
          _
      $region12: #{_lambda_.1} parent=5 // pred_fallthru
        _
      %p252 = scmp.lt.s32.totalorder %s17, 4
      // Predicated region
      $region41: #{_lambda_.1} parent=5 // pred_check
        %p253 = pneg %p252
      $region42: #{_lambda_.1} parent=5 // pred_check_branch
        %255 = sbr.rel (%p253) target = $region44
      $region43: #{_lambda_.1} parent=5 // pred_region
        // Predicated region
        $region45: #{_lambda_.1} parent=43 // pred_check
          %p256 = pneg %p37
        $region46: #{_lambda_.1} parent=43 // pred_check_branch
          %258 = sbr.rel (%p256) target = $region48
        $region47: #{_lambda_.1} parent=43 // pred_region
          %s259 = sand.u32 %s27, 1
          %s260 = sand.u32 %s27, 1
          %s261 = smul.addr %s260, 128
          %s262 = scalar_lea.vmem [#allocation2], %s261
          %s263 = smul.u32 4, %s17
          %s264 = smul.addr %s263, 8
          %s265 = scalar_lea.vmem %s0, %s264
          // Predicated region
          $region49: #{_lambda_.1} parent=47 // pred_check
            _
          $region50: #{_lambda_.1} parent=47 // pred_check_branch
            %267 = sbr.rel (0) target = $region52
          $region51: #{_lambda_.1} parent=47 // pred_region
            // Predicated region
            $region53: #{_lambda_.1} parent=51 // pred_check
              _
            $region54: #{_lambda_.1} parent=51 // pred_check_branch
              %269 = sbr.rel (0) target = $region56
            $region55: #{_lambda_.1} parent=51 // pred_region
              loop: start=0, step=1, limit=1
              $region57: #{_lambda_.1} parent=55 // loop_pre_header
                _
              $region58: #{_lambda_.1} parent=55 // loop_header
                %s271 = sphi 0, %s275
                %p272 = scmp.ge.s32.totalorder %s271, 1
                %s276 = sphi %s265, %s265
                %s277 = sphi %s262, %s262
              $region59: #{_lambda_.1} parent=55 // loop_header_branch
                %274 = sbr.rel (%p272) target = $region63
              $region60: #{_lambda_.1} parent=55 // loop_body
                %v278 = vld [vmem:[%s276] sm:$0xff]
                %279 = vst [vmem:[%s277] sm:$0xff] %v278
                %v280 = vld [vmem:[%s276 + $0x8] sm:$0xff]
                %281 = vst [vmem:[%s277 + $0x8] sm:$0xff] %v280
                %v282 = vld [vmem:[%s276 + $0x10] sm:$0xff]
                %283 = vst [vmem:[%s277 + $0x10] sm:$0xff] %v282
                %v284 = vld [vmem:[%s276 + $0x18] sm:$0xff]
                %285 = vst [vmem:[%s277 + $0x18] sm:$0xff] %v284
                %v286 = vld [vmem:[%s276 + $0x80] sm:$0xff]
                %287 = vst [vmem:[%s277 + $0x20] sm:$0xff] %v286
                %v288 = vld [vmem:[%s276 + $0x88] sm:$0xff]
                %289 = vst [vmem:[%s277 + $0x28] sm:$0xff] %v288
                %v290 = vld [vmem:[%s276 + $0x90] sm:$0xff]
                %291 = vst [vmem:[%s277 + $0x30] sm:$0xff] %v290
                %v292 = vld [vmem:[%s276 + $0x98] sm:$0xff]
                %293 = vst [vmem:[%s277 + $0x38] sm:$0xff] %v292
                %v294 = vld [vmem:[%s276 + $0x100] sm:$0xff]
                %295 = vst [vmem:[%s277 + $0x40] sm:$0xff] %v294
                %v296 = vld [vmem:[%s276 + $0x108] sm:$0xff]
                %297 = vst [vmem:[%s277 + $0x48] sm:$0xff] %v296
                %v298 = vld [vmem:[%s276 + $0x110] sm:$0xff]
                %299 = vst [vmem:[%s277 + $0x50] sm:$0xff] %v298
                %v300 = vld [vmem:[%s276 + $0x118] sm:$0xff]
                %301 = vst [vmem:[%s277 + $0x58] sm:$0xff] %v300
                %v302 = vld [vmem:[%s276 + $0x180] sm:$0xff]
                %303 = vst [vmem:[%s277 + $0x60] sm:$0xff] %v302
                %v304 = vld [vmem:[%s276 + $0x188] sm:$0xff]
                %305 = vst [vmem:[%s277 + $0x68] sm:$0xff] %v304
                %v306 = vld [vmem:[%s276 + $0x190] sm:$0xff]
                %307 = vst [vmem:[%s277 + $0x70] sm:$0xff] %v306
                %v308 = vld [vmem:[%s276 + $0x198] sm:$0xff]
                %309 = vst [vmem:[%s277 + $0x78] sm:$0xff] %v308
              $region61: #{_lambda_.1} parent=55 // loop_footer
                %s275 = sadd.s32 1, %s271
              $region62: #{_lambda_.1} parent=55 // loop_footer_branch
                %270 = sbr.rel target = $region58
              $region63: #{_lambda_.1} parent=55 // loop_exit
                _
            $region56: #{_lambda_.1} parent=51 // pred_fallthru
              _
            // Predicated region
            $region64: #{_lambda_.1} parent=51 // pred_check
              _
            $region65: #{_lambda_.1} parent=51 // pred_check_branch
              %311 = sbr.rel target = $region67
            $region66: #{_lambda_.1} parent=51 // pred_region
              _
            $region67: #{_lambda_.1} parent=51 // pred_fallthru
              _
          $region52: #{_lambda_.1} parent=47 // pred_fallthru
            _
          %312 = vnop
        $region48: #{_lambda_.1} parent=43 // pred_fallthru
          _
      $region44: #{_lambda_.1} parent=5 // pred_fallthru
        _
      %p313 = scmp.le.s32.totalorder 1, %s17
      %p314 = scmp.lt.s32.totalorder %s17, 5
      %p315 = pnand %p313, %p314
      %p316 = pneg %p315
      // Predicated region
      $region68: #{_lambda_.1} parent=5 // pred_check
        _
      $region69: #{_lambda_.1} parent=5 // pred_check_branch
        %318 = sbr.rel (%p315) target = $region71
      $region70: #{_lambda_.1} parent=5 // pred_region
        %s319 = ssub.s32 %s17, 1
        %s320 = sand.u32 %s30, 1
        %s321 = sand.u32 %s30, 1
        %s322 = smul.addr %s321, 128
        %s323 = scalar_lea.vmem [#allocation2], %s322
        // Predicated region
        $region72: #{_lambda_.1} parent=70 // pred_check
          %p324 = pneg %p43
        $region73: #{_lambda_.1} parent=70 // pred_check_branch
          %326 = sbr.rel (%p324) target = $region75
        $region74: #{_lambda_.1} parent=70 // pred_region
          _
        $region75: #{_lambda_.1} parent=70 // pred_fallthru
          _
        %s327 = sand.u32 %s30, 1
        %s328 = sand.u32 %s30, 1
        %s329 = smul.addr %s328, 128
        %s330 = scalar_lea.vmem [#allocation2], %s329
        %p331 = pneg %p43
        %p332 = pneg %p40
        %p333 = pneg %p64
        %p334 = pneg %p61
        %p335 = pneg %p85
        %p336 = pneg %p82
        %p337 = pneg %p106
        %p338 = pneg %p103
        %p339 = pneg %p127
        %p340 = pneg %p124
        %p341 = pneg %p148
        %p342 = pneg %p145
        %p343 = pneg %p169
        %p344 = pneg %p166
        %p345 = pneg %p190
        %p346 = pneg %p187
        %p347 = pneg %p216
        %p348 = pneg %p213
        %s349 = sand.u32 %s203, 1
        %s350 = scalar_lea.sflag [#allocation4], %s349
        %s351 = sand.u32 %s203, 1
        %s352 = smul.addr %s351, 4
        %s353 = scalar_lea.vmem [#allocation3], %s352
        %s354 = smul.u32 4, %s22
        %s355 = smul.u32 4, %s22
        %v356 = vld [vmem:[%s323] sm:$0xff]
        %v357 = vld [vmem:[%s323 + $0x8] sm:$0xff]
        %v358 = vld [vmem:[%s323 + $0x10] sm:$0xff]
        %v359 = vld [vmem:[%s323 + $0x18] sm:$0xff]
        %v360 = vld [vmem:[%s323 + $0x20] sm:$0xff]
        %v361 = vld [vmem:[%s323 + $0x28] sm:$0xff]
        %v362 = vld [vmem:[%s323 + $0x30] sm:$0xff]
        %v363 = vld [vmem:[%s323 + $0x38] sm:$0xff]
        %v364 = vld [vmem:[%s323 + $0x40] sm:$0xff]
        %v365 = vld [vmem:[%s323 + $0x48] sm:$0xff]
        %v366 = vld [vmem:[%s323 + $0x50] sm:$0xff]
        %v367 = vld [vmem:[%s323 + $0x58] sm:$0xff]
        %v368 = vld [vmem:[%s323 + $0x60] sm:$0xff]
        %v369 = vld [vmem:[%s323 + $0x68] sm:$0xff]
        %v370 = vld [vmem:[%s323 + $0x70] sm:$0xff]
        %v371 = vld [vmem:[%s323 + $0x78] sm:$0xff]
        %v372 = vld [vmem:[%s1] sm:$0xff]
        %v373 = vld [vmem:[%s1 + $0x8] sm:$0xff]
        %v374 = vld [vmem:[%s1 + $0x10] sm:$0xff]
        %v375 = vld [vmem:[%s1 + $0x18] sm:$0xff]
        %v376 = vld [vmem:[%s1 + $0x20] sm:$0xff]
        %v377 = vld [vmem:[%s1 + $0x28] sm:$0xff]
        %v378 = vld [vmem:[%s1 + $0x30] sm:$0xff]
        %v379 = vld [vmem:[%s1 + $0x38] sm:$0xff]
        %v380 = vld [vmem:[%s7] sm:$0xff]
        %v381 = vld [vmem:[%s7 + $0x8] sm:$0xff]
        %v382 = vld [vmem:[%s7 + $0x10] sm:$0xff]
        %v383 = vld [vmem:[%s7 + $0x18] sm:$0xff]
        %v384 = vld [vmem:[%s7 + $0x20] sm:$0xff]
        %v385 = vld [vmem:[%s7 + $0x28] sm:$0xff]
        %v386 = vld [vmem:[%s7 + $0x30] sm:$0xff]
        %v387 = vld [vmem:[%s7 + $0x38] sm:$0xff]
        %389 = vset.pattern.permute.xlu0 0
        %390 = vperm.xlu0 %389, %v380
        %v391 = vpop.permute.xlu0 %390
        %394 = vset.pattern.permute.xlu0 0
        %395 = vperm.xlu0 %394, %v381
        %v396 = vpop.permute.xlu0 %395
        %399 = vset.pattern.permute.xlu0 0
        %400 = vperm.xlu0 %399, %v382
        %v401 = vpop.permute.xlu0 %400
        %404 = vset.pattern.permute.xlu0 0
        %405 = vperm.xlu0 %404, %v383
        %v406 = vpop.permute.xlu0 %405
        %409 = vset.pattern.permute.xlu0 0
        %410 = vperm.xlu0 %409, %v384
        %v411 = vpop.permute.xlu0 %410
        %414 = vset.pattern.permute.xlu0 0
        %415 = vperm.xlu0 %414, %v385
        %v416 = vpop.permute.xlu0 %415
        %419 = vset.pattern.permute.xlu0 0
        %420 = vperm.xlu0 %419, %v386
        %v421 = vpop.permute.xlu0 %420
        %424 = vset.pattern.permute.xlu0 0
        %425 = vperm.xlu0 %424, %v387
        %v426 = vpop.permute.xlu0 %425
        %vm428 = vcmask 261120
        %v430 = vsel %vm428, %v372, 0
        %v433 = vsel %vm428, %v373, 0
        %v436 = vsel %vm428, %v374, 0
        %v439 = vsel %vm428, %v375, 0
        %v442 = vsel %vm428, %v376, 0
        %v445 = vsel %vm428, %v377, 0
        %v448 = vsel %vm428, %v378, 0
        %v451 = vsel %vm428, %v379, 0
        %453 = vmatprep.subr.mxu0 0.0
        %454 = vmatpush1.msra.mxu0 0.0
        %455 = vmatprep.subr.mxu0 0.0
        %456 = vmatpush1.msra.mxu0 0.0
        %457 = vmatprep.subr.mxu0 0.0
        %458 = vmatpush1.msra.mxu0 0.0
        %459 = vmatprep.subr.mxu0 0.0
        %460 = vmatpush1.msra.mxu0 0.0
        %461 = vmatprep.subr.mxu0 0.0
        %462 = vmatpush1.msra.mxu0 0.0
        %463 = vmatprep.subr.mxu0 0.0
        %464 = vmatpush1.msra.mxu0 0.0
        %465 = vmatprep.subr.mxu0 0.0
        %466 = vmatpush1.msra.mxu0 0.0
        %467 = vmatprep.subr.mxu0 0.0
        %468 = vmatpush1.msra.mxu0 0.0
        %469 = vmatprep.subr.mxu0 0.0
        %470 = vmatpush1.msra.mxu0 0.0
        %471 = vmatprep.subr.mxu0 0.0
        %472 = vmatpush1.msra.mxu0 0.0
        %473 = vmatprep.subr.mxu0 0.0
        %474 = vmatpush1.msra.mxu0 0.0
        %475 = vmatprep.subr.mxu0 0.0
        %476 = vmatpush1.msra.mxu0 0.0
        %477 = vmatprep.subr.mxu0 %v369
        %478 = vmatpush1.msra.mxu0 %v368
        %479 = vmatprep.subr.mxu0 %v365
        %480 = vmatpush1.msra.mxu0 %v364
        %481 = vmatprep.subr.mxu0 %v361
        %482 = vmatpush1.msra.mxu0 %v360
        %483 = vmatprep.subr.mxu0 %v357
        %484 = vmatpush1.msra.mxu0 %v356
        %485 = vmatprep.subr.mxu0 0.0
        %486 = vmatpush2.msra.mxu0 0.0
        %487 = vmatprep.subr.mxu0 0.0
        %488 = vmatpush2.msra.mxu0 0.0
        %489 = vmatprep.subr.mxu0 0.0
        %490 = vmatpush2.msra.mxu0 0.0
        %491 = vmatprep.subr.mxu0 0.0
        %492 = vmatpush2.msra.mxu0 0.0
        %493 = vmatprep.subr.mxu0 0.0
        %494 = vmatpush2.msra.mxu0 0.0
        %495 = vmatprep.subr.mxu0 0.0
        %496 = vmatpush2.msra.mxu0 0.0
        %497 = vmatprep.subr.mxu0 0.0
        %498 = vmatpush2.msra.mxu0 0.0
        %499 = vmatprep.subr.mxu0 0.0
        %500 = vmatpush2.msra.mxu0 0.0
        %501 = vmatprep.subr.mxu0 0.0
        %502 = vmatpush2.msra.mxu0 0.0
        %503 = vmatprep.subr.mxu0 0.0
        %504 = vmatpush2.msra.mxu0 0.0
        %505 = vmatprep.subr.mxu0 0.0
        %506 = vmatpush2.msra.mxu0 0.0
        %507 = vmatprep.subr.mxu0 0.0
        %508 = vmatpush2.msra.mxu0 0.0
        %509 = vmatprep.subr.mxu0 0.0
        %510 = vmatpush2.msra.mxu0 0.0
        %511 = vmatprep.subr.mxu0 0.0
        %512 = vmatpush2.msra.mxu0 0.0
        %513 = vmatprep.subr.mxu0 0.0
        %514 = vmatpush2.msra.mxu0 0.0
        %515 = vmatprep.subr.mxu0 0.0
        %516 = vmatpush2.msra.mxu0 0.0
        %517 = vmatprep.mubr.f32.mxu0 0.0
        %518 = vmatmul.mubr.f32.gmra.mxu0 %v430
        %v519 = vpop.f32.mrf.mxu0
        %v520 = vadd.f32 %v391, %v519
        %v521 = vpop.f32.mrf.mxu0
        %v522 = vadd.f32 %v391, %v521
        %523 = vmatprep.mubr.f32.mxu0 0.0
        %524 = vmatmul.mubr.f32.gmra.mxu0 %v433
        %v525 = vpop.f32.mrf.mxu0
        %v526 = vadd.f32 %v396, %v525
        %v527 = vpop.f32.mrf.mxu0
        %v528 = vadd.f32 %v396, %v527
        %529 = vmatprep.mubr.f32.mxu0 0.0
        %530 = vmatmul.mubr.f32.gmra.mxu0 %v436
        %v531 = vpop.f32.mrf.mxu0
        %v532 = vadd.f32 %v401, %v531
        %v533 = vpop.f32.mrf.mxu0
        %v534 = vadd.f32 %v401, %v533
        %535 = vmatprep.mubr.f32.mxu0 0.0
        %536 = vmatmul.mubr.f32.gmra.mxu0 %v439
        %v537 = vpop.f32.mrf.mxu0
        %v538 = vadd.f32 %v406, %v537
        %v539 = vpop.f32.mrf.mxu0
        %v540 = vadd.f32 %v406, %v539
        %541 = vmatprep.mubr.f32.mxu0 0.0
        %542 = vmatmul.mubr.f32.gmra.mxu0 %v442
        %v543 = vpop.f32.mrf.mxu0
        %v544 = vadd.f32 %v411, %v543
        %v545 = vpop.f32.mrf.mxu0
        %v546 = vadd.f32 %v411, %v545
        %547 = vmatprep.mubr.f32.mxu0 0.0
        %548 = vmatmul.mubr.f32.gmra.mxu0 %v445
        %v549 = vpop.f32.mrf.mxu0
        %v550 = vadd.f32 %v416, %v549
        %v551 = vpop.f32.mrf.mxu0
        %v552 = vadd.f32 %v416, %v551
        %553 = vmatprep.mubr.f32.mxu0 0.0
        %554 = vmatmul.mubr.f32.gmra.mxu0 %v448
        %v555 = vpop.f32.mrf.mxu0
        %v556 = vadd.f32 %v421, %v555
        %v557 = vpop.f32.mrf.mxu0
        %v558 = vadd.f32 %v421, %v557
        %559 = vmatprep.mubr.f32.mxu0 0.0
        %560 = vmatmul.mubr.f32.gmra.mxu0 %v451
        %v561 = vpop.f32.mrf.mxu0
        %v562 = vadd.f32 %v426, %v561
        %v563 = vpop.f32.mrf.mxu0
        %v564 = vadd.f32 %v426, %v563
        %565 = vdwg.mxu0
        %566 = vmatprep.subr.mxu0 0.0
        %567 = vmatpush1.msra.mxu0 0.0
        %568 = vmatprep.subr.mxu0 0.0
        %569 = vmatpush1.msra.mxu0 0.0
        %570 = vmatprep.subr.mxu0 0.0
        %571 = vmatpush1.msra.mxu0 0.0
        %572 = vmatprep.subr.mxu0 0.0
        %573 = vmatpush1.msra.mxu0 0.0
        %574 = vmatprep.subr.mxu0 0.0
        %575 = vmatpush1.msra.mxu0 0.0
        %576 = vmatprep.subr.mxu0 0.0
        %577 = vmatpush1.msra.mxu0 0.0
        %578 = vmatprep.subr.mxu0 0.0
        %579 = vmatpush1.msra.mxu0 0.0
        %580 = vmatprep.subr.mxu0 0.0
        %581 = vmatpush1.msra.mxu0 0.0
        %582 = vmatprep.subr.mxu0 0.0
        %583 = vmatpush1.msra.mxu0 0.0
        %584 = vmatprep.subr.mxu0 0.0
        %585 = vmatpush1.msra.mxu0 0.0
        %586 = vmatprep.subr.mxu0 0.0
        %587 = vmatpush1.msra.mxu0 0.0
        %588 = vmatprep.subr.mxu0 0.0
        %589 = vmatpush1.msra.mxu0 0.0
        %590 = vmatprep.subr.mxu0 %v371
        %591 = vmatpush1.msra.mxu0 %v370
        %592 = vmatprep.subr.mxu0 %v367
        %593 = vmatpush1.msra.mxu0 %v366
        %594 = vmatprep.subr.mxu0 %v363
        %595 = vmatpush1.msra.mxu0 %v362
        %596 = vmatprep.subr.mxu0 %v359
        %597 = vmatpush1.msra.mxu0 %v358
        %598 = vmatprep.subr.mxu0 0.0
        %599 = vmatpush2.msra.mxu0 0.0
        %600 = vmatprep.subr.mxu0 0.0
        %601 = vmatpush2.msra.mxu0 0.0
        %602 = vmatprep.subr.mxu0 0.0
        %603 = vmatpush2.msra.mxu0 0.0
        %604 = vmatprep.subr.mxu0 0.0
        %605 = vmatpush2.msra.mxu0 0.0
        %606 = vmatprep.subr.mxu0 0.0
        %607 = vmatpush2.msra.mxu0 0.0
        %608 = vmatprep.subr.mxu0 0.0
        %609 = vmatpush2.msra.mxu0 0.0
        %610 = vmatprep.subr.mxu0 0.0
        %611 = vmatpush2.msra.mxu0 0.0
        %612 = vmatprep.subr.mxu0 0.0
        %613 = vmatpush2.msra.mxu0 0.0
        %614 = vmatprep.subr.mxu0 0.0
        %615 = vmatpush2.msra.mxu0 0.0
        %616 = vmatprep.subr.mxu0 0.0
        %617 = vmatpush2.msra.mxu0 0.0
        %618 = vmatprep.subr.mxu0 0.0
        %619 = vmatpush2.msra.mxu0 0.0
        %620 = vmatprep.subr.mxu0 0.0
        %621 = vmatpush2.msra.mxu0 0.0
        %622 = vmatprep.subr.mxu0 0.0
        %623 = vmatpush2.msra.mxu0 0.0
        %624 = vmatprep.subr.mxu0 0.0
        %625 = vmatpush2.msra.mxu0 0.0
        %626 = vmatprep.subr.mxu0 0.0
        %627 = vmatpush2.msra.mxu0 0.0
        %628 = vmatprep.subr.mxu0 0.0
        %629 = vmatpush2.msra.mxu0 0.0
        %630 = vmatprep.mubr.f32.mxu0 0.0
        %631 = vmatmul.mubr.f32.gmra.mxu0 %v430
        %v632 = vpop.f32.mrf.mxu0
        %v633 = vadd.f32 %v391, %v632
        %v634 = vpop.f32.mrf.mxu0
        %v635 = vadd.f32 %v391, %v634
        %636 = vmatprep.mubr.f32.mxu0 0.0
        %637 = vmatmul.mubr.f32.gmra.mxu0 %v433
        %v638 = vpop.f32.mrf.mxu0
        %v639 = vadd.f32 %v396, %v638
        %v640 = vpop.f32.mrf.mxu0
        %v641 = vadd.f32 %v396, %v640
        %642 = vmatprep.mubr.f32.mxu0 0.0
        %643 = vmatmul.mubr.f32.gmra.mxu0 %v436
        %v644 = vpop.f32.mrf.mxu0
        %v645 = vadd.f32 %v401, %v644
        %v646 = vpop.f32.mrf.mxu0
        %v647 = vadd.f32 %v401, %v646
        %648 = vmatprep.mubr.f32.mxu0 0.0
        %649 = vmatmul.mubr.f32.gmra.mxu0 %v439
        %v650 = vpop.f32.mrf.mxu0
        %v651 = vadd.f32 %v406, %v650
        %v652 = vpop.f32.mrf.mxu0
        %v653 = vadd.f32 %v406, %v652
        %654 = vmatprep.mubr.f32.mxu0 0.0
        %655 = vmatmul.mubr.f32.gmra.mxu0 %v442
        %v656 = vpop.f32.mrf.mxu0
        %v657 = vadd.f32 %v411, %v656
        %v658 = vpop.f32.mrf.mxu0
        %v659 = vadd.f32 %v411, %v658
        %660 = vmatprep.mubr.f32.mxu0 0.0
        %661 = vmatmul.mubr.f32.gmra.mxu0 %v445
        %v662 = vpop.f32.mrf.mxu0
        %v663 = vadd.f32 %v416, %v662
        %v664 = vpop.f32.mrf.mxu0
        %v665 = vadd.f32 %v416, %v664
        %666 = vmatprep.mubr.f32.mxu0 0.0
        %667 = vmatmul.mubr.f32.gmra.mxu0 %v448
        %v668 = vpop.f32.mrf.mxu0
        %v669 = vadd.f32 %v421, %v668
        %v670 = vpop.f32.mrf.mxu0
        %v671 = vadd.f32 %v421, %v670
        %672 = vmatprep.mubr.f32.mxu0 0.0
        %673 = vmatmul.mubr.f32.gmra.mxu0 %v451
        %v674 = vpop.f32.mrf.mxu0
        %v675 = vadd.f32 %v426, %v674
        %v676 = vpop.f32.mrf.mxu0
        %v677 = vadd.f32 %v426, %v676
        %678 = vdwg.mxu0
        %v679 = vadd.f32 %v520, %v526
        %v680 = vadd.f32 %v679, %v532
        %v681 = vadd.f32 %v680, %v538
        %v682 = vadd.f32 %v681, %v544
        %v683 = vadd.f32 %v682, %v550
        %v684 = vadd.f32 %v683, %v556
        %v685 = vadd.f32 %v684, %v562
        %v686 = vrot.slane %v685, 4
        %v687 = vadd.f32 %v685, %v686
        %v688 = vrot.slane %v687, 2
        %v689 = vadd.f32 %v687, %v688
        %v690 = vrot.slane %v689, 1
        %v691 = vadd.f32 %v689, %v690
        %v692 = vadd.f32 %v522, %v528
        %v693 = vadd.f32 %v692, %v534
        %v694 = vadd.f32 %v693, %v540
        %v695 = vadd.f32 %v694, %v546
        %v696 = vadd.f32 %v695, %v552
        %v697 = vadd.f32 %v696, %v558
        %v698 = vadd.f32 %v697, %v564
        %v699 = vrot.slane %v698, 4
        %v700 = vadd.f32 %v698, %v699
        %v701 = vrot.slane %v700, 2
        %v702 = vadd.f32 %v700, %v701
        %v703 = vrot.slane %v702, 1
        %v704 = vadd.f32 %v702, %v703
        %v705 = vadd.f32 %v633, %v639
        %v706 = vadd.f32 %v705, %v645
        %v707 = vadd.f32 %v706, %v651
        %v708 = vadd.f32 %v707, %v657
        %v709 = vadd.f32 %v708, %v663
        %v710 = vadd.f32 %v709, %v669
        %v711 = vadd.f32 %v710, %v675
        %v712 = vrot.slane %v711, 4
        %v713 = vadd.f32 %v711, %v712
        %v714 = vrot.slane %v713, 2
        %v715 = vadd.f32 %v713, %v714
        %v716 = vrot.slane %v715, 1
        %v717 = vadd.f32 %v715, %v716
        %v718 = vadd.f32 %v635, %v641
        %v719 = vadd.f32 %v718, %v647
        %v720 = vadd.f32 %v719, %v653
        %v721 = vadd.f32 %v720, %v659
        %v722 = vadd.f32 %v721, %v665
        %v723 = vadd.f32 %v722, %v671
        %v724 = vadd.f32 %v723, %v677
        %v725 = vrot.slane %v724, 4
        %v726 = vadd.f32 %v724, %v725
        %v727 = vrot.slane %v726, 2
        %v728 = vadd.f32 %v726, %v727
        %v729 = vrot.slane %v728, 1
        %v730 = vadd.f32 %v728, %v729
        %v731 = vmul.f32 %v691, 0.015625
        %v732 = vmul.f32 %v704, 0.015625
        %v733 = vmul.f32 %v717, 0.015625
        %v734 = vmul.f32 %v730, 0.015625
        %v735 = vmul.f32 %v520, %v520
        %v736 = vmul.f32 %v522, %v522
        %v737 = vmul.f32 %v633, %v633
        %v738 = vmul.f32 %v635, %v635
        %v739 = vmul.f32 %v526, %v526
        %v740 = vmul.f32 %v528, %v528
        %v741 = vmul.f32 %v639, %v639
        %v742 = vmul.f32 %v641, %v641
        %v743 = vmul.f32 %v532, %v532
        %v744 = vmul.f32 %v534, %v534
        %v745 = vmul.f32 %v645, %v645
        %v746 = vmul.f32 %v647, %v647
        %v747 = vmul.f32 %v538, %v538
        %v748 = vmul.f32 %v540, %v540
        %v749 = vmul.f32 %v651, %v651
        %v750 = vmul.f32 %v653, %v653
        %v751 = vmul.f32 %v544, %v544
        %v752 = vmul.f32 %v546, %v546
        %v753 = vmul.f32 %v657, %v657
        %v754 = vmul.f32 %v659, %v659
        %v755 = vmul.f32 %v550, %v550
        %v756 = vmul.f32 %v552, %v552
        %v757 = vmul.f32 %v663, %v663
        %v758 = vmul.f32 %v665, %v665
        %v759 = vmul.f32 %v556, %v556
        %v760 = vmul.f32 %v558, %v558
        %v761 = vmul.f32 %v669, %v669
        %v762 = vmul.f32 %v671, %v671
        %v763 = vmul.f32 %v562, %v562
        %v764 = vmul.f32 %v564, %v564
        %v765 = vmul.f32 %v675, %v675
        %v766 = vmul.f32 %v677, %v677
        %v767 = vadd.f32 %v735, %v739
        %v768 = vadd.f32 %v767, %v743
        %v769 = vadd.f32 %v768, %v747
        %v770 = vadd.f32 %v769, %v751
        %v771 = vadd.f32 %v770, %v755
        %v772 = vadd.f32 %v771, %v759
        %v773 = vadd.f32 %v772, %v763
        %v774 = vrot.slane %v773, 4
        %v775 = vadd.f32 %v773, %v774
        %v776 = vrot.slane %v775, 2
        %v777 = vadd.f32 %v775, %v776
        %v778 = vrot.slane %v777, 1
        %v779 = vadd.f32 %v777, %v778
        %v780 = vadd.f32 %v736, %v740
        %v781 = vadd.f32 %v780, %v744
        %v782 = vadd.f32 %v781, %v748
        %v783 = vadd.f32 %v782, %v752
        %v784 = vadd.f32 %v783, %v756
        %v785 = vadd.f32 %v784, %v760
        %v786 = vadd.f32 %v785, %v764
        %v787 = vrot.slane %v786, 4
        %v788 = vadd.f32 %v786, %v787
        %v789 = vrot.slane %v788, 2
        %v790 = vadd.f32 %v788, %v789
        %v791 = vrot.slane %v790, 1
        %v792 = vadd.f32 %v790, %v791
        %v793 = vadd.f32 %v737, %v741
        %v794 = vadd.f32 %v793, %v745
        %v795 = vadd.f32 %v794, %v749
        %v796 = vadd.f32 %v795, %v753
        %v797 = vadd.f32 %v796, %v757
        %v798 = vadd.f32 %v797, %v761
        %v799 = vadd.f32 %v798, %v765
        %v800 = vrot.slane %v799, 4
        %v801 = vadd.f32 %v799, %v800
        %v802 = vrot.slane %v801, 2
        %v803 = vadd.f32 %v801, %v802
        %v804 = vrot.slane %v803, 1
        %v805 = vadd.f32 %v803, %v804
        %v806 = vadd.f32 %v738, %v742
        %v807 = vadd.f32 %v806, %v746
        %v808 = vadd.f32 %v807, %v750
        %v809 = vadd.f32 %v808, %v754
        %v810 = vadd.f32 %v809, %v758
        %v811 = vadd.f32 %v810, %v762
        %v812 = vadd.f32 %v811, %v766
        %v813 = vrot.slane %v812, 4
        %v814 = vadd.f32 %v812, %v813
        %v815 = vrot.slane %v814, 2
        %v816 = vadd.f32 %v814, %v815
        %v817 = vrot.slane %v816, 1
        %v818 = vadd.f32 %v816, %v817
        %v819 = vmul.f32 %v779, 0.015625
        %v820 = vmul.f32 %v792, 0.015625
        %v821 = vmul.f32 %v805, 0.015625
        %v822 = vmul.f32 %v818, 0.015625
        %v823 = vmul.f32 %v731, %v731
        %v824 = vmul.f32 %v732, %v732
        %v825 = vmul.f32 %v733, %v733
        %v826 = vmul.f32 %v734, %v734
        %v827 = vsub.f32 %v819, %v823
        %v828 = vsub.f32 %v820, %v824
        %v829 = vsub.f32 %v821, %v825
        %v830 = vsub.f32 %v822, %v826
        %v831 = vadd.f32 %v827, 1e-05
        %v832 = vadd.f32 %v828, 1e-05
        %v833 = vadd.f32 %v829, 1e-05
        %v834 = vadd.f32 %v830, 1e-05
        %v835 = vrsqrt.pop %v831
        %v836 = vrsqrt.pop %v832
        %v837 = vrsqrt.pop %v833
        %v838 = vrsqrt.pop %v834
        %v839 = vsub.f32 %v520, %v731
        %v840 = vsub.f32 %v522, %v732
        %v841 = vsub.f32 %v633, %v733
        %v842 = vsub.f32 %v635, %v734
        %v843 = vsub.f32 %v526, %v731
        %v844 = vsub.f32 %v528, %v732
        %v845 = vsub.f32 %v639, %v733
        %v846 = vsub.f32 %v641, %v734
        %v847 = vsub.f32 %v532, %v731
        %v848 = vsub.f32 %v534, %v732
        %v849 = vsub.f32 %v645, %v733
        %v850 = vsub.f32 %v647, %v734
        %v851 = vsub.f32 %v538, %v731
        %v852 = vsub.f32 %v540, %v732
        %v853 = vsub.f32 %v651, %v733
        %v854 = vsub.f32 %v653, %v734
        %v855 = vsub.f32 %v544, %v731
        %v856 = vsub.f32 %v546, %v732
        %v857 = vsub.f32 %v657, %v733
        %v858 = vsub.f32 %v659, %v734
        %v859 = vsub.f32 %v550, %v731
        %v860 = vsub.f32 %v552, %v732
        %v861 = vsub.f32 %v663, %v733
        %v862 = vsub.f32 %v665, %v734
        %v863 = vsub.f32 %v556, %v731
        %v864 = vsub.f32 %v558, %v732
        %v865 = vsub.f32 %v669, %v733
        %v866 = vsub.f32 %v671, %v734
        %v867 = vsub.f32 %v562, %v731
        %v868 = vsub.f32 %v564, %v732
        %v869 = vsub.f32 %v675, %v733
        %v870 = vsub.f32 %v677, %v734
        %v871 = vmul.f32 %v839, %v835
        %v872 = vmul.f32 %v840, %v836
        %v873 = vmul.f32 %v841, %v837
        %v874 = vmul.f32 %v842, %v838
        %v875 = vmul.f32 %v843, %v835
        %v876 = vmul.f32 %v844, %v836
        %v877 = vmul.f32 %v845, %v837
        %v878 = vmul.f32 %v846, %v838
        %v879 = vmul.f32 %v847, %v835
        %v880 = vmul.f32 %v848, %v836
        %v881 = vmul.f32 %v849, %v837
        %v882 = vmul.f32 %v850, %v838
        %v883 = vmul.f32 %v851, %v835
        %v884 = vmul.f32 %v852, %v836
        %v885 = vmul.f32 %v853, %v837
        %v886 = vmul.f32 %v854, %v838
        %v887 = vmul.f32 %v855, %v835
        %v888 = vmul.f32 %v856, %v836
        %v889 = vmul.f32 %v857, %v837
        %v890 = vmul.f32 %v858, %v838
        %v891 = vmul.f32 %v859, %v835
        %v892 = vmul.f32 %v860, %v836
        %v893 = vmul.f32 %v861, %v837
        %v894 = vmul.f32 %v862, %v838
        %v895 = vmul.f32 %v863, %v835
        %v896 = vmul.f32 %v864, %v836
        %v897 = vmul.f32 %v865, %v837
        %v898 = vmul.f32 %v866, %v838
        %v899 = vmul.f32 %v867, %v835
        %v900 = vmul.f32 %v868, %v836
        %v901 = vmul.f32 %v869, %v837
        %v902 = vmul.f32 %v870, %v838
        %v903 = vld [vmem:[%s7 + $0x40] sm:$0xff]
        %v904 = vld [vmem:[%s7 + $0x48] sm:$0xff]
        %v905 = vld [vmem:[%s7 + $0x50] sm:$0xff]
        %v906 = vld [vmem:[%s7 + $0x58] sm:$0xff]
        %v907 = vld [vmem:[%s7 + $0x60] sm:$0xff]
        %v908 = vld [vmem:[%s7 + $0x68] sm:$0xff]
        %v909 = vld [vmem:[%s7 + $0x70] sm:$0xff]
        %v910 = vld [vmem:[%s7 + $0x78] sm:$0xff]
        %v911 = vld [vmem:[%s7 + $0x80] sm:$0xff]
        %v912 = vld [vmem:[%s7 + $0x88] sm:$0xff]
        %v913 = vld [vmem:[%s7 + $0x90] sm:$0xff]
        %v914 = vld [vmem:[%s7 + $0x98] sm:$0xff]
        %v915 = vld [vmem:[%s7 + $0xa0] sm:$0xff]
        %v916 = vld [vmem:[%s7 + $0xa8] sm:$0xff]
        %v917 = vld [vmem:[%s7 + $0xb0] sm:$0xff]
        %v918 = vld [vmem:[%s7 + $0xb8] sm:$0xff]
        %920 = vset.pattern.permute.xlu0 0
        %921 = vperm.xlu0 %920, %v903
        %v922 = vpop.permute.xlu0 %921
        %925 = vset.pattern.permute.xlu0 0
        %926 = vperm.xlu0 %925, %v904
        %v927 = vpop.permute.xlu0 %926
        %930 = vset.pattern.permute.xlu0 0
        %931 = vperm.xlu0 %930, %v905
        %v932 = vpop.permute.xlu0 %931
        %935 = vset.pattern.permute.xlu0 0
        %936 = vperm.xlu0 %935, %v906
        %v937 = vpop.permute.xlu0 %936
        %940 = vset.pattern.permute.xlu0 0
        %941 = vperm.xlu0 %940, %v907
        %v942 = vpop.permute.xlu0 %941
        %945 = vset.pattern.permute.xlu0 0
        %946 = vperm.xlu0 %945, %v908
        %v947 = vpop.permute.xlu0 %946
        %950 = vset.pattern.permute.xlu0 0
        %951 = vperm.xlu0 %950, %v909
        %v952 = vpop.permute.xlu0 %951
        %955 = vset.pattern.permute.xlu0 0
        %956 = vperm.xlu0 %955, %v910
        %v957 = vpop.permute.xlu0 %956
        %v959 = vmul.f32 %v871, %v922
        %v960 = vmul.f32 %v872, %v922
        %v961 = vmul.f32 %v873, %v922
        %v962 = vmul.f32 %v874, %v922
        %v963 = vmul.f32 %v875, %v927
        %v964 = vmul.f32 %v876, %v927
        %v965 = vmul.f32 %v877, %v927
        %v966 = vmul.f32 %v878, %v927
        %v967 = vmul.f32 %v879, %v932
        %v968 = vmul.f32 %v880, %v932
        %v969 = vmul.f32 %v881, %v932
        %v970 = vmul.f32 %v882, %v932
        %v971 = vmul.f32 %v883, %v937
        %v972 = vmul.f32 %v884, %v937
        %v973 = vmul.f32 %v885, %v937
        %v974 = vmul.f32 %v886, %v937
        %v975 = vmul.f32 %v887, %v942
        %v976 = vmul.f32 %v888, %v942
        %v977 = vmul.f32 %v889, %v942
        %v978 = vmul.f32 %v890, %v942
        %v979 = vmul.f32 %v891, %v947
        %v980 = vmul.f32 %v892, %v947
        %v981 = vmul.f32 %v893, %v947
        %v982 = vmul.f32 %v894, %v947
        %v983 = vmul.f32 %v895, %v952
        %v984 = vmul.f32 %v896, %v952
        %v985 = vmul.f32 %v897, %v952
        %v986 = vmul.f32 %v898, %v952
        %v987 = vmul.f32 %v899, %v957
        %v988 = vmul.f32 %v900, %v957
        %v989 = vmul.f32 %v901, %v957
        %v990 = vmul.f32 %v902, %v957
        %992 = vset.pattern.permute.xlu0 0
        %993 = vperm.xlu0 %992, %v911
        %v994 = vpop.permute.xlu0 %993
        %997 = vset.pattern.permute.xlu0 0
        %998 = vperm.xlu0 %997, %v912
        %v999 = vpop.permute.xlu0 %998
        %1002 = vset.pattern.permute.xlu0 0
        %1003 = vperm.xlu0 %1002, %v913
        %v1004 = vpop.permute.xlu0 %1003
        %1007 = vset.pattern.permute.xlu0 0
        %1008 = vperm.xlu0 %1007, %v914
        %v1009 = vpop.permute.xlu0 %1008
        %1012 = vset.pattern.permute.xlu0 0
        %1013 = vperm.xlu0 %1012, %v915
        %v1014 = vpop.permute.xlu0 %1013
        %1017 = vset.pattern.permute.xlu0 0
        %1018 = vperm.xlu0 %1017, %v916
        %v1019 = vpop.permute.xlu0 %1018
        %1022 = vset.pattern.permute.xlu0 0
        %1023 = vperm.xlu0 %1022, %v917
        %v1024 = vpop.permute.xlu0 %1023
        %1027 = vset.pattern.permute.xlu0 0
        %1028 = vperm.xlu0 %1027, %v918
        %v1029 = vpop.permute.xlu0 %1028
        %v1031 = vadd.f32 %v959, %v994
        %v1032 = vadd.f32 %v960, %v994
        %v1033 = vadd.f32 %v961, %v994
        %v1034 = vadd.f32 %v962, %v994
        %v1035 = vadd.f32 %v963, %v999
        %v1036 = vadd.f32 %v964, %v999
        %v1037 = vadd.f32 %v965, %v999
        %v1038 = vadd.f32 %v966, %v999
        %v1039 = vadd.f32 %v967, %v1004
        %v1040 = vadd.f32 %v968, %v1004
        %v1041 = vadd.f32 %v969, %v1004
        %v1042 = vadd.f32 %v970, %v1004
        %v1043 = vadd.f32 %v971, %v1009
        %v1044 = vadd.f32 %v972, %v1009
        %v1045 = vadd.f32 %v973, %v1009
        %v1046 = vadd.f32 %v974, %v1009
        %v1047 = vadd.f32 %v975, %v1014
        %v1048 = vadd.f32 %v976, %v1014
        %v1049 = vadd.f32 %v977, %v1014
        %v1050 = vadd.f32 %v978, %v1014
        %v1051 = vadd.f32 %v979, %v1019
        %v1052 = vadd.f32 %v980, %v1019
        %v1053 = vadd.f32 %v981, %v1019
        %v1054 = vadd.f32 %v982, %v1019
        %v1055 = vadd.f32 %v983, %v1024
        %v1056 = vadd.f32 %v984, %v1024
        %v1057 = vadd.f32 %v985, %v1024
        %v1058 = vadd.f32 %v986, %v1024
        %v1059 = vadd.f32 %v987, %v1029
        %v1060 = vadd.f32 %v988, %v1029
        %v1061 = vadd.f32 %v989, %v1029
        %v1062 = vadd.f32 %v990, %v1029
        %v1063 = vmax.f32 %v1031, 0.0
        %v1064 = vmax.f32 %v1032, 0.0
        %v1065 = vmax.f32 %v1033, 0.0
        %v1066 = vmax.f32 %v1034, 0.0
        %v1067 = vmax.f32 %v1035, 0.0
        %v1068 = vmax.f32 %v1036, 0.0
        %v1069 = vmax.f32 %v1037, 0.0
        %v1070 = vmax.f32 %v1038, 0.0
        %v1071 = vmax.f32 %v1039, 0.0
        %v1072 = vmax.f32 %v1040, 0.0
        %v1073 = vmax.f32 %v1041, 0.0
        %v1074 = vmax.f32 %v1042, 0.0
        %v1075 = vmax.f32 %v1043, 0.0
        %v1076 = vmax.f32 %v1044, 0.0
        %v1077 = vmax.f32 %v1045, 0.0
        %v1078 = vmax.f32 %v1046, 0.0
        %v1079 = vmax.f32 %v1047, 0.0
        %v1080 = vmax.f32 %v1048, 0.0
        %v1081 = vmax.f32 %v1049, 0.0
        %v1082 = vmax.f32 %v1050, 0.0
        %v1083 = vmax.f32 %v1051, 0.0
        %v1084 = vmax.f32 %v1052, 0.0
        %v1085 = vmax.f32 %v1053, 0.0
        %v1086 = vmax.f32 %v1054, 0.0
        %v1087 = vmax.f32 %v1055, 0.0
        %v1088 = vmax.f32 %v1056, 0.0
        %v1089 = vmax.f32 %v1057, 0.0
        %v1090 = vmax.f32 %v1058, 0.0
        %v1091 = vmax.f32 %v1059, 0.0
        %v1092 = vmax.f32 %v1060, 0.0
        %v1093 = vmax.f32 %v1061, 0.0
        %v1094 = vmax.f32 %v1062, 0.0
        %v1095 = vld [vmem:[%s2] sm:$0xff]
        %v1096 = vld [vmem:[%s2 + $0x8] sm:$0xff]
        %v1097 = vld [vmem:[%s2 + $0x10] sm:$0xff]
        %v1098 = vld [vmem:[%s2 + $0x18] sm:$0xff]
        %v1099 = vld [vmem:[%s7 + $0xc0] sm:$0xff]
        %v1100 = vld [vmem:[%s7 + $0xc8] sm:$0xff]
        %v1101 = vld [vmem:[%s7 + $0xd0] sm:$0xff]
        %v1102 = vld [vmem:[%s7 + $0xd8] sm:$0xff]
        %1104 = vset.pattern.permute.xlu0 0
        %1105 = vperm.xlu0 %1104, %v1099
        %v1106 = vpop.permute.xlu0 %1105
        %1109 = vset.pattern.permute.xlu0 0
        %1110 = vperm.xlu0 %1109, %v1100
        %v1111 = vpop.permute.xlu0 %1110
        %1114 = vset.pattern.permute.xlu0 0
        %1115 = vperm.xlu0 %1114, %v1101
        %v1116 = vpop.permute.xlu0 %1115
        %1119 = vset.pattern.permute.xlu0 0
        %1120 = vperm.xlu0 %1119, %v1102
        %v1121 = vpop.permute.xlu0 %1120
        %vm1123 = vcmask 523264
        %v1125 = vsel %vm1123, %v1095, 0
        %v1128 = vsel %vm1123, %v1096, 0
        %v1131 = vsel %vm1123, %v1097, 0
        %v1134 = vsel %vm1123, %v1098, 0
        %1136 = vmatprep.subr.mxu0 0.0
        %1137 = vmatpush1.msra.mxu0 0.0
        %1138 = vmatprep.subr.mxu0 0.0
        %1139 = vmatpush1.msra.mxu0 0.0
        %1140 = vmatprep.subr.mxu0 0.0
        %1141 = vmatpush1.msra.mxu0 0.0
        %1142 = vmatprep.subr.mxu0 0.0
        %1143 = vmatpush1.msra.mxu0 0.0
        %1144 = vmatprep.subr.mxu0 0.0
        %1145 = vmatpush1.msra.mxu0 0.0
        %1146 = vmatprep.subr.mxu0 0.0
        %1147 = vmatpush1.msra.mxu0 0.0
        %1148 = vmatprep.subr.mxu0 0.0
        %1149 = vmatpush1.msra.mxu0 0.0
        %1150 = vmatprep.subr.mxu0 0.0
        %1151 = vmatpush1.msra.mxu0 0.0
        %1152 = vmatprep.subr.mxu0 %v1092
        %1153 = vmatpush1.msra.mxu0 %v1091
        %1154 = vmatprep.subr.mxu0 %v1088
        %1155 = vmatpush1.msra.mxu0 %v1087
        %1156 = vmatprep.subr.mxu0 %v1084
        %1157 = vmatpush1.msra.mxu0 %v1083
        %1158 = vmatprep.subr.mxu0 %v1080
        %1159 = vmatpush1.msra.mxu0 %v1079
        %1160 = vmatprep.subr.mxu0 %v1076
        %1161 = vmatpush1.msra.mxu0 %v1075
        %1162 = vmatprep.subr.mxu0 %v1072
        %1163 = vmatpush1.msra.mxu0 %v1071
        %1164 = vmatprep.subr.mxu0 %v1068
        %1165 = vmatpush1.msra.mxu0 %v1067
        %1166 = vmatprep.subr.mxu0 %v1064
        %1167 = vmatpush1.msra.mxu0 %v1063
        %1168 = vmatprep.subr.mxu0 0.0
        %1169 = vmatpush2.msra.mxu0 0.0
        %1170 = vmatprep.subr.mxu0 0.0
        %1171 = vmatpush2.msra.mxu0 0.0
        %1172 = vmatprep.subr.mxu0 0.0
        %1173 = vmatpush2.msra.mxu0 0.0
        %1174 = vmatprep.subr.mxu0 0.0
        %1175 = vmatpush2.msra.mxu0 0.0
        %1176 = vmatprep.subr.mxu0 0.0
        %1177 = vmatpush2.msra.mxu0 0.0
        %1178 = vmatprep.subr.mxu0 0.0
        %1179 = vmatpush2.msra.mxu0 0.0
        %1180 = vmatprep.subr.mxu0 0.0
        %1181 = vmatpush2.msra.mxu0 0.0
        %1182 = vmatprep.subr.mxu0 0.0
        %1183 = vmatpush2.msra.mxu0 0.0
        %1184 = vmatprep.subr.mxu0 0.0
        %1185 = vmatpush2.msra.mxu0 0.0
        %1186 = vmatprep.subr.mxu0 0.0
        %1187 = vmatpush2.msra.mxu0 0.0
        %1188 = vmatprep.subr.mxu0 0.0
        %1189 = vmatpush2.msra.mxu0 0.0
        %1190 = vmatprep.subr.mxu0 0.0
        %1191 = vmatpush2.msra.mxu0 0.0
        %1192 = vmatprep.subr.mxu0 0.0
        %1193 = vmatpush2.msra.mxu0 0.0
        %1194 = vmatprep.subr.mxu0 0.0
        %1195 = vmatpush2.msra.mxu0 0.0
        %1196 = vmatprep.subr.mxu0 0.0
        %1197 = vmatpush2.msra.mxu0 0.0
        %1198 = vmatprep.subr.mxu0 0.0
        %1199 = vmatpush2.msra.mxu0 0.0
        %1200 = vmatprep.mubr.f32.mxu0 0.0
        %1201 = vmatmul.mubr.f32.gmra.mxu0 %v1125
        %v1202 = vpop.f32.mrf.mxu0
        %v1203 = vadd.f32 %v1106, %v1202
        %v1204 = vpop.f32.mrf.mxu0
        %v1205 = vadd.f32 %v1106, %v1204
        %1206 = vmatprep.mubr.f32.mxu0 0.0
        %1207 = vmatmul.mubr.f32.gmra.mxu0 %v1128
        %v1208 = vpop.f32.mrf.mxu0
        %v1209 = vadd.f32 %v1111, %v1208
        %v1210 = vpop.f32.mrf.mxu0
        %v1211 = vadd.f32 %v1111, %v1210
        %1212 = vmatprep.mubr.f32.mxu0 0.0
        %1213 = vmatmul.mubr.f32.gmra.mxu0 %v1131
        %v1214 = vpop.f32.mrf.mxu0
        %v1215 = vadd.f32 %v1116, %v1214
        %v1216 = vpop.f32.mrf.mxu0
        %v1217 = vadd.f32 %v1116, %v1216
        %1218 = vmatprep.mubr.f32.mxu0 0.0
        %1219 = vmatmul.mubr.f32.gmra.mxu0 %v1134
        %v1220 = vpop.f32.mrf.mxu0
        %v1221 = vadd.f32 %v1121, %v1220
        %v1222 = vpop.f32.mrf.mxu0
        %v1223 = vadd.f32 %v1121, %v1222
        %1224 = vdwg.mxu0
        %1225 = vmatprep.subr.mxu0 0.0
        %1226 = vmatpush1.msra.mxu0 0.0
        %1227 = vmatprep.subr.mxu0 0.0
        %1228 = vmatpush1.msra.mxu0 0.0
        %1229 = vmatprep.subr.mxu0 0.0
        %1230 = vmatpush1.msra.mxu0 0.0
        %1231 = vmatprep.subr.mxu0 0.0
        %1232 = vmatpush1.msra.mxu0 0.0
        %1233 = vmatprep.subr.mxu0 0.0
        %1234 = vmatpush1.msra.mxu0 0.0
        %1235 = vmatprep.subr.mxu0 0.0
        %1236 = vmatpush1.msra.mxu0 0.0
        %1237 = vmatprep.subr.mxu0 0.0
        %1238 = vmatpush1.msra.mxu0 0.0
        %1239 = vmatprep.subr.mxu0 0.0
        %1240 = vmatpush1.msra.mxu0 0.0
        %1241 = vmatprep.subr.mxu0 %v1094
        %1242 = vmatpush1.msra.mxu0 %v1093
        %1243 = vmatprep.subr.mxu0 %v1090
        %1244 = vmatpush1.msra.mxu0 %v1089
        %1245 = vmatprep.subr.mxu0 %v1086
        %1246 = vmatpush1.msra.mxu0 %v1085
        %1247 = vmatprep.subr.mxu0 %v1082
        %1248 = vmatpush1.msra.mxu0 %v1081
        %1249 = vmatprep.subr.mxu0 %v1078
        %1250 = vmatpush1.msra.mxu0 %v1077
        %1251 = vmatprep.subr.mxu0 %v1074
        %1252 = vmatpush1.msra.mxu0 %v1073
        %1253 = vmatprep.subr.mxu0 %v1070
        %1254 = vmatpush1.msra.mxu0 %v1069
        %1255 = vmatprep.subr.mxu0 %v1066
        %1256 = vmatpush1.msra.mxu0 %v1065
        %1257 = vmatprep.subr.mxu0 0.0
        %1258 = vmatpush2.msra.mxu0 0.0
        %1259 = vmatprep.subr.mxu0 0.0
        %1260 = vmatpush2.msra.mxu0 0.0
        %1261 = vmatprep.subr.mxu0 0.0
        %1262 = vmatpush2.msra.mxu0 0.0
        %1263 = vmatprep.subr.mxu0 0.0
        %1264 = vmatpush2.msra.mxu0 0.0
        %1265 = vmatprep.subr.mxu0 0.0
        %1266 = vmatpush2.msra.mxu0 0.0
        %1267 = vmatprep.subr.mxu0 0.0
        %1268 = vmatpush2.msra.mxu0 0.0
        %1269 = vmatprep.subr.mxu0 0.0
        %1270 = vmatpush2.msra.mxu0 0.0
        %1271 = vmatprep.subr.mxu0 0.0
        %1272 = vmatpush2.msra.mxu0 0.0
        %1273 = vmatprep.subr.mxu0 0.0
        %1274 = vmatpush2.msra.mxu0 0.0
        %1275 = vmatprep.subr.mxu0 0.0
        %1276 = vmatpush2.msra.mxu0 0.0
        %1277 = vmatprep.subr.mxu0 0.0
        %1278 = vmatpush2.msra.mxu0 0.0
        %1279 = vmatprep.subr.mxu0 0.0
        %1280 = vmatpush2.msra.mxu0 0.0
        %1281 = vmatprep.subr.mxu0 0.0
        %1282 = vmatpush2.msra.mxu0 0.0
        %1283 = vmatprep.subr.mxu0 0.0
        %1284 = vmatpush2.msra.mxu0 0.0
        %1285 = vmatprep.subr.mxu0 0.0
        %1286 = vmatpush2.msra.mxu0 0.0
        %1287 = vmatprep.subr.mxu0 0.0
        %1288 = vmatpush2.msra.mxu0 0.0
        %1289 = vmatprep.mubr.f32.mxu0 0.0
        %1290 = vmatmul.mubr.f32.gmra.mxu0 %v1125
        %v1291 = vpop.f32.mrf.mxu0
        %v1292 = vadd.f32 %v1106, %v1291
        %v1293 = vpop.f32.mrf.mxu0
        %v1294 = vadd.f32 %v1106, %v1293
        %1295 = vmatprep.mubr.f32.mxu0 0.0
        %1296 = vmatmul.mubr.f32.gmra.mxu0 %v1128
        %v1297 = vpop.f32.mrf.mxu0
        %v1298 = vadd.f32 %v1111, %v1297
        %v1299 = vpop.f32.mrf.mxu0
        %v1300 = vadd.f32 %v1111, %v1299
        %1301 = vmatprep.mubr.f32.mxu0 0.0
        %1302 = vmatmul.mubr.f32.gmra.mxu0 %v1131
        %v1303 = vpop.f32.mrf.mxu0
        %v1304 = vadd.f32 %v1116, %v1303
        %v1305 = vpop.f32.mrf.mxu0
        %v1306 = vadd.f32 %v1116, %v1305
        %1307 = vmatprep.mubr.f32.mxu0 0.0
        %1308 = vmatmul.mubr.f32.gmra.mxu0 %v1134
        %v1309 = vpop.f32.mrf.mxu0
        %v1310 = vadd.f32 %v1121, %v1309
        %v1311 = vpop.f32.mrf.mxu0
        %v1312 = vadd.f32 %v1121, %v1311
        %1313 = vdwg.mxu0
        %v1314 = vadd.f32 %v1203, %v1209
        %v1315 = vadd.f32 %v1314, %v1215
        %v1316 = vadd.f32 %v1315, %v1221
        %v1317 = vrot.slane %v1316, 4
        %v1318 = vadd.f32 %v1316, %v1317
        %v1319 = vrot.slane %v1318, 2
        %v1320 = vadd.f32 %v1318, %v1319
        %v1321 = vrot.slane %v1320, 1
        %v1322 = vadd.f32 %v1320, %v1321
        %v1323 = vadd.f32 %v1205, %v1211
        %v1324 = vadd.f32 %v1323, %v1217
        %v1325 = vadd.f32 %v1324, %v1223
        %v1326 = vrot.slane %v1325, 4
        %v1327 = vadd.f32 %v1325, %v1326
        %v1328 = vrot.slane %v1327, 2
        %v1329 = vadd.f32 %v1327, %v1328
        %v1330 = vrot.slane %v1329, 1
        %v1331 = vadd.f32 %v1329, %v1330
        %v1332 = vadd.f32 %v1292, %v1298
        %v1333 = vadd.f32 %v1332, %v1304
        %v1334 = vadd.f32 %v1333, %v1310
        %v1335 = vrot.slane %v1334, 4
        %v1336 = vadd.f32 %v1334, %v1335
        %v1337 = vrot.slane %v1336, 2
        %v1338 = vadd.f32 %v1336, %v1337
        %v1339 = vrot.slane %v1338, 1
        %v1340 = vadd.f32 %v1338, %v1339
        %v1341 = vadd.f32 %v1294, %v1300
        %v1342 = vadd.f32 %v1341, %v1306
        %v1343 = vadd.f32 %v1342, %v1312
        %v1344 = vrot.slane %v1343, 4
        %v1345 = vadd.f32 %v1343, %v1344
        %v1346 = vrot.slane %v1345, 2
        %v1347 = vadd.f32 %v1345, %v1346
        %v1348 = vrot.slane %v1347, 1
        %v1349 = vadd.f32 %v1347, %v1348
        %v1350 = vmul.f32 %v1322, 0.03125
        %v1351 = vmul.f32 %v1331, 0.03125
        %v1352 = vmul.f32 %v1340, 0.03125
        %v1353 = vmul.f32 %v1349, 0.03125
        %v1354 = vmul.f32 %v1203, %v1203
        %v1355 = vmul.f32 %v1205, %v1205
        %v1356 = vmul.f32 %v1292, %v1292
        %v1357 = vmul.f32 %v1294, %v1294
        %v1358 = vmul.f32 %v1209, %v1209
        %v1359 = vmul.f32 %v1211, %v1211
        %v1360 = vmul.f32 %v1298, %v1298
        %v1361 = vmul.f32 %v1300, %v1300
        %v1362 = vmul.f32 %v1215, %v1215
        %v1363 = vmul.f32 %v1217, %v1217
        %v1364 = vmul.f32 %v1304, %v1304
        %v1365 = vmul.f32 %v1306, %v1306
        %v1366 = vmul.f32 %v1221, %v1221
        %v1367 = vmul.f32 %v1223, %v1223
        %v1368 = vmul.f32 %v1310, %v1310
        %v1369 = vmul.f32 %v1312, %v1312
        %v1370 = vadd.f32 %v1354, %v1358
        %v1371 = vadd.f32 %v1370, %v1362
        %v1372 = vadd.f32 %v1371, %v1366
        %v1373 = vrot.slane %v1372, 4
        %v1374 = vadd.f32 %v1372, %v1373
        %v1375 = vrot.slane %v1374, 2
        %v1376 = vadd.f32 %v1374, %v1375
        %v1377 = vrot.slane %v1376, 1
        %v1378 = vadd.f32 %v1376, %v1377
        %v1379 = vadd.f32 %v1355, %v1359
        %v1380 = vadd.f32 %v1379, %v1363
        %v1381 = vadd.f32 %v1380, %v1367
        %v1382 = vrot.slane %v1381, 4
        %v1383 = vadd.f32 %v1381, %v1382
        %v1384 = vrot.slane %v1383, 2
        %v1385 = vadd.f32 %v1383, %v1384
        %v1386 = vrot.slane %v1385, 1
        %v1387 = vadd.f32 %v1385, %v1386
        %v1388 = vadd.f32 %v1356, %v1360
        %v1389 = vadd.f32 %v1388, %v1364
        %v1390 = vadd.f32 %v1389, %v1368
        %v1391 = vrot.slane %v1390, 4
        %v1392 = vadd.f32 %v1390, %v1391
        %v1393 = vrot.slane %v1392, 2
        %v1394 = vadd.f32 %v1392, %v1393
        %v1395 = vrot.slane %v1394, 1
        %v1396 = vadd.f32 %v1394, %v1395
        %v1397 = vadd.f32 %v1357, %v1361
        %v1398 = vadd.f32 %v1397, %v1365
        %v1399 = vadd.f32 %v1398, %v1369
        %v1400 = vrot.slane %v1399, 4
        %v1401 = vadd.f32 %v1399, %v1400
        %v1402 = vrot.slane %v1401, 2
        %v1403 = vadd.f32 %v1401, %v1402
        %v1404 = vrot.slane %v1403, 1
        %v1405 = vadd.f32 %v1403, %v1404
        %v1406 = vmul.f32 %v1378, 0.03125
        %v1407 = vmul.f32 %v1387, 0.03125
        %v1408 = vmul.f32 %v1396, 0.03125
        %v1409 = vmul.f32 %v1405, 0.03125
        %v1410 = vmul.f32 %v1350, %v1350
        %v1411 = vmul.f32 %v1351, %v1351
        %v1412 = vmul.f32 %v1352, %v1352
        %v1413 = vmul.f32 %v1353, %v1353
        %v1414 = vsub.f32 %v1406, %v1410
        %v1415 = vsub.f32 %v1407, %v1411
        %v1416 = vsub.f32 %v1408, %v1412
        %v1417 = vsub.f32 %v1409, %v1413
        %v1418 = vadd.f32 %v1414, 1e-05
        %v1419 = vadd.f32 %v1415, 1e-05
        %v1420 = vadd.f32 %v1416, 1e-05
        %v1421 = vadd.f32 %v1417, 1e-05
        %v1422 = vrsqrt.pop %v1418
        %v1423 = vrsqrt.pop %v1419
        %v1424 = vrsqrt.pop %v1420
        %v1425 = vrsqrt.pop %v1421
        %v1426 = vsub.f32 %v1203, %v1350
        %v1427 = vsub.f32 %v1205, %v1351
        %v1428 = vsub.f32 %v1292, %v1352
        %v1429 = vsub.f32 %v1294, %v1353
        %v1430 = vsub.f32 %v1209, %v1350
        %v1431 = vsub.f32 %v1211, %v1351
        %v1432 = vsub.f32 %v1298, %v1352
        %v1433 = vsub.f32 %v1300, %v1353
        %v1434 = vsub.f32 %v1215, %v1350
        %v1435 = vsub.f32 %v1217, %v1351
        %v1436 = vsub.f32 %v1304, %v1352
        %v1437 = vsub.f32 %v1306, %v1353
        %v1438 = vsub.f32 %v1221, %v1350
        %v1439 = vsub.f32 %v1223, %v1351
        %v1440 = vsub.f32 %v1310, %v1352
        %v1441 = vsub.f32 %v1312, %v1353
        %v1442 = vmul.f32 %v1426, %v1422
        %v1443 = vmul.f32 %v1427, %v1423
        %v1444 = vmul.f32 %v1428, %v1424
        %v1445 = vmul.f32 %v1429, %v1425
        %v1446 = vmul.f32 %v1430, %v1422
        %v1447 = vmul.f32 %v1431, %v1423
        %v1448 = vmul.f32 %v1432, %v1424
        %v1449 = vmul.f32 %v1433, %v1425
        %v1450 = vmul.f32 %v1434, %v1422
        %v1451 = vmul.f32 %v1435, %v1423
        %v1452 = vmul.f32 %v1436, %v1424
        %v1453 = vmul.f32 %v1437, %v1425
        %v1454 = vmul.f32 %v1438, %v1422
        %v1455 = vmul.f32 %v1439, %v1423
        %v1456 = vmul.f32 %v1440, %v1424
        %v1457 = vmul.f32 %v1441, %v1425
        %v1458 = vld [vmem:[%s7 + $0x100] sm:$0xff]
        %v1459 = vld [vmem:[%s7 + $0x108] sm:$0xff]
        %v1460 = vld [vmem:[%s7 + $0x110] sm:$0xff]
        %v1461 = vld [vmem:[%s7 + $0x118] sm:$0xff]
        %v1462 = vld [vmem:[%s7 + $0x140] sm:$0xff]
        %v1463 = vld [vmem:[%s7 + $0x148] sm:$0xff]
        %v1464 = vld [vmem:[%s7 + $0x150] sm:$0xff]
        %v1465 = vld [vmem:[%s7 + $0x158] sm:$0xff]
        %1467 = vset.pattern.permute.xlu0 0
        %1468 = vperm.xlu0 %1467, %v1458
        %v1469 = vpop.permute.xlu0 %1468
        %1472 = vset.pattern.permute.xlu0 0
        %1473 = vperm.xlu0 %1472, %v1459
        %v1474 = vpop.permute.xlu0 %1473
        %1477 = vset.pattern.permute.xlu0 0
        %1478 = vperm.xlu0 %1477, %v1460
        %v1479 = vpop.permute.xlu0 %1478
        %1482 = vset.pattern.permute.xlu0 0
        %1483 = vperm.xlu0 %1482, %v1461
        %v1484 = vpop.permute.xlu0 %1483
        %v1486 = vmul.f32 %v1442, %v1469
        %v1487 = vmul.f32 %v1443, %v1469
        %v1488 = vmul.f32 %v1444, %v1469
        %v1489 = vmul.f32 %v1445, %v1469
        %v1490 = vmul.f32 %v1446, %v1474
        %v1491 = vmul.f32 %v1447, %v1474
        %v1492 = vmul.f32 %v1448, %v1474
        %v1493 = vmul.f32 %v1449, %v1474
        %v1494 = vmul.f32 %v1450, %v1479
        %v1495 = vmul.f32 %v1451, %v1479
        %v1496 = vmul.f32 %v1452, %v1479
        %v1497 = vmul.f32 %v1453, %v1479
        %v1498 = vmul.f32 %v1454, %v1484
        %v1499 = vmul.f32 %v1455, %v1484
        %v1500 = vmul.f32 %v1456, %v1484
        %v1501 = vmul.f32 %v1457, %v1484
        %1503 = vset.pattern.permute.xlu0 0
        %1504 = vperm.xlu0 %1503, %v1462
        %v1505 = vpop.permute.xlu0 %1504
        %1508 = vset.pattern.permute.xlu0 0
        %1509 = vperm.xlu0 %1508, %v1463
        %v1510 = vpop.permute.xlu0 %1509
        %1513 = vset.pattern.permute.xlu0 0
        %1514 = vperm.xlu0 %1513, %v1464
        %v1515 = vpop.permute.xlu0 %1514
        %1518 = vset.pattern.permute.xlu0 0
        %1519 = vperm.xlu0 %1518, %v1465
        %v1520 = vpop.permute.xlu0 %1519
        %v1522 = vadd.f32 %v1486, %v1505
        %v1523 = vadd.f32 %v1487, %v1505
        %v1524 = vadd.f32 %v1488, %v1505
        %v1525 = vadd.f32 %v1489, %v1505
        %v1526 = vadd.f32 %v1490, %v1510
        %v1527 = vadd.f32 %v1491, %v1510
        %v1528 = vadd.f32 %v1492, %v1510
        %v1529 = vadd.f32 %v1493, %v1510
        %v1530 = vadd.f32 %v1494, %v1515
        %v1531 = vadd.f32 %v1495, %v1515
        %v1532 = vadd.f32 %v1496, %v1515
        %v1533 = vadd.f32 %v1497, %v1515
        %v1534 = vadd.f32 %v1498, %v1520
        %v1535 = vadd.f32 %v1499, %v1520
        %v1536 = vadd.f32 %v1500, %v1520
        %v1537 = vadd.f32 %v1501, %v1520
        %v1538 = vmax.f32 %v1522, 0.0
        %v1539 = vmax.f32 %v1523, 0.0
        %v1540 = vmax.f32 %v1524, 0.0
        %v1541 = vmax.f32 %v1525, 0.0
        %v1542 = vmax.f32 %v1526, 0.0
        %v1543 = vmax.f32 %v1527, 0.0
        %v1544 = vmax.f32 %v1528, 0.0
        %v1545 = vmax.f32 %v1529, 0.0
        %v1546 = vmax.f32 %v1530, 0.0
        %v1547 = vmax.f32 %v1531, 0.0
        %v1548 = vmax.f32 %v1532, 0.0
        %v1549 = vmax.f32 %v1533, 0.0
        %v1550 = vmax.f32 %v1534, 0.0
        %v1551 = vmax.f32 %v1535, 0.0
        %v1552 = vmax.f32 %v1536, 0.0
        %v1553 = vmax.f32 %v1537, 0.0
        %v1554 = vld [vmem:[%s3] sm:$0xff]
        %v1555 = vld [vmem:[%s3 + $0x8] sm:$0xff]
        %v1556 = vld [vmem:[%s3 + $0x10] sm:$0xff]
        %v1557 = vld [vmem:[%s3 + $0x18] sm:$0xff]
        %v1558 = vld [vmem:[%s3 + $0x20] sm:$0xff]
        %v1559 = vld [vmem:[%s3 + $0x28] sm:$0xff]
        %v1560 = vld [vmem:[%s3 + $0x30] sm:$0xff]
        %v1561 = vld [vmem:[%s3 + $0x38] sm:$0xff]
        %v1562 = vld [vmem:[%s4] sm:$0xff]
        %v1563 = vld [vmem:[%s4 + $0x8] sm:$0xff]
        %v1564 = vld [vmem:[%s4 + $0x10] sm:$0xff]
        %v1565 = vld [vmem:[%s4 + $0x18] sm:$0xff]
        %v1566 = vld [vmem:[%s4 + $0x20] sm:$0xff]
        %v1567 = vld [vmem:[%s4 + $0x28] sm:$0xff]
        %v1568 = vld [vmem:[%s4 + $0x30] sm:$0xff]
        %v1569 = vld [vmem:[%s4 + $0x38] sm:$0xff]
        %v1571 = vsel %vm428, %v1562, 0
        %v1574 = vsel %vm428, %v1563, 0
        %v1577 = vsel %vm428, %v1564, 0
        %v1580 = vsel %vm428, %v1565, 0
        %v1583 = vsel %vm428, %v1566, 0
        %v1586 = vsel %vm428, %v1567, 0
        %v1589 = vsel %vm428, %v1568, 0
        %v1592 = vsel %vm428, %v1569, 0
        %1594 = vmatprep.subr.mxu0 0.0
        %1595 = vmatpush1.msra.mxu0 0.0
        %1596 = vmatprep.subr.mxu0 0.0
        %1597 = vmatpush1.msra.mxu0 0.0
        %1598 = vmatprep.subr.mxu0 0.0
        %1599 = vmatpush1.msra.mxu0 0.0
        %1600 = vmatprep.subr.mxu0 0.0
        %1601 = vmatpush1.msra.mxu0 0.0
        %1602 = vmatprep.subr.mxu0 0.0
        %1603 = vmatpush1.msra.mxu0 0.0
        %1604 = vmatprep.subr.mxu0 0.0
        %1605 = vmatpush1.msra.mxu0 0.0
        %1606 = vmatprep.subr.mxu0 0.0
        %1607 = vmatpush1.msra.mxu0 0.0
        %1608 = vmatprep.subr.mxu0 0.0
        %1609 = vmatpush1.msra.mxu0 0.0
        %1610 = vmatprep.subr.mxu0 0.0
        %1611 = vmatpush1.msra.mxu0 0.0
        %1612 = vmatprep.subr.mxu0 0.0
        %1613 = vmatpush1.msra.mxu0 0.0
        %1614 = vmatprep.subr.mxu0 0.0
        %1615 = vmatpush1.msra.mxu0 0.0
        %1616 = vmatprep.subr.mxu0 0.0
        %1617 = vmatpush1.msra.mxu0 0.0
        %1618 = vmatprep.subr.mxu0 %v369
        %1619 = vmatpush1.msra.mxu0 %v368
        %1620 = vmatprep.subr.mxu0 %v365
        %1621 = vmatpush1.msra.mxu0 %v364
        %1622 = vmatprep.subr.mxu0 %v361
        %1623 = vmatpush1.msra.mxu0 %v360
        %1624 = vmatprep.subr.mxu0 %v357
        %1625 = vmatpush1.msra.mxu0 %v356
        %1626 = vmatprep.subr.mxu0 0.0
        %1627 = vmatpush2.msra.mxu0 0.0
        %1628 = vmatprep.subr.mxu0 0.0
        %1629 = vmatpush2.msra.mxu0 0.0
        %1630 = vmatprep.subr.mxu0 0.0
        %1631 = vmatpush2.msra.mxu0 0.0
        %1632 = vmatprep.subr.mxu0 0.0
        %1633 = vmatpush2.msra.mxu0 0.0
        %1634 = vmatprep.subr.mxu0 0.0
        %1635 = vmatpush2.msra.mxu0 0.0
        %1636 = vmatprep.subr.mxu0 0.0
        %1637 = vmatpush2.msra.mxu0 0.0
        %1638 = vmatprep.subr.mxu0 0.0
        %1639 = vmatpush2.msra.mxu0 0.0
        %1640 = vmatprep.subr.mxu0 0.0
        %1641 = vmatpush2.msra.mxu0 0.0
        %1642 = vmatprep.subr.mxu0 0.0
        %1643 = vmatpush2.msra.mxu0 0.0
        %1644 = vmatprep.subr.mxu0 0.0
        %1645 = vmatpush2.msra.mxu0 0.0
        %1646 = vmatprep.subr.mxu0 0.0
        %1647 = vmatpush2.msra.mxu0 0.0
        %1648 = vmatprep.subr.mxu0 0.0
        %1649 = vmatpush2.msra.mxu0 0.0
        %1650 = vmatprep.subr.mxu0 0.0
        %1651 = vmatpush2.msra.mxu0 0.0
        %1652 = vmatprep.subr.mxu0 0.0
        %1653 = vmatpush2.msra.mxu0 0.0
        %1654 = vmatprep.subr.mxu0 0.0
        %1655 = vmatpush2.msra.mxu0 0.0
        %1656 = vmatprep.subr.mxu0 0.0
        %1657 = vmatpush2.msra.mxu0 0.0
        %1658 = vmatprep.mubr.f32.mxu0 0.0
        %1659 = vmatmul.mubr.f32.gmra.mxu0 %v1571
        %v1660 = vpop.f32.mrf.mxu0
        %v1661 = vadd.f32 0.0, %v1660
        %v1662 = vpop.f32.mrf.mxu0
        %v1663 = vadd.f32 0.0, %v1662
        %1664 = vmatprep.mubr.f32.mxu0 0.0
        %1665 = vmatmul.mubr.f32.gmra.mxu0 %v1574
        %v1666 = vpop.f32.mrf.mxu0
        %v1667 = vadd.f32 0.0, %v1666
        %v1668 = vpop.f32.mrf.mxu0
        %v1669 = vadd.f32 0.0, %v1668
        %1670 = vmatprep.mubr.f32.mxu0 0.0
        %1671 = vmatmul.mubr.f32.gmra.mxu0 %v1577
        %v1672 = vpop.f32.mrf.mxu0
        %v1673 = vadd.f32 0.0, %v1672
        %v1674 = vpop.f32.mrf.mxu0
        %v1675 = vadd.f32 0.0, %v1674
        %1676 = vmatprep.mubr.f32.mxu0 0.0
        %1677 = vmatmul.mubr.f32.gmra.mxu0 %v1580
        %v1678 = vpop.f32.mrf.mxu0
        %v1679 = vadd.f32 0.0, %v1678
        %v1680 = vpop.f32.mrf.mxu0
        %v1681 = vadd.f32 0.0, %v1680
        %1682 = vmatprep.mubr.f32.mxu0 0.0
        %1683 = vmatmul.mubr.f32.gmra.mxu0 %v1583
        %v1684 = vpop.f32.mrf.mxu0
        %v1685 = vadd.f32 0.0, %v1684
        %v1686 = vpop.f32.mrf.mxu0
        %v1687 = vadd.f32 0.0, %v1686
        %1688 = vmatprep.mubr.f32.mxu0 0.0
        %1689 = vmatmul.mubr.f32.gmra.mxu0 %v1586
        %v1690 = vpop.f32.mrf.mxu0
        %v1691 = vadd.f32 0.0, %v1690
        %v1692 = vpop.f32.mrf.mxu0
        %v1693 = vadd.f32 0.0, %v1692
        %1694 = vmatprep.mubr.f32.mxu0 0.0
        %1695 = vmatmul.mubr.f32.gmra.mxu0 %v1589
        %v1696 = vpop.f32.mrf.mxu0
        %v1697 = vadd.f32 0.0, %v1696
        %v1698 = vpop.f32.mrf.mxu0
        %v1699 = vadd.f32 0.0, %v1698
        %1700 = vmatprep.mubr.f32.mxu0 0.0
        %1701 = vmatmul.mubr.f32.gmra.mxu0 %v1592
        %v1702 = vpop.f32.mrf.mxu0
        %v1703 = vadd.f32 0.0, %v1702
        %v1704 = vpop.f32.mrf.mxu0
        %v1705 = vadd.f32 0.0, %v1704
        %1706 = vdwg.mxu0
        %1707 = vmatprep.subr.mxu0 0.0
        %1708 = vmatpush1.msra.mxu0 0.0
        %1709 = vmatprep.subr.mxu0 0.0
        %1710 = vmatpush1.msra.mxu0 0.0
        %1711 = vmatprep.subr.mxu0 0.0
        %1712 = vmatpush1.msra.mxu0 0.0
        %1713 = vmatprep.subr.mxu0 0.0
        %1714 = vmatpush1.msra.mxu0 0.0
        %1715 = vmatprep.subr.mxu0 0.0
        %1716 = vmatpush1.msra.mxu0 0.0
        %1717 = vmatprep.subr.mxu0 0.0
        %1718 = vmatpush1.msra.mxu0 0.0
        %1719 = vmatprep.subr.mxu0 0.0
        %1720 = vmatpush1.msra.mxu0 0.0
        %1721 = vmatprep.subr.mxu0 0.0
        %1722 = vmatpush1.msra.mxu0 0.0
        %1723 = vmatprep.subr.mxu0 0.0
        %1724 = vmatpush1.msra.mxu0 0.0
        %1725 = vmatprep.subr.mxu0 0.0
        %1726 = vmatpush1.msra.mxu0 0.0
        %1727 = vmatprep.subr.mxu0 0.0
        %1728 = vmatpush1.msra.mxu0 0.0
        %1729 = vmatprep.subr.mxu0 0.0
        %1730 = vmatpush1.msra.mxu0 0.0
        %1731 = vmatprep.subr.mxu0 %v371
        %1732 = vmatpush1.msra.mxu0 %v370
        %1733 = vmatprep.subr.mxu0 %v367
        %1734 = vmatpush1.msra.mxu0 %v366
        %1735 = vmatprep.subr.mxu0 %v363
        %1736 = vmatpush1.msra.mxu0 %v362
        %1737 = vmatprep.subr.mxu0 %v359
        %1738 = vmatpush1.msra.mxu0 %v358
        %1739 = vmatprep.subr.mxu0 0.0
        %1740 = vmatpush2.msra.mxu0 0.0
        %1741 = vmatprep.subr.mxu0 0.0
        %1742 = vmatpush2.msra.mxu0 0.0
        %1743 = vmatprep.subr.mxu0 0.0
        %1744 = vmatpush2.msra.mxu0 0.0
        %1745 = vmatprep.subr.mxu0 0.0
        %1746 = vmatpush2.msra.mxu0 0.0
        %1747 = vmatprep.subr.mxu0 0.0
        %1748 = vmatpush2.msra.mxu0 0.0
        %1749 = vmatprep.subr.mxu0 0.0
        %1750 = vmatpush2.msra.mxu0 0.0
        %1751 = vmatprep.subr.mxu0 0.0
        %1752 = vmatpush2.msra.mxu0 0.0
        %1753 = vmatprep.subr.mxu0 0.0
        %1754 = vmatpush2.msra.mxu0 0.0
        %1755 = vmatprep.subr.mxu0 0.0
        %1756 = vmatpush2.msra.mxu0 0.0
        %1757 = vmatprep.subr.mxu0 0.0
        %1758 = vmatpush2.msra.mxu0 0.0
        %1759 = vmatprep.subr.mxu0 0.0
        %1760 = vmatpush2.msra.mxu0 0.0
        %1761 = vmatprep.subr.mxu0 0.0
        %1762 = vmatpush2.msra.mxu0 0.0
        %1763 = vmatprep.subr.mxu0 0.0
        %1764 = vmatpush2.msra.mxu0 0.0
        %1765 = vmatprep.subr.mxu0 0.0
        %1766 = vmatpush2.msra.mxu0 0.0
        %1767 = vmatprep.subr.mxu0 0.0
        %1768 = vmatpush2.msra.mxu0 0.0
        %1769 = vmatprep.subr.mxu0 0.0
        %1770 = vmatpush2.msra.mxu0 0.0
        %1771 = vmatprep.mubr.f32.mxu0 0.0
        %1772 = vmatmul.mubr.f32.gmra.mxu0 %v1571
        %v1773 = vpop.f32.mrf.mxu0
        %v1774 = vadd.f32 0.0, %v1773
        %v1775 = vpop.f32.mrf.mxu0
        %v1776 = vadd.f32 0.0, %v1775
        %1777 = vmatprep.mubr.f32.mxu0 0.0
        %1778 = vmatmul.mubr.f32.gmra.mxu0 %v1574
        %v1779 = vpop.f32.mrf.mxu0
        %v1780 = vadd.f32 0.0, %v1779
        %v1781 = vpop.f32.mrf.mxu0
        %v1782 = vadd.f32 0.0, %v1781
        %1783 = vmatprep.mubr.f32.mxu0 0.0
        %1784 = vmatmul.mubr.f32.gmra.mxu0 %v1577
        %v1785 = vpop.f32.mrf.mxu0
        %v1786 = vadd.f32 0.0, %v1785
        %v1787 = vpop.f32.mrf.mxu0
        %v1788 = vadd.f32 0.0, %v1787
        %1789 = vmatprep.mubr.f32.mxu0 0.0
        %1790 = vmatmul.mubr.f32.gmra.mxu0 %v1580
        %v1791 = vpop.f32.mrf.mxu0
        %v1792 = vadd.f32 0.0, %v1791
        %v1793 = vpop.f32.mrf.mxu0
        %v1794 = vadd.f32 0.0, %v1793
        %1795 = vmatprep.mubr.f32.mxu0 0.0
        %1796 = vmatmul.mubr.f32.gmra.mxu0 %v1583
        %v1797 = vpop.f32.mrf.mxu0
        %v1798 = vadd.f32 0.0, %v1797
        %v1799 = vpop.f32.mrf.mxu0
        %v1800 = vadd.f32 0.0, %v1799
        %1801 = vmatprep.mubr.f32.mxu0 0.0
        %1802 = vmatmul.mubr.f32.gmra.mxu0 %v1586
        %v1803 = vpop.f32.mrf.mxu0
        %v1804 = vadd.f32 0.0, %v1803
        %v1805 = vpop.f32.mrf.mxu0
        %v1806 = vadd.f32 0.0, %v1805
        %1807 = vmatprep.mubr.f32.mxu0 0.0
        %1808 = vmatmul.mubr.f32.gmra.mxu0 %v1589
        %v1809 = vpop.f32.mrf.mxu0
        %v1810 = vadd.f32 0.0, %v1809
        %v1811 = vpop.f32.mrf.mxu0
        %v1812 = vadd.f32 0.0, %v1811
        %1813 = vmatprep.mubr.f32.mxu0 0.0
        %1814 = vmatmul.mubr.f32.gmra.mxu0 %v1592
        %v1815 = vpop.f32.mrf.mxu0
        %v1816 = vadd.f32 0.0, %v1815
        %v1817 = vpop.f32.mrf.mxu0
        %v1818 = vadd.f32 0.0, %v1817
        %1819 = vdwg.mxu0
        %v1821 = vsel %vm428, %v1554, 0
        %v1824 = vsel %vm428, %v1555, 0
        %v1827 = vsel %vm428, %v1556, 0
        %v1830 = vsel %vm428, %v1557, 0
        %v1833 = vsel %vm428, %v1558, 0
        %v1836 = vsel %vm428, %v1559, 0
        %v1839 = vsel %vm428, %v1560, 0
        %v1842 = vsel %vm428, %v1561, 0
        %1844 = vmatprep.subr.mxu0 0.0
        %1845 = vmatpush1.msra.mxu0 0.0
        %1846 = vmatprep.subr.mxu0 0.0
        %1847 = vmatpush1.msra.mxu0 0.0
        %1848 = vmatprep.subr.mxu0 0.0
        %1849 = vmatpush1.msra.mxu0 0.0
        %1850 = vmatprep.subr.mxu0 0.0
        %1851 = vmatpush1.msra.mxu0 0.0
        %1852 = vmatprep.subr.mxu0 0.0
        %1853 = vmatpush1.msra.mxu0 0.0
        %1854 = vmatprep.subr.mxu0 0.0
        %1855 = vmatpush1.msra.mxu0 0.0
        %1856 = vmatprep.subr.mxu0 0.0
        %1857 = vmatpush1.msra.mxu0 0.0
        %1858 = vmatprep.subr.mxu0 0.0
        %1859 = vmatpush1.msra.mxu0 0.0
        %1860 = vmatprep.subr.mxu0 0.0
        %1861 = vmatpush1.msra.mxu0 0.0
        %1862 = vmatprep.subr.mxu0 0.0
        %1863 = vmatpush1.msra.mxu0 0.0
        %1864 = vmatprep.subr.mxu0 0.0
        %1865 = vmatpush1.msra.mxu0 0.0
        %1866 = vmatprep.subr.mxu0 0.0
        %1867 = vmatpush1.msra.mxu0 0.0
        %1868 = vmatprep.subr.mxu0 %v1551
        %1869 = vmatpush1.msra.mxu0 %v1550
        %1870 = vmatprep.subr.mxu0 %v1547
        %1871 = vmatpush1.msra.mxu0 %v1546
        %1872 = vmatprep.subr.mxu0 %v1543
        %1873 = vmatpush1.msra.mxu0 %v1542
        %1874 = vmatprep.subr.mxu0 %v1539
        %1875 = vmatpush1.msra.mxu0 %v1538
        %1876 = vmatprep.subr.mxu0 0.0
        %1877 = vmatpush2.msra.mxu0 0.0
        %1878 = vmatprep.subr.mxu0 0.0
        %1879 = vmatpush2.msra.mxu0 0.0
        %1880 = vmatprep.subr.mxu0 0.0
        %1881 = vmatpush2.msra.mxu0 0.0
        %1882 = vmatprep.subr.mxu0 0.0
        %1883 = vmatpush2.msra.mxu0 0.0
        %1884 = vmatprep.subr.mxu0 0.0
        %1885 = vmatpush2.msra.mxu0 0.0
        %1886 = vmatprep.subr.mxu0 0.0
        %1887 = vmatpush2.msra.mxu0 0.0
        %1888 = vmatprep.subr.mxu0 0.0
        %1889 = vmatpush2.msra.mxu0 0.0
        %1890 = vmatprep.subr.mxu0 0.0
        %1891 = vmatpush2.msra.mxu0 0.0
        %1892 = vmatprep.subr.mxu0 0.0
        %1893 = vmatpush2.msra.mxu0 0.0
        %1894 = vmatprep.subr.mxu0 0.0
        %1895 = vmatpush2.msra.mxu0 0.0
        %1896 = vmatprep.subr.mxu0 0.0
        %1897 = vmatpush2.msra.mxu0 0.0
        %1898 = vmatprep.subr.mxu0 0.0
        %1899 = vmatpush2.msra.mxu0 0.0
        %1900 = vmatprep.subr.mxu0 0.0
        %1901 = vmatpush2.msra.mxu0 0.0
        %1902 = vmatprep.subr.mxu0 0.0
        %1903 = vmatpush2.msra.mxu0 0.0
        %1904 = vmatprep.subr.mxu0 0.0
        %1905 = vmatpush2.msra.mxu0 0.0
        %1906 = vmatprep.subr.mxu0 0.0
        %1907 = vmatpush2.msra.mxu0 0.0
        %1908 = vmatprep.mubr.f32.mxu0 0.0
        %1909 = vmatmul.mubr.f32.gmra.mxu0 %v1821
        %v1910 = vpop.f32.mrf.mxu0
        %v1911 = vadd.f32 %v1661, %v1910
        %v1912 = vpop.f32.mrf.mxu0
        %v1913 = vadd.f32 %v1663, %v1912
        %1914 = vmatprep.mubr.f32.mxu0 0.0
        %1915 = vmatmul.mubr.f32.gmra.mxu0 %v1824
        %v1916 = vpop.f32.mrf.mxu0
        %v1917 = vadd.f32 %v1667, %v1916
        %v1918 = vpop.f32.mrf.mxu0
        %v1919 = vadd.f32 %v1669, %v1918
        %1920 = vmatprep.mubr.f32.mxu0 0.0
        %1921 = vmatmul.mubr.f32.gmra.mxu0 %v1827
        %v1922 = vpop.f32.mrf.mxu0
        %v1923 = vadd.f32 %v1673, %v1922
        %v1924 = vpop.f32.mrf.mxu0
        %v1925 = vadd.f32 %v1675, %v1924
        %1926 = vmatprep.mubr.f32.mxu0 0.0
        %1927 = vmatmul.mubr.f32.gmra.mxu0 %v1830
        %v1928 = vpop.f32.mrf.mxu0
        %v1929 = vadd.f32 %v1679, %v1928
        %v1930 = vpop.f32.mrf.mxu0
        %v1931 = vadd.f32 %v1681, %v1930
        %1932 = vmatprep.mubr.f32.mxu0 0.0
        %1933 = vmatmul.mubr.f32.gmra.mxu0 %v1833
        %v1934 = vpop.f32.mrf.mxu0
        %v1935 = vadd.f32 %v1685, %v1934
        %v1936 = vpop.f32.mrf.mxu0
        %v1937 = vadd.f32 %v1687, %v1936
        %1938 = vmatprep.mubr.f32.mxu0 0.0
        %1939 = vmatmul.mubr.f32.gmra.mxu0 %v1836
        %v1940 = vpop.f32.mrf.mxu0
        %v1941 = vadd.f32 %v1691, %v1940
        %v1942 = vpop.f32.mrf.mxu0
        %v1943 = vadd.f32 %v1693, %v1942
        %1944 = vmatprep.mubr.f32.mxu0 0.0
        %1945 = vmatmul.mubr.f32.gmra.mxu0 %v1839
        %v1946 = vpop.f32.mrf.mxu0
        %v1947 = vadd.f32 %v1697, %v1946
        %v1948 = vpop.f32.mrf.mxu0
        %v1949 = vadd.f32 %v1699, %v1948
        %1950 = vmatprep.mubr.f32.mxu0 0.0
        %1951 = vmatmul.mubr.f32.gmra.mxu0 %v1842
        %v1952 = vpop.f32.mrf.mxu0
        %v1953 = vadd.f32 %v1703, %v1952
        %v1954 = vpop.f32.mrf.mxu0
        %v1955 = vadd.f32 %v1705, %v1954
        %1956 = vdwg.mxu0
        %1957 = vmatprep.subr.mxu0 0.0
        %1958 = vmatpush1.msra.mxu0 0.0
        %1959 = vmatprep.subr.mxu0 0.0
        %1960 = vmatpush1.msra.mxu0 0.0
        %1961 = vmatprep.subr.mxu0 0.0
        %1962 = vmatpush1.msra.mxu0 0.0
        %1963 = vmatprep.subr.mxu0 0.0
        %1964 = vmatpush1.msra.mxu0 0.0
        %1965 = vmatprep.subr.mxu0 0.0
        %1966 = vmatpush1.msra.mxu0 0.0
        %1967 = vmatprep.subr.mxu0 0.0
        %1968 = vmatpush1.msra.mxu0 0.0
        %1969 = vmatprep.subr.mxu0 0.0
        %1970 = vmatpush1.msra.mxu0 0.0
        %1971 = vmatprep.subr.mxu0 0.0
        %1972 = vmatpush1.msra.mxu0 0.0
        %1973 = vmatprep.subr.mxu0 0.0
        %1974 = vmatpush1.msra.mxu0 0.0
        %1975 = vmatprep.subr.mxu0 0.0
        %1976 = vmatpush1.msra.mxu0 0.0
        %1977 = vmatprep.subr.mxu0 0.0
        %1978 = vmatpush1.msra.mxu0 0.0
        %1979 = vmatprep.subr.mxu0 0.0
        %1980 = vmatpush1.msra.mxu0 0.0
        %1981 = vmatprep.subr.mxu0 %v1553
        %1982 = vmatpush1.msra.mxu0 %v1552
        %1983 = vmatprep.subr.mxu0 %v1549
        %1984 = vmatpush1.msra.mxu0 %v1548
        %1985 = vmatprep.subr.mxu0 %v1545
        %1986 = vmatpush1.msra.mxu0 %v1544
        %1987 = vmatprep.subr.mxu0 %v1541
        %1988 = vmatpush1.msra.mxu0 %v1540
        %1989 = vmatprep.subr.mxu0 0.0
        %1990 = vmatpush2.msra.mxu0 0.0
        %1991 = vmatprep.subr.mxu0 0.0
        %1992 = vmatpush2.msra.mxu0 0.0
        %1993 = vmatprep.subr.mxu0 0.0
        %1994 = vmatpush2.msra.mxu0 0.0
        %1995 = vmatprep.subr.mxu0 0.0
        %1996 = vmatpush2.msra.mxu0 0.0
        %1997 = vmatprep.subr.mxu0 0.0
        %1998 = vmatpush2.msra.mxu0 0.0
        %1999 = vmatprep.subr.mxu0 0.0
        %2000 = vmatpush2.msra.mxu0 0.0
        %2001 = vmatprep.subr.mxu0 0.0
        %2002 = vmatpush2.msra.mxu0 0.0
        %2003 = vmatprep.subr.mxu0 0.0
        %2004 = vmatpush2.msra.mxu0 0.0
        %2005 = vmatprep.subr.mxu0 0.0
        %2006 = vmatpush2.msra.mxu0 0.0
        %2007 = vmatprep.subr.mxu0 0.0
        %2008 = vmatpush2.msra.mxu0 0.0
        %2009 = vmatprep.subr.mxu0 0.0
        %2010 = vmatpush2.msra.mxu0 0.0
        %2011 = vmatprep.subr.mxu0 0.0
        %2012 = vmatpush2.msra.mxu0 0.0
        %2013 = vmatprep.subr.mxu0 0.0
        %2014 = vmatpush2.msra.mxu0 0.0
        %2015 = vmatprep.subr.mxu0 0.0
        %2016 = vmatpush2.msra.mxu0 0.0
        %2017 = vmatprep.subr.mxu0 0.0
        %2018 = vmatpush2.msra.mxu0 0.0
        %2019 = vmatprep.subr.mxu0 0.0
        %2020 = vmatpush2.msra.mxu0 0.0
        %2021 = vmatprep.mubr.f32.mxu0 0.0
        %2022 = vmatmul.mubr.f32.gmra.mxu0 %v1821
        %v2023 = vpop.f32.mrf.mxu0
        %v2024 = vadd.f32 %v1774, %v2023
        %v2025 = vpop.f32.mrf.mxu0
        %v2026 = vadd.f32 %v1776, %v2025
        %2027 = vmatprep.mubr.f32.mxu0 0.0
        %2028 = vmatmul.mubr.f32.gmra.mxu0 %v1824
        %v2029 = vpop.f32.mrf.mxu0
        %v2030 = vadd.f32 %v1780, %v2029
        %v2031 = vpop.f32.mrf.mxu0
        %v2032 = vadd.f32 %v1782, %v2031
        %2033 = vmatprep.mubr.f32.mxu0 0.0
        %2034 = vmatmul.mubr.f32.gmra.mxu0 %v1827
        %v2035 = vpop.f32.mrf.mxu0
        %v2036 = vadd.f32 %v1786, %v2035
        %v2037 = vpop.f32.mrf.mxu0
        %v2038 = vadd.f32 %v1788, %v2037
        %2039 = vmatprep.mubr.f32.mxu0 0.0
        %2040 = vmatmul.mubr.f32.gmra.mxu0 %v1830
        %v2041 = vpop.f32.mrf.mxu0
        %v2042 = vadd.f32 %v1792, %v2041
        %v2043 = vpop.f32.mrf.mxu0
        %v2044 = vadd.f32 %v1794, %v2043
        %2045 = vmatprep.mubr.f32.mxu0 0.0
        %2046 = vmatmul.mubr.f32.gmra.mxu0 %v1833
        %v2047 = vpop.f32.mrf.mxu0
        %v2048 = vadd.f32 %v1798, %v2047
        %v2049 = vpop.f32.mrf.mxu0
        %v2050 = vadd.f32 %v1800, %v2049
        %2051 = vmatprep.mubr.f32.mxu0 0.0
        %2052 = vmatmul.mubr.f32.gmra.mxu0 %v1836
        %v2053 = vpop.f32.mrf.mxu0
        %v2054 = vadd.f32 %v1804, %v2053
        %v2055 = vpop.f32.mrf.mxu0
        %v2056 = vadd.f32 %v1806, %v2055
        %2057 = vmatprep.mubr.f32.mxu0 0.0
        %2058 = vmatmul.mubr.f32.gmra.mxu0 %v1839
        %v2059 = vpop.f32.mrf.mxu0
        %v2060 = vadd.f32 %v1810, %v2059
        %v2061 = vpop.f32.mrf.mxu0
        %v2062 = vadd.f32 %v1812, %v2061
        %2063 = vmatprep.mubr.f32.mxu0 0.0
        %2064 = vmatmul.mubr.f32.gmra.mxu0 %v1842
        %v2065 = vpop.f32.mrf.mxu0
        %v2066 = vadd.f32 %v1816, %v2065
        %v2067 = vpop.f32.mrf.mxu0
        %v2068 = vadd.f32 %v1818, %v2067
        %2069 = vdwg.mxu0
        %v2070 = vld [vmem:[%s7 + $0x180] sm:$0xff]
        %v2071 = vld [vmem:[%s7 + $0x188] sm:$0xff]
        %v2072 = vld [vmem:[%s7 + $0x190] sm:$0xff]
        %v2073 = vld [vmem:[%s7 + $0x198] sm:$0xff]
        %v2074 = vld [vmem:[%s7 + $0x1a0] sm:$0xff]
        %v2075 = vld [vmem:[%s7 + $0x1a8] sm:$0xff]
        %v2076 = vld [vmem:[%s7 + $0x1b0] sm:$0xff]
        %v2077 = vld [vmem:[%s7 + $0x1b8] sm:$0xff]
        %2079 = vset.pattern.permute.xlu0 0
        %2080 = vperm.xlu0 %2079, %v2070
        %v2081 = vpop.permute.xlu0 %2080
        %2084 = vset.pattern.permute.xlu0 0
        %2085 = vperm.xlu0 %2084, %v2071
        %v2086 = vpop.permute.xlu0 %2085
        %2089 = vset.pattern.permute.xlu0 0
        %2090 = vperm.xlu0 %2089, %v2072
        %v2091 = vpop.permute.xlu0 %2090
        %2094 = vset.pattern.permute.xlu0 0
        %2095 = vperm.xlu0 %2094, %v2073
        %v2096 = vpop.permute.xlu0 %2095
        %2099 = vset.pattern.permute.xlu0 0
        %2100 = vperm.xlu0 %2099, %v2074
        %v2101 = vpop.permute.xlu0 %2100
        %2104 = vset.pattern.permute.xlu0 0
        %2105 = vperm.xlu0 %2104, %v2075
        %v2106 = vpop.permute.xlu0 %2105
        %2109 = vset.pattern.permute.xlu0 0
        %2110 = vperm.xlu0 %2109, %v2076
        %v2111 = vpop.permute.xlu0 %2110
        %2114 = vset.pattern.permute.xlu0 0
        %2115 = vperm.xlu0 %2114, %v2077
        %v2116 = vpop.permute.xlu0 %2115
        %v2118 = vadd.f32 %v1911, %v2081
        %v2119 = vadd.f32 %v1913, %v2081
        %v2120 = vadd.f32 %v2024, %v2081
        %v2121 = vadd.f32 %v2026, %v2081
        %v2122 = vadd.f32 %v1917, %v2086
        %v2123 = vadd.f32 %v1919, %v2086
        %v2124 = vadd.f32 %v2030, %v2086
        %v2125 = vadd.f32 %v2032, %v2086
        %v2126 = vadd.f32 %v1923, %v2091
        %v2127 = vadd.f32 %v1925, %v2091
        %v2128 = vadd.f32 %v2036, %v2091
        %v2129 = vadd.f32 %v2038, %v2091
        %v2130 = vadd.f32 %v1929, %v2096
        %v2131 = vadd.f32 %v1931, %v2096
        %v2132 = vadd.f32 %v2042, %v2096
        %v2133 = vadd.f32 %v2044, %v2096
        %v2134 = vadd.f32 %v1935, %v2101
        %v2135 = vadd.f32 %v1937, %v2101
        %v2136 = vadd.f32 %v2048, %v2101
        %v2137 = vadd.f32 %v2050, %v2101
        %v2138 = vadd.f32 %v1941, %v2106
        %v2139 = vadd.f32 %v1943, %v2106
        %v2140 = vadd.f32 %v2054, %v2106
        %v2141 = vadd.f32 %v2056, %v2106
        %v2142 = vadd.f32 %v1947, %v2111
        %v2143 = vadd.f32 %v1949, %v2111
        %v2144 = vadd.f32 %v2060, %v2111
        %v2145 = vadd.f32 %v2062, %v2111
        %v2146 = vadd.f32 %v1953, %v2116
        %v2147 = vadd.f32 %v1955, %v2116
        %v2148 = vadd.f32 %v2066, %v2116
        %v2149 = vadd.f32 %v2068, %v2116
        %v2150 = vadd.f32 %v2118, %v2122
        %v2151 = vadd.f32 %v2150, %v2126
        %v2152 = vadd.f32 %v2151, %v2130
        %v2153 = vadd.f32 %v2152, %v2134
        %v2154 = vadd.f32 %v2153, %v2138
        %v2155 = vadd.f32 %v2154, %v2142
        %v2156 = vadd.f32 %v2155, %v2146
        %v2157 = vrot.slane %v2156, 4
        %v2158 = vadd.f32 %v2156, %v2157
        %v2159 = vrot.slane %v2158, 2
        %v2160 = vadd.f32 %v2158, %v2159
        %v2161 = vrot.slane %v2160, 1
        %v2162 = vadd.f32 %v2160, %v2161
        %v2163 = vadd.f32 %v2119, %v2123
        %v2164 = vadd.f32 %v2163, %v2127
        %v2165 = vadd.f32 %v2164, %v2131
        %v2166 = vadd.f32 %v2165, %v2135
        %v2167 = vadd.f32 %v2166, %v2139
        %v2168 = vadd.f32 %v2167, %v2143
        %v2169 = vadd.f32 %v2168, %v2147
        %v2170 = vrot.slane %v2169, 4
        %v2171 = vadd.f32 %v2169, %v2170
        %v2172 = vrot.slane %v2171, 2
        %v2173 = vadd.f32 %v2171, %v2172
        %v2174 = vrot.slane %v2173, 1
        %v2175 = vadd.f32 %v2173, %v2174
        %v2176 = vadd.f32 %v2120, %v2124
        %v2177 = vadd.f32 %v2176, %v2128
        %v2178 = vadd.f32 %v2177, %v2132
        %v2179 = vadd.f32 %v2178, %v2136
        %v2180 = vadd.f32 %v2179, %v2140
        %v2181 = vadd.f32 %v2180, %v2144
        %v2182 = vadd.f32 %v2181, %v2148
        %v2183 = vrot.slane %v2182, 4
        %v2184 = vadd.f32 %v2182, %v2183
        %v2185 = vrot.slane %v2184, 2
        %v2186 = vadd.f32 %v2184, %v2185
        %v2187 = vrot.slane %v2186, 1
        %v2188 = vadd.f32 %v2186, %v2187
        %v2189 = vadd.f32 %v2121, %v2125
        %v2190 = vadd.f32 %v2189, %v2129
        %v2191 = vadd.f32 %v2190, %v2133
        %v2192 = vadd.f32 %v2191, %v2137
        %v2193 = vadd.f32 %v2192, %v2141
        %v2194 = vadd.f32 %v2193, %v2145
        %v2195 = vadd.f32 %v2194, %v2149
        %v2196 = vrot.slane %v2195, 4
        %v2197 = vadd.f32 %v2195, %v2196
        %v2198 = vrot.slane %v2197, 2
        %v2199 = vadd.f32 %v2197, %v2198
        %v2200 = vrot.slane %v2199, 1
        %v2201 = vadd.f32 %v2199, %v2200
        %v2202 = vmul.f32 %v2162, 0.015625
        %v2203 = vmul.f32 %v2175, 0.015625
        %v2204 = vmul.f32 %v2188, 0.015625
        %v2205 = vmul.f32 %v2201, 0.015625
        %v2206 = vmul.f32 %v2118, %v2118
        %v2207 = vmul.f32 %v2119, %v2119
        %v2208 = vmul.f32 %v2120, %v2120
        %v2209 = vmul.f32 %v2121, %v2121
        %v2210 = vmul.f32 %v2122, %v2122
        %v2211 = vmul.f32 %v2123, %v2123
        %v2212 = vmul.f32 %v2124, %v2124
        %v2213 = vmul.f32 %v2125, %v2125
        %v2214 = vmul.f32 %v2126, %v2126
        %v2215 = vmul.f32 %v2127, %v2127
        %v2216 = vmul.f32 %v2128, %v2128
        %v2217 = vmul.f32 %v2129, %v2129
        %v2218 = vmul.f32 %v2130, %v2130
        %v2219 = vmul.f32 %v2131, %v2131
        %v2220 = vmul.f32 %v2132, %v2132
        %v2221 = vmul.f32 %v2133, %v2133
        %v2222 = vmul.f32 %v2134, %v2134
        %v2223 = vmul.f32 %v2135, %v2135
        %v2224 = vmul.f32 %v2136, %v2136
        %v2225 = vmul.f32 %v2137, %v2137
        %v2226 = vmul.f32 %v2138, %v2138
        %v2227 = vmul.f32 %v2139, %v2139
        %v2228 = vmul.f32 %v2140, %v2140
        %v2229 = vmul.f32 %v2141, %v2141
        %v2230 = vmul.f32 %v2142, %v2142
        %v2231 = vmul.f32 %v2143, %v2143
        %v2232 = vmul.f32 %v2144, %v2144
        %v2233 = vmul.f32 %v2145, %v2145
        %v2234 = vmul.f32 %v2146, %v2146
        %v2235 = vmul.f32 %v2147, %v2147
        %v2236 = vmul.f32 %v2148, %v2148
        %v2237 = vmul.f32 %v2149, %v2149
        %v2238 = vadd.f32 %v2206, %v2210
        %v2239 = vadd.f32 %v2238, %v2214
        %v2240 = vadd.f32 %v2239, %v2218
        %v2241 = vadd.f32 %v2240, %v2222
        %v2242 = vadd.f32 %v2241, %v2226
        %v2243 = vadd.f32 %v2242, %v2230
        %v2244 = vadd.f32 %v2243, %v2234
        %v2245 = vrot.slane %v2244, 4
        %v2246 = vadd.f32 %v2244, %v2245
        %v2247 = vrot.slane %v2246, 2
        %v2248 = vadd.f32 %v2246, %v2247
        %v2249 = vrot.slane %v2248, 1
        %v2250 = vadd.f32 %v2248, %v2249
        %v2251 = vadd.f32 %v2207, %v2211
        %v2252 = vadd.f32 %v2251, %v2215
        %v2253 = vadd.f32 %v2252, %v2219
        %v2254 = vadd.f32 %v2253, %v2223
        %v2255 = vadd.f32 %v2254, %v2227
        %v2256 = vadd.f32 %v2255, %v2231
        %v2257 = vadd.f32 %v2256, %v2235
        %v2258 = vrot.slane %v2257, 4
        %v2259 = vadd.f32 %v2257, %v2258
        %v2260 = vrot.slane %v2259, 2
        %v2261 = vadd.f32 %v2259, %v2260
        %v2262 = vrot.slane %v2261, 1
        %v2263 = vadd.f32 %v2261, %v2262
        %v2264 = vadd.f32 %v2208, %v2212
        %v2265 = vadd.f32 %v2264, %v2216
        %v2266 = vadd.f32 %v2265, %v2220
        %v2267 = vadd.f32 %v2266, %v2224
        %v2268 = vadd.f32 %v2267, %v2228
        %v2269 = vadd.f32 %v2268, %v2232
        %v2270 = vadd.f32 %v2269, %v2236
        %v2271 = vrot.slane %v2270, 4
        %v2272 = vadd.f32 %v2270, %v2271
        %v2273 = vrot.slane %v2272, 2
        %v2274 = vadd.f32 %v2272, %v2273
        %v2275 = vrot.slane %v2274, 1
        %v2276 = vadd.f32 %v2274, %v2275
        %v2277 = vadd.f32 %v2209, %v2213
        %v2278 = vadd.f32 %v2277, %v2217
        %v2279 = vadd.f32 %v2278, %v2221
        %v2280 = vadd.f32 %v2279, %v2225
        %v2281 = vadd.f32 %v2280, %v2229
        %v2282 = vadd.f32 %v2281, %v2233
        %v2283 = vadd.f32 %v2282, %v2237
        %v2284 = vrot.slane %v2283, 4
        %v2285 = vadd.f32 %v2283, %v2284
        %v2286 = vrot.slane %v2285, 2
        %v2287 = vadd.f32 %v2285, %v2286
        %v2288 = vrot.slane %v2287, 1
        %v2289 = vadd.f32 %v2287, %v2288
        %v2290 = vmul.f32 %v2250, 0.015625
        %v2291 = vmul.f32 %v2263, 0.015625
        %v2292 = vmul.f32 %v2276, 0.015625
        %v2293 = vmul.f32 %v2289, 0.015625
        %v2294 = vmul.f32 %v2202, %v2202
        %v2295 = vmul.f32 %v2203, %v2203
        %v2296 = vmul.f32 %v2204, %v2204
        %v2297 = vmul.f32 %v2205, %v2205
        %v2298 = vsub.f32 %v2290, %v2294
        %v2299 = vsub.f32 %v2291, %v2295
        %v2300 = vsub.f32 %v2292, %v2296
        %v2301 = vsub.f32 %v2293, %v2297
        %v2302 = vadd.f32 %v2298, 1e-05
        %v2303 = vadd.f32 %v2299, 1e-05
        %v2304 = vadd.f32 %v2300, 1e-05
        %v2305 = vadd.f32 %v2301, 1e-05
        %v2306 = vrsqrt.pop %v2302
        %v2307 = vrsqrt.pop %v2303
        %v2308 = vrsqrt.pop %v2304
        %v2309 = vrsqrt.pop %v2305
        %v2310 = vsub.f32 %v2118, %v2202
        %v2311 = vsub.f32 %v2119, %v2203
        %v2312 = vsub.f32 %v2120, %v2204
        %v2313 = vsub.f32 %v2121, %v2205
        %v2314 = vsub.f32 %v2122, %v2202
        %v2315 = vsub.f32 %v2123, %v2203
        %v2316 = vsub.f32 %v2124, %v2204
        %v2317 = vsub.f32 %v2125, %v2205
        %v2318 = vsub.f32 %v2126, %v2202
        %v2319 = vsub.f32 %v2127, %v2203
        %v2320 = vsub.f32 %v2128, %v2204
        %v2321 = vsub.f32 %v2129, %v2205
        %v2322 = vsub.f32 %v2130, %v2202
        %v2323 = vsub.f32 %v2131, %v2203
        %v2324 = vsub.f32 %v2132, %v2204
        %v2325 = vsub.f32 %v2133, %v2205
        %v2326 = vsub.f32 %v2134, %v2202
        %v2327 = vsub.f32 %v2135, %v2203
        %v2328 = vsub.f32 %v2136, %v2204
        %v2329 = vsub.f32 %v2137, %v2205
        %v2330 = vsub.f32 %v2138, %v2202
        %v2331 = vsub.f32 %v2139, %v2203
        %v2332 = vsub.f32 %v2140, %v2204
        %v2333 = vsub.f32 %v2141, %v2205
        %v2334 = vsub.f32 %v2142, %v2202
        %v2335 = vsub.f32 %v2143, %v2203
        %v2336 = vsub.f32 %v2144, %v2204
        %v2337 = vsub.f32 %v2145, %v2205
        %v2338 = vsub.f32 %v2146, %v2202
        %v2339 = vsub.f32 %v2147, %v2203
        %v2340 = vsub.f32 %v2148, %v2204
        %v2341 = vsub.f32 %v2149, %v2205
        %v2342 = vmul.f32 %v2310, %v2306
        %v2343 = vmul.f32 %v2311, %v2307
        %v2344 = vmul.f32 %v2312, %v2308
        %v2345 = vmul.f32 %v2313, %v2309
        %v2346 = vmul.f32 %v2314, %v2306
        %v2347 = vmul.f32 %v2315, %v2307
        %v2348 = vmul.f32 %v2316, %v2308
        %v2349 = vmul.f32 %v2317, %v2309
        %v2350 = vmul.f32 %v2318, %v2306
        %v2351 = vmul.f32 %v2319, %v2307
        %v2352 = vmul.f32 %v2320, %v2308
        %v2353 = vmul.f32 %v2321, %v2309
        %v2354 = vmul.f32 %v2322, %v2306
        %v2355 = vmul.f32 %v2323, %v2307
        %v2356 = vmul.f32 %v2324, %v2308
        %v2357 = vmul.f32 %v2325, %v2309
        %v2358 = vmul.f32 %v2326, %v2306
        %v2359 = vmul.f32 %v2327, %v2307
        %v2360 = vmul.f32 %v2328, %v2308
        %v2361 = vmul.f32 %v2329, %v2309
        %v2362 = vmul.f32 %v2330, %v2306
        %v2363 = vmul.f32 %v2331, %v2307
        %v2364 = vmul.f32 %v2332, %v2308
        %v2365 = vmul.f32 %v2333, %v2309
        %v2366 = vmul.f32 %v2334, %v2306
        %v2367 = vmul.f32 %v2335, %v2307
        %v2368 = vmul.f32 %v2336, %v2308
        %v2369 = vmul.f32 %v2337, %v2309
        %v2370 = vmul.f32 %v2338, %v2306
        %v2371 = vmul.f32 %v2339, %v2307
        %v2372 = vmul.f32 %v2340, %v2308
        %v2373 = vmul.f32 %v2341, %v2309
        %v2374 = vld [vmem:[%s7 + $0x1c0] sm:$0xff]
        %v2375 = vld [vmem:[%s7 + $0x1c8] sm:$0xff]
        %v2376 = vld [vmem:[%s7 + $0x1d0] sm:$0xff]
        %v2377 = vld [vmem:[%s7 + $0x1d8] sm:$0xff]
        %v2378 = vld [vmem:[%s7 + $0x1e0] sm:$0xff]
        %v2379 = vld [vmem:[%s7 + $0x1e8] sm:$0xff]
        %v2380 = vld [vmem:[%s7 + $0x1f0] sm:$0xff]
        %v2381 = vld [vmem:[%s7 + $0x1f8] sm:$0xff]
        %v2382 = vld [vmem:[%s7 + $0x200] sm:$0xff]
        %v2383 = vld [vmem:[%s7 + $0x208] sm:$0xff]
        %v2384 = vld [vmem:[%s7 + $0x210] sm:$0xff]
        %v2385 = vld [vmem:[%s7 + $0x218] sm:$0xff]
        %v2386 = vld [vmem:[%s7 + $0x220] sm:$0xff]
        %v2387 = vld [vmem:[%s7 + $0x228] sm:$0xff]
        %v2388 = vld [vmem:[%s7 + $0x230] sm:$0xff]
        %v2389 = vld [vmem:[%s7 + $0x238] sm:$0xff]
        %2391 = vset.pattern.permute.xlu0 0
        %2392 = vperm.xlu0 %2391, %v2374
        %v2393 = vpop.permute.xlu0 %2392
        %2396 = vset.pattern.permute.xlu0 0
        %2397 = vperm.xlu0 %2396, %v2375
        %v2398 = vpop.permute.xlu0 %2397
        %2401 = vset.pattern.permute.xlu0 0
        %2402 = vperm.xlu0 %2401, %v2376
        %v2403 = vpop.permute.xlu0 %2402
        %2406 = vset.pattern.permute.xlu0 0
        %2407 = vperm.xlu0 %2406, %v2377
        %v2408 = vpop.permute.xlu0 %2407
        %2411 = vset.pattern.permute.xlu0 0
        %2412 = vperm.xlu0 %2411, %v2378
        %v2413 = vpop.permute.xlu0 %2412
        %2416 = vset.pattern.permute.xlu0 0
        %2417 = vperm.xlu0 %2416, %v2379
        %v2418 = vpop.permute.xlu0 %2417
        %2421 = vset.pattern.permute.xlu0 0
        %2422 = vperm.xlu0 %2421, %v2380
        %v2423 = vpop.permute.xlu0 %2422
        %2426 = vset.pattern.permute.xlu0 0
        %2427 = vperm.xlu0 %2426, %v2381
        %v2428 = vpop.permute.xlu0 %2427
        %v2430 = vmul.f32 %v2342, %v2393
        %v2431 = vmul.f32 %v2343, %v2393
        %v2432 = vmul.f32 %v2344, %v2393
        %v2433 = vmul.f32 %v2345, %v2393
        %v2434 = vmul.f32 %v2346, %v2398
        %v2435 = vmul.f32 %v2347, %v2398
        %v2436 = vmul.f32 %v2348, %v2398
        %v2437 = vmul.f32 %v2349, %v2398
        %v2438 = vmul.f32 %v2350, %v2403
        %v2439 = vmul.f32 %v2351, %v2403
        %v2440 = vmul.f32 %v2352, %v2403
        %v2441 = vmul.f32 %v2353, %v2403
        %v2442 = vmul.f32 %v2354, %v2408
        %v2443 = vmul.f32 %v2355, %v2408
        %v2444 = vmul.f32 %v2356, %v2408
        %v2445 = vmul.f32 %v2357, %v2408
        %v2446 = vmul.f32 %v2358, %v2413
        %v2447 = vmul.f32 %v2359, %v2413
        %v2448 = vmul.f32 %v2360, %v2413
        %v2449 = vmul.f32 %v2361, %v2413
        %v2450 = vmul.f32 %v2362, %v2418
        %v2451 = vmul.f32 %v2363, %v2418
        %v2452 = vmul.f32 %v2364, %v2418
        %v2453 = vmul.f32 %v2365, %v2418
        %v2454 = vmul.f32 %v2366, %v2423
        %v2455 = vmul.f32 %v2367, %v2423
        %v2456 = vmul.f32 %v2368, %v2423
        %v2457 = vmul.f32 %v2369, %v2423
        %v2458 = vmul.f32 %v2370, %v2428
        %v2459 = vmul.f32 %v2371, %v2428
        %v2460 = vmul.f32 %v2372, %v2428
        %v2461 = vmul.f32 %v2373, %v2428
        %2463 = vset.pattern.permute.xlu0 0
        %2464 = vperm.xlu0 %2463, %v2382
        %v2465 = vpop.permute.xlu0 %2464
        %2468 = vset.pattern.permute.xlu0 0
        %2469 = vperm.xlu0 %2468, %v2383
        %v2470 = vpop.permute.xlu0 %2469
        %2473 = vset.pattern.permute.xlu0 0
        %2474 = vperm.xlu0 %2473, %v2384
        %v2475 = vpop.permute.xlu0 %2474
        %2478 = vset.pattern.permute.xlu0 0
        %2479 = vperm.xlu0 %2478, %v2385
        %v2480 = vpop.permute.xlu0 %2479
        %2483 = vset.pattern.permute.xlu0 0
        %2484 = vperm.xlu0 %2483, %v2386
        %v2485 = vpop.permute.xlu0 %2484
        %2488 = vset.pattern.permute.xlu0 0
        %2489 = vperm.xlu0 %2488, %v2387
        %v2490 = vpop.permute.xlu0 %2489
        %2493 = vset.pattern.permute.xlu0 0
        %2494 = vperm.xlu0 %2493, %v2388
        %v2495 = vpop.permute.xlu0 %2494
        %2498 = vset.pattern.permute.xlu0 0
        %2499 = vperm.xlu0 %2498, %v2389
        %v2500 = vpop.permute.xlu0 %2499
        %v2502 = vadd.f32 %v2430, %v2465
        %v2503 = vadd.f32 %v2431, %v2465
        %v2504 = vadd.f32 %v2432, %v2465
        %v2505 = vadd.f32 %v2433, %v2465
        %v2506 = vadd.f32 %v2434, %v2470
        %v2507 = vadd.f32 %v2435, %v2470
        %v2508 = vadd.f32 %v2436, %v2470
        %v2509 = vadd.f32 %v2437, %v2470
        %v2510 = vadd.f32 %v2438, %v2475
        %v2511 = vadd.f32 %v2439, %v2475
        %v2512 = vadd.f32 %v2440, %v2475
        %v2513 = vadd.f32 %v2441, %v2475
        %v2514 = vadd.f32 %v2442, %v2480
        %v2515 = vadd.f32 %v2443, %v2480
        %v2516 = vadd.f32 %v2444, %v2480
        %v2517 = vadd.f32 %v2445, %v2480
        %v2518 = vadd.f32 %v2446, %v2485
        %v2519 = vadd.f32 %v2447, %v2485
        %v2520 = vadd.f32 %v2448, %v2485
        %v2521 = vadd.f32 %v2449, %v2485
        %v2522 = vadd.f32 %v2450, %v2490
        %v2523 = vadd.f32 %v2451, %v2490
        %v2524 = vadd.f32 %v2452, %v2490
        %v2525 = vadd.f32 %v2453, %v2490
        %v2526 = vadd.f32 %v2454, %v2495
        %v2527 = vadd.f32 %v2455, %v2495
        %v2528 = vadd.f32 %v2456, %v2495
        %v2529 = vadd.f32 %v2457, %v2495
        %v2530 = vadd.f32 %v2458, %v2500
        %v2531 = vadd.f32 %v2459, %v2500
        %v2532 = vadd.f32 %v2460, %v2500
        %v2533 = vadd.f32 %v2461, %v2500
        %v2534 = vmax.f32 %v2502, 0.0
        %v2535 = vmax.f32 %v2503, 0.0
        %v2536 = vmax.f32 %v2504, 0.0
        %v2537 = vmax.f32 %v2505, 0.0
        %v2538 = vmax.f32 %v2506, 0.0
        %v2539 = vmax.f32 %v2507, 0.0
        %v2540 = vmax.f32 %v2508, 0.0
        %v2541 = vmax.f32 %v2509, 0.0
        %v2542 = vmax.f32 %v2510, 0.0
        %v2543 = vmax.f32 %v2511, 0.0
        %v2544 = vmax.f32 %v2512, 0.0
        %v2545 = vmax.f32 %v2513, 0.0
        %v2546 = vmax.f32 %v2514, 0.0
        %v2547 = vmax.f32 %v2515, 0.0
        %v2548 = vmax.f32 %v2516, 0.0
        %v2549 = vmax.f32 %v2517, 0.0
        %v2550 = vmax.f32 %v2518, 0.0
        %v2551 = vmax.f32 %v2519, 0.0
        %v2552 = vmax.f32 %v2520, 0.0
        %v2553 = vmax.f32 %v2521, 0.0
        %v2554 = vmax.f32 %v2522, 0.0
        %v2555 = vmax.f32 %v2523, 0.0
        %v2556 = vmax.f32 %v2524, 0.0
        %v2557 = vmax.f32 %v2525, 0.0
        %v2558 = vmax.f32 %v2526, 0.0
        %v2559 = vmax.f32 %v2527, 0.0
        %v2560 = vmax.f32 %v2528, 0.0
        %v2561 = vmax.f32 %v2529, 0.0
        %v2562 = vmax.f32 %v2530, 0.0
        %v2563 = vmax.f32 %v2531, 0.0
        %v2564 = vmax.f32 %v2532, 0.0
        %v2565 = vmax.f32 %v2533, 0.0
        %v2566 = vld [vmem:[%s5] sm:$0xff]
        %v2567 = vld [vmem:[%s5 + $0x8] sm:$0xff]
        %v2568 = vld [vmem:[%s5 + $0x10] sm:$0xff]
        %v2569 = vld [vmem:[%s5 + $0x18] sm:$0xff]
        %v2570 = vld [vmem:[%s5 + $0x20] sm:$0xff]
        %v2571 = vld [vmem:[%s5 + $0x28] sm:$0xff]
        %v2572 = vld [vmem:[%s5 + $0x30] sm:$0xff]
        %v2573 = vld [vmem:[%s5 + $0x38] sm:$0xff]
        %v2574 = vld [vmem:[%s7 + $0x240] sm:$0xff]
        %v2575 = vld [vmem:[%s7 + $0x248] sm:$0xff]
        %v2576 = vld [vmem:[%s7 + $0x250] sm:$0xff]
        %v2577 = vld [vmem:[%s7 + $0x258] sm:$0xff]
        %v2578 = vld [vmem:[%s7 + $0x260] sm:$0xff]
        %v2579 = vld [vmem:[%s7 + $0x268] sm:$0xff]
        %v2580 = vld [vmem:[%s7 + $0x270] sm:$0xff]
        %v2581 = vld [vmem:[%s7 + $0x278] sm:$0xff]
        %2583 = vset.pattern.permute.xlu0 0
        %2584 = vperm.xlu0 %2583, %v2574
        %v2585 = vpop.permute.xlu0 %2584
        %2588 = vset.pattern.permute.xlu0 0
        %2589 = vperm.xlu0 %2588, %v2575
        %v2590 = vpop.permute.xlu0 %2589
        %2593 = vset.pattern.permute.xlu0 0
        %2594 = vperm.xlu0 %2593, %v2576
        %v2595 = vpop.permute.xlu0 %2594
        %2598 = vset.pattern.permute.xlu0 0
        %2599 = vperm.xlu0 %2598, %v2577
        %v2600 = vpop.permute.xlu0 %2599
        %2603 = vset.pattern.permute.xlu0 0
        %2604 = vperm.xlu0 %2603, %v2578
        %v2605 = vpop.permute.xlu0 %2604
        %2608 = vset.pattern.permute.xlu0 0
        %2609 = vperm.xlu0 %2608, %v2579
        %v2610 = vpop.permute.xlu0 %2609
        %2613 = vset.pattern.permute.xlu0 0
        %2614 = vperm.xlu0 %2613, %v2580
        %v2615 = vpop.permute.xlu0 %2614
        %2618 = vset.pattern.permute.xlu0 0
        %2619 = vperm.xlu0 %2618, %v2581
        %v2620 = vpop.permute.xlu0 %2619
        %v2623 = vsel %vm1123, %v2566, 0
        %v2626 = vsel %vm1123, %v2567, 0
        %v2629 = vsel %vm1123, %v2568, 0
        %v2632 = vsel %vm1123, %v2569, 0
        %v2635 = vsel %vm1123, %v2570, 0
        %v2638 = vsel %vm1123, %v2571, 0
        %v2641 = vsel %vm1123, %v2572, 0
        %v2644 = vsel %vm1123, %v2573, 0
        %2646 = vmatprep.subr.mxu0 0.0
        %2647 = vmatpush1.msra.mxu0 0.0
        %2648 = vmatprep.subr.mxu0 0.0
        %2649 = vmatpush1.msra.mxu0 0.0
        %2650 = vmatprep.subr.mxu0 0.0
        %2651 = vmatpush1.msra.mxu0 0.0
        %2652 = vmatprep.subr.mxu0 0.0
        %2653 = vmatpush1.msra.mxu0 0.0
        %2654 = vmatprep.subr.mxu0 0.0
        %2655 = vmatpush1.msra.mxu0 0.0
        %2656 = vmatprep.subr.mxu0 0.0
        %2657 = vmatpush1.msra.mxu0 0.0
        %2658 = vmatprep.subr.mxu0 0.0
        %2659 = vmatpush1.msra.mxu0 0.0
        %2660 = vmatprep.subr.mxu0 0.0
        %2661 = vmatpush1.msra.mxu0 0.0
        %2662 = vmatprep.subr.mxu0 %v2563
        %2663 = vmatpush1.msra.mxu0 %v2562
        %2664 = vmatprep.subr.mxu0 %v2559
        %2665 = vmatpush1.msra.mxu0 %v2558
        %2666 = vmatprep.subr.mxu0 %v2555
        %2667 = vmatpush1.msra.mxu0 %v2554
        %2668 = vmatprep.subr.mxu0 %v2551
        %2669 = vmatpush1.msra.mxu0 %v2550
        %2670 = vmatprep.subr.mxu0 %v2547
        %2671 = vmatpush1.msra.mxu0 %v2546
        %2672 = vmatprep.subr.mxu0 %v2543
        %2673 = vmatpush1.msra.mxu0 %v2542
        %2674 = vmatprep.subr.mxu0 %v2539
        %2675 = vmatpush1.msra.mxu0 %v2538
        %2676 = vmatprep.subr.mxu0 %v2535
        %2677 = vmatpush1.msra.mxu0 %v2534
        %2678 = vmatprep.subr.mxu0 0.0
        %2679 = vmatpush2.msra.mxu0 0.0
        %2680 = vmatprep.subr.mxu0 0.0
        %2681 = vmatpush2.msra.mxu0 0.0
        %2682 = vmatprep.subr.mxu0 0.0
        %2683 = vmatpush2.msra.mxu0 0.0
        %2684 = vmatprep.subr.mxu0 0.0
        %2685 = vmatpush2.msra.mxu0 0.0
        %2686 = vmatprep.subr.mxu0 0.0
        %2687 = vmatpush2.msra.mxu0 0.0
        %2688 = vmatprep.subr.mxu0 0.0
        %2689 = vmatpush2.msra.mxu0 0.0
        %2690 = vmatprep.subr.mxu0 0.0
        %2691 = vmatpush2.msra.mxu0 0.0
        %2692 = vmatprep.subr.mxu0 0.0
        %2693 = vmatpush2.msra.mxu0 0.0
        %2694 = vmatprep.subr.mxu0 0.0
        %2695 = vmatpush2.msra.mxu0 0.0
        %2696 = vmatprep.subr.mxu0 0.0
        %2697 = vmatpush2.msra.mxu0 0.0
        %2698 = vmatprep.subr.mxu0 0.0
        %2699 = vmatpush2.msra.mxu0 0.0
        %2700 = vmatprep.subr.mxu0 0.0
        %2701 = vmatpush2.msra.mxu0 0.0
        %2702 = vmatprep.subr.mxu0 0.0
        %2703 = vmatpush2.msra.mxu0 0.0
        %2704 = vmatprep.subr.mxu0 0.0
        %2705 = vmatpush2.msra.mxu0 0.0
        %2706 = vmatprep.subr.mxu0 0.0
        %2707 = vmatpush2.msra.mxu0 0.0
        %2708 = vmatprep.subr.mxu0 0.0
        %2709 = vmatpush2.msra.mxu0 0.0
        %2710 = vmatprep.mubr.f32.mxu0 0.0
        %2711 = vmatmul.mubr.f32.gmra.mxu0 %v2623
        %v2712 = vpop.f32.mrf.mxu0
        %v2713 = vadd.f32 %v2585, %v2712
        %v2714 = vpop.f32.mrf.mxu0
        %v2715 = vadd.f32 %v2585, %v2714
        %2716 = vmatprep.mubr.f32.mxu0 0.0
        %2717 = vmatmul.mubr.f32.gmra.mxu0 %v2626
        %v2718 = vpop.f32.mrf.mxu0
        %v2719 = vadd.f32 %v2590, %v2718
        %v2720 = vpop.f32.mrf.mxu0
        %v2721 = vadd.f32 %v2590, %v2720
        %2722 = vmatprep.mubr.f32.mxu0 0.0
        %2723 = vmatmul.mubr.f32.gmra.mxu0 %v2629
        %v2724 = vpop.f32.mrf.mxu0
        %v2725 = vadd.f32 %v2595, %v2724
        %v2726 = vpop.f32.mrf.mxu0
        %v2727 = vadd.f32 %v2595, %v2726
        %2728 = vmatprep.mubr.f32.mxu0 0.0
        %2729 = vmatmul.mubr.f32.gmra.mxu0 %v2632
        %v2730 = vpop.f32.mrf.mxu0
        %v2731 = vadd.f32 %v2600, %v2730
        %v2732 = vpop.f32.mrf.mxu0
        %v2733 = vadd.f32 %v2600, %v2732
        %2734 = vmatprep.mubr.f32.mxu0 0.0
        %2735 = vmatmul.mubr.f32.gmra.mxu0 %v2635
        %v2736 = vpop.f32.mrf.mxu0
        %v2737 = vadd.f32 %v2605, %v2736
        %v2738 = vpop.f32.mrf.mxu0
        %v2739 = vadd.f32 %v2605, %v2738
        %2740 = vmatprep.mubr.f32.mxu0 0.0
        %2741 = vmatmul.mubr.f32.gmra.mxu0 %v2638
        %v2742 = vpop.f32.mrf.mxu0
        %v2743 = vadd.f32 %v2610, %v2742
        %v2744 = vpop.f32.mrf.mxu0
        %v2745 = vadd.f32 %v2610, %v2744
        %2746 = vmatprep.mubr.f32.mxu0 0.0
        %2747 = vmatmul.mubr.f32.gmra.mxu0 %v2641
        %v2748 = vpop.f32.mrf.mxu0
        %v2749 = vadd.f32 %v2615, %v2748
        %v2750 = vpop.f32.mrf.mxu0
        %v2751 = vadd.f32 %v2615, %v2750
        %2752 = vmatprep.mubr.f32.mxu0 0.0
        %2753 = vmatmul.mubr.f32.gmra.mxu0 %v2644
        %v2754 = vpop.f32.mrf.mxu0
        %v2755 = vadd.f32 %v2620, %v2754
        %v2756 = vpop.f32.mrf.mxu0
        %v2757 = vadd.f32 %v2620, %v2756
        %2758 = vdwg.mxu0
        %2759 = vmatprep.subr.mxu0 0.0
        %2760 = vmatpush1.msra.mxu0 0.0
        %2761 = vmatprep.subr.mxu0 0.0
        %2762 = vmatpush1.msra.mxu0 0.0
        %2763 = vmatprep.subr.mxu0 0.0
        %2764 = vmatpush1.msra.mxu0 0.0
        %2765 = vmatprep.subr.mxu0 0.0
        %2766 = vmatpush1.msra.mxu0 0.0
        %2767 = vmatprep.subr.mxu0 0.0
        %2768 = vmatpush1.msra.mxu0 0.0
        %2769 = vmatprep.subr.mxu0 0.0
        %2770 = vmatpush1.msra.mxu0 0.0
        %2771 = vmatprep.subr.mxu0 0.0
        %2772 = vmatpush1.msra.mxu0 0.0
        %2773 = vmatprep.subr.mxu0 0.0
        %2774 = vmatpush1.msra.mxu0 0.0
        %2775 = vmatprep.subr.mxu0 %v2565
        %2776 = vmatpush1.msra.mxu0 %v2564
        %2777 = vmatprep.subr.mxu0 %v2561
        %2778 = vmatpush1.msra.mxu0 %v2560
        %2779 = vmatprep.subr.mxu0 %v2557
        %2780 = vmatpush1.msra.mxu0 %v2556
        %2781 = vmatprep.subr.mxu0 %v2553
        %2782 = vmatpush1.msra.mxu0 %v2552
        %2783 = vmatprep.subr.mxu0 %v2549
        %2784 = vmatpush1.msra.mxu0 %v2548
        %2785 = vmatprep.subr.mxu0 %v2545
        %2786 = vmatpush1.msra.mxu0 %v2544
        %2787 = vmatprep.subr.mxu0 %v2541
        %2788 = vmatpush1.msra.mxu0 %v2540
        %2789 = vmatprep.subr.mxu0 %v2537
        %2790 = vmatpush1.msra.mxu0 %v2536
        %2791 = vmatprep.subr.mxu0 0.0
        %2792 = vmatpush2.msra.mxu0 0.0
        %2793 = vmatprep.subr.mxu0 0.0
        %2794 = vmatpush2.msra.mxu0 0.0
        %2795 = vmatprep.subr.mxu0 0.0
        %2796 = vmatpush2.msra.mxu0 0.0
        %2797 = vmatprep.subr.mxu0 0.0
        %2798 = vmatpush2.msra.mxu0 0.0
        %2799 = vmatprep.subr.mxu0 0.0
        %2800 = vmatpush2.msra.mxu0 0.0
        %2801 = vmatprep.subr.mxu0 0.0
        %2802 = vmatpush2.msra.mxu0 0.0
        %2803 = vmatprep.subr.mxu0 0.0
        %2804 = vmatpush2.msra.mxu0 0.0
        %2805 = vmatprep.subr.mxu0 0.0
        %2806 = vmatpush2.msra.mxu0 0.0
        %2807 = vmatprep.subr.mxu0 0.0
        %2808 = vmatpush2.msra.mxu0 0.0
        %2809 = vmatprep.subr.mxu0 0.0
        %2810 = vmatpush2.msra.mxu0 0.0
        %2811 = vmatprep.subr.mxu0 0.0
        %2812 = vmatpush2.msra.mxu0 0.0
        %2813 = vmatprep.subr.mxu0 0.0
        %2814 = vmatpush2.msra.mxu0 0.0
        %2815 = vmatprep.subr.mxu0 0.0
        %2816 = vmatpush2.msra.mxu0 0.0
        %2817 = vmatprep.subr.mxu0 0.0
        %2818 = vmatpush2.msra.mxu0 0.0
        %2819 = vmatprep.subr.mxu0 0.0
        %2820 = vmatpush2.msra.mxu0 0.0
        %2821 = vmatprep.subr.mxu0 0.0
        %2822 = vmatpush2.msra.mxu0 0.0
        %2823 = vmatprep.mubr.f32.mxu0 0.0
        %2824 = vmatmul.mubr.f32.gmra.mxu0 %v2623
        %v2825 = vpop.f32.mrf.mxu0
        %v2826 = vadd.f32 %v2585, %v2825
        %v2827 = vpop.f32.mrf.mxu0
        %v2828 = vadd.f32 %v2585, %v2827
        %2829 = vmatprep.mubr.f32.mxu0 0.0
        %2830 = vmatmul.mubr.f32.gmra.mxu0 %v2626
        %v2831 = vpop.f32.mrf.mxu0
        %v2832 = vadd.f32 %v2590, %v2831
        %v2833 = vpop.f32.mrf.mxu0
        %v2834 = vadd.f32 %v2590, %v2833
        %2835 = vmatprep.mubr.f32.mxu0 0.0
        %2836 = vmatmul.mubr.f32.gmra.mxu0 %v2629
        %v2837 = vpop.f32.mrf.mxu0
        %v2838 = vadd.f32 %v2595, %v2837
        %v2839 = vpop.f32.mrf.mxu0
        %v2840 = vadd.f32 %v2595, %v2839
        %2841 = vmatprep.mubr.f32.mxu0 0.0
        %2842 = vmatmul.mubr.f32.gmra.mxu0 %v2632
        %v2843 = vpop.f32.mrf.mxu0
        %v2844 = vadd.f32 %v2600, %v2843
        %v2845 = vpop.f32.mrf.mxu0
        %v2846 = vadd.f32 %v2600, %v2845
        %2847 = vmatprep.mubr.f32.mxu0 0.0
        %2848 = vmatmul.mubr.f32.gmra.mxu0 %v2635
        %v2849 = vpop.f32.mrf.mxu0
        %v2850 = vadd.f32 %v2605, %v2849
        %v2851 = vpop.f32.mrf.mxu0
        %v2852 = vadd.f32 %v2605, %v2851
        %2853 = vmatprep.mubr.f32.mxu0 0.0
        %2854 = vmatmul.mubr.f32.gmra.mxu0 %v2638
        %v2855 = vpop.f32.mrf.mxu0
        %v2856 = vadd.f32 %v2610, %v2855
        %v2857 = vpop.f32.mrf.mxu0
        %v2858 = vadd.f32 %v2610, %v2857
        %2859 = vmatprep.mubr.f32.mxu0 0.0
        %2860 = vmatmul.mubr.f32.gmra.mxu0 %v2641
        %v2861 = vpop.f32.mrf.mxu0
        %v2862 = vadd.f32 %v2615, %v2861
        %v2863 = vpop.f32.mrf.mxu0
        %v2864 = vadd.f32 %v2615, %v2863
        %2865 = vmatprep.mubr.f32.mxu0 0.0
        %2866 = vmatmul.mubr.f32.gmra.mxu0 %v2644
        %v2867 = vpop.f32.mrf.mxu0
        %v2868 = vadd.f32 %v2620, %v2867
        %v2869 = vpop.f32.mrf.mxu0
        %v2870 = vadd.f32 %v2620, %v2869
        %2871 = vdwg.mxu0
        %v2872 = vadd.f32 %v2713, %v2719
        %v2873 = vadd.f32 %v2872, %v2725
        %v2874 = vadd.f32 %v2873, %v2731
        %v2875 = vadd.f32 %v2874, %v2737
        %v2876 = vadd.f32 %v2875, %v2743
        %v2877 = vadd.f32 %v2876, %v2749
        %v2878 = vadd.f32 %v2877, %v2755
        %v2879 = vrot.slane %v2878, 4
        %v2880 = vadd.f32 %v2878, %v2879
        %v2881 = vrot.slane %v2880, 2
        %v2882 = vadd.f32 %v2880, %v2881
        %v2883 = vrot.slane %v2882, 1
        %v2884 = vadd.f32 %v2882, %v2883
        %v2885 = vadd.f32 %v2715, %v2721
        %v2886 = vadd.f32 %v2885, %v2727
        %v2887 = vadd.f32 %v2886, %v2733
        %v2888 = vadd.f32 %v2887, %v2739
        %v2889 = vadd.f32 %v2888, %v2745
        %v2890 = vadd.f32 %v2889, %v2751
        %v2891 = vadd.f32 %v2890, %v2757
        %v2892 = vrot.slane %v2891, 4
        %v2893 = vadd.f32 %v2891, %v2892
        %v2894 = vrot.slane %v2893, 2
        %v2895 = vadd.f32 %v2893, %v2894
        %v2896 = vrot.slane %v2895, 1
        %v2897 = vadd.f32 %v2895, %v2896
        %v2898 = vadd.f32 %v2826, %v2832
        %v2899 = vadd.f32 %v2898, %v2838
        %v2900 = vadd.f32 %v2899, %v2844
        %v2901 = vadd.f32 %v2900, %v2850
        %v2902 = vadd.f32 %v2901, %v2856
        %v2903 = vadd.f32 %v2902, %v2862
        %v2904 = vadd.f32 %v2903, %v2868
        %v2905 = vrot.slane %v2904, 4
        %v2906 = vadd.f32 %v2904, %v2905
        %v2907 = vrot.slane %v2906, 2
        %v2908 = vadd.f32 %v2906, %v2907
        %v2909 = vrot.slane %v2908, 1
        %v2910 = vadd.f32 %v2908, %v2909
        %v2911 = vadd.f32 %v2828, %v2834
        %v2912 = vadd.f32 %v2911, %v2840
        %v2913 = vadd.f32 %v2912, %v2846
        %v2914 = vadd.f32 %v2913, %v2852
        %v2915 = vadd.f32 %v2914, %v2858
        %v2916 = vadd.f32 %v2915, %v2864
        %v2917 = vadd.f32 %v2916, %v2870
        %v2918 = vrot.slane %v2917, 4
        %v2919 = vadd.f32 %v2917, %v2918
        %v2920 = vrot.slane %v2919, 2
        %v2921 = vadd.f32 %v2919, %v2920
        %v2922 = vrot.slane %v2921, 1
        %v2923 = vadd.f32 %v2921, %v2922
        %v2924 = vmul.f32 %v2884, 0.015625
        %v2925 = vmul.f32 %v2897, 0.015625
        %v2926 = vmul.f32 %v2910, 0.015625
        %v2927 = vmul.f32 %v2923, 0.015625
        %v2928 = vmul.f32 %v2713, %v2713
        %v2929 = vmul.f32 %v2715, %v2715
        %v2930 = vmul.f32 %v2826, %v2826
        %v2931 = vmul.f32 %v2828, %v2828
        %v2932 = vmul.f32 %v2719, %v2719
        %v2933 = vmul.f32 %v2721, %v2721
        %v2934 = vmul.f32 %v2832, %v2832
        %v2935 = vmul.f32 %v2834, %v2834
        %v2936 = vmul.f32 %v2725, %v2725
        %v2937 = vmul.f32 %v2727, %v2727
        %v2938 = vmul.f32 %v2838, %v2838
        %v2939 = vmul.f32 %v2840, %v2840
        %v2940 = vmul.f32 %v2731, %v2731
        %v2941 = vmul.f32 %v2733, %v2733
        %v2942 = vmul.f32 %v2844, %v2844
        %v2943 = vmul.f32 %v2846, %v2846
        %v2944 = vmul.f32 %v2737, %v2737
        %v2945 = vmul.f32 %v2739, %v2739
        %v2946 = vmul.f32 %v2850, %v2850
        %v2947 = vmul.f32 %v2852, %v2852
        %v2948 = vmul.f32 %v2743, %v2743
        %v2949 = vmul.f32 %v2745, %v2745
        %v2950 = vmul.f32 %v2856, %v2856
        %v2951 = vmul.f32 %v2858, %v2858
        %v2952 = vmul.f32 %v2749, %v2749
        %v2953 = vmul.f32 %v2751, %v2751
        %v2954 = vmul.f32 %v2862, %v2862
        %v2955 = vmul.f32 %v2864, %v2864
        %v2956 = vmul.f32 %v2755, %v2755
        %v2957 = vmul.f32 %v2757, %v2757
        %v2958 = vmul.f32 %v2868, %v2868
        %v2959 = vmul.f32 %v2870, %v2870
        %v2960 = vadd.f32 %v2928, %v2932
        %v2961 = vadd.f32 %v2960, %v2936
        %v2962 = vadd.f32 %v2961, %v2940
        %v2963 = vadd.f32 %v2962, %v2944
        %v2964 = vadd.f32 %v2963, %v2948
        %v2965 = vadd.f32 %v2964, %v2952
        %v2966 = vadd.f32 %v2965, %v2956
        %v2967 = vrot.slane %v2966, 4
        %v2968 = vadd.f32 %v2966, %v2967
        %v2969 = vrot.slane %v2968, 2
        %v2970 = vadd.f32 %v2968, %v2969
        %v2971 = vrot.slane %v2970, 1
        %v2972 = vadd.f32 %v2970, %v2971
        %v2973 = vadd.f32 %v2929, %v2933
        %v2974 = vadd.f32 %v2973, %v2937
        %v2975 = vadd.f32 %v2974, %v2941
        %v2976 = vadd.f32 %v2975, %v2945
        %v2977 = vadd.f32 %v2976, %v2949
        %v2978 = vadd.f32 %v2977, %v2953
        %v2979 = vadd.f32 %v2978, %v2957
        %v2980 = vrot.slane %v2979, 4
        %v2981 = vadd.f32 %v2979, %v2980
        %v2982 = vrot.slane %v2981, 2
        %v2983 = vadd.f32 %v2981, %v2982
        %v2984 = vrot.slane %v2983, 1
        %v2985 = vadd.f32 %v2983, %v2984
        %v2986 = vadd.f32 %v2930, %v2934
        %v2987 = vadd.f32 %v2986, %v2938
        %v2988 = vadd.f32 %v2987, %v2942
        %v2989 = vadd.f32 %v2988, %v2946
        %v2990 = vadd.f32 %v2989, %v2950
        %v2991 = vadd.f32 %v2990, %v2954
        %v2992 = vadd.f32 %v2991, %v2958
        %v2993 = vrot.slane %v2992, 4
        %v2994 = vadd.f32 %v2992, %v2993
        %v2995 = vrot.slane %v2994, 2
        %v2996 = vadd.f32 %v2994, %v2995
        %v2997 = vrot.slane %v2996, 1
        %v2998 = vadd.f32 %v2996, %v2997
        %v2999 = vadd.f32 %v2931, %v2935
        %v3000 = vadd.f32 %v2999, %v2939
        %v3001 = vadd.f32 %v3000, %v2943
        %v3002 = vadd.f32 %v3001, %v2947
        %v3003 = vadd.f32 %v3002, %v2951
        %v3004 = vadd.f32 %v3003, %v2955
        %v3005 = vadd.f32 %v3004, %v2959
        %v3006 = vrot.slane %v3005, 4
        %v3007 = vadd.f32 %v3005, %v3006
        %v3008 = vrot.slane %v3007, 2
        %v3009 = vadd.f32 %v3007, %v3008
        %v3010 = vrot.slane %v3009, 1
        %v3011 = vadd.f32 %v3009, %v3010
        %v3012 = vmul.f32 %v2972, 0.015625
        %v3013 = vmul.f32 %v2985, 0.015625
        %v3014 = vmul.f32 %v2998, 0.015625
        %v3015 = vmul.f32 %v3011, 0.015625
        %v3016 = vmul.f32 %v2924, %v2924
        %v3017 = vmul.f32 %v2925, %v2925
        %v3018 = vmul.f32 %v2926, %v2926
        %v3019 = vmul.f32 %v2927, %v2927
        %v3020 = vsub.f32 %v3012, %v3016
        %v3021 = vsub.f32 %v3013, %v3017
        %v3022 = vsub.f32 %v3014, %v3018
        %v3023 = vsub.f32 %v3015, %v3019
        %v3024 = vadd.f32 %v3020, 1e-05
        %v3025 = vadd.f32 %v3021, 1e-05
        %v3026 = vadd.f32 %v3022, 1e-05
        %v3027 = vadd.f32 %v3023, 1e-05
        %v3028 = vrsqrt.pop %v3024
        %v3029 = vrsqrt.pop %v3025
        %v3030 = vrsqrt.pop %v3026
        %v3031 = vrsqrt.pop %v3027
        %v3032 = vsub.f32 %v2713, %v2924
        %v3033 = vsub.f32 %v2715, %v2925
        %v3034 = vsub.f32 %v2826, %v2926
        %v3035 = vsub.f32 %v2828, %v2927
        %v3036 = vsub.f32 %v2719, %v2924
        %v3037 = vsub.f32 %v2721, %v2925
        %v3038 = vsub.f32 %v2832, %v2926
        %v3039 = vsub.f32 %v2834, %v2927
        %v3040 = vsub.f32 %v2725, %v2924
        %v3041 = vsub.f32 %v2727, %v2925
        %v3042 = vsub.f32 %v2838, %v2926
        %v3043 = vsub.f32 %v2840, %v2927
        %v3044 = vsub.f32 %v2731, %v2924
        %v3045 = vsub.f32 %v2733, %v2925
        %v3046 = vsub.f32 %v2844, %v2926
        %v3047 = vsub.f32 %v2846, %v2927
        %v3048 = vsub.f32 %v2737, %v2924
        %v3049 = vsub.f32 %v2739, %v2925
        %v3050 = vsub.f32 %v2850, %v2926
        %v3051 = vsub.f32 %v2852, %v2927
        %v3052 = vsub.f32 %v2743, %v2924
        %v3053 = vsub.f32 %v2745, %v2925
        %v3054 = vsub.f32 %v2856, %v2926
        %v3055 = vsub.f32 %v2858, %v2927
        %v3056 = vsub.f32 %v2749, %v2924
        %v3057 = vsub.f32 %v2751, %v2925
        %v3058 = vsub.f32 %v2862, %v2926
        %v3059 = vsub.f32 %v2864, %v2927
        %v3060 = vsub.f32 %v2755, %v2924
        %v3061 = vsub.f32 %v2757, %v2925
        %v3062 = vsub.f32 %v2868, %v2926
        %v3063 = vsub.f32 %v2870, %v2927
        %v3064 = vmul.f32 %v3032, %v3028
        %v3065 = vmul.f32 %v3033, %v3029
        %v3066 = vmul.f32 %v3034, %v3030
        %v3067 = vmul.f32 %v3035, %v3031
        %v3068 = vmul.f32 %v3036, %v3028
        %v3069 = vmul.f32 %v3037, %v3029
        %v3070 = vmul.f32 %v3038, %v3030
        %v3071 = vmul.f32 %v3039, %v3031
        %v3072 = vmul.f32 %v3040, %v3028
        %v3073 = vmul.f32 %v3041, %v3029
        %v3074 = vmul.f32 %v3042, %v3030
        %v3075 = vmul.f32 %v3043, %v3031
        %v3076 = vmul.f32 %v3044, %v3028
        %v3077 = vmul.f32 %v3045, %v3029
        %v3078 = vmul.f32 %v3046, %v3030
        %v3079 = vmul.f32 %v3047, %v3031
        %v3080 = vmul.f32 %v3048, %v3028
        %v3081 = vmul.f32 %v3049, %v3029
        %v3082 = vmul.f32 %v3050, %v3030
        %v3083 = vmul.f32 %v3051, %v3031
        %v3084 = vmul.f32 %v3052, %v3028
        %v3085 = vmul.f32 %v3053, %v3029
        %v3086 = vmul.f32 %v3054, %v3030
        %v3087 = vmul.f32 %v3055, %v3031
        %v3088 = vmul.f32 %v3056, %v3028
        %v3089 = vmul.f32 %v3057, %v3029
        %v3090 = vmul.f32 %v3058, %v3030
        %v3091 = vmul.f32 %v3059, %v3031
        %v3092 = vmul.f32 %v3060, %v3028
        %v3093 = vmul.f32 %v3061, %v3029
        %v3094 = vmul.f32 %v3062, %v3030
        %v3095 = vmul.f32 %v3063, %v3031
        %v3096 = vld [vmem:[%s7 + $0x280] sm:$0xff]
        %v3097 = vld [vmem:[%s7 + $0x288] sm:$0xff]
        %v3098 = vld [vmem:[%s7 + $0x290] sm:$0xff]
        %v3099 = vld [vmem:[%s7 + $0x298] sm:$0xff]
        %v3100 = vld [vmem:[%s7 + $0x2a0] sm:$0xff]
        %v3101 = vld [vmem:[%s7 + $0x2a8] sm:$0xff]
        %v3102 = vld [vmem:[%s7 + $0x2b0] sm:$0xff]
        %v3103 = vld [vmem:[%s7 + $0x2b8] sm:$0xff]
        %v3104 = vld [vmem:[%s7 + $0x2c0] sm:$0xff]
        %v3105 = vld [vmem:[%s7 + $0x2c8] sm:$0xff]
        %v3106 = vld [vmem:[%s7 + $0x2d0] sm:$0xff]
        %v3107 = vld [vmem:[%s7 + $0x2d8] sm:$0xff]
        %v3108 = vld [vmem:[%s7 + $0x2e0] sm:$0xff]
        %v3109 = vld [vmem:[%s7 + $0x2e8] sm:$0xff]
        %v3110 = vld [vmem:[%s7 + $0x2f0] sm:$0xff]
        %v3111 = vld [vmem:[%s7 + $0x2f8] sm:$0xff]
        %3113 = vset.pattern.permute.xlu0 0
        %3114 = vperm.xlu0 %3113, %v3096
        %v3115 = vpop.permute.xlu0 %3114
        %3118 = vset.pattern.permute.xlu0 0
        %3119 = vperm.xlu0 %3118, %v3097
        %v3120 = vpop.permute.xlu0 %3119
        %3123 = vset.pattern.permute.xlu0 0
        %3124 = vperm.xlu0 %3123, %v3098
        %v3125 = vpop.permute.xlu0 %3124
        %3128 = vset.pattern.permute.xlu0 0
        %3129 = vperm.xlu0 %3128, %v3099
        %v3130 = vpop.permute.xlu0 %3129
        %3133 = vset.pattern.permute.xlu0 0
        %3134 = vperm.xlu0 %3133, %v3100
        %v3135 = vpop.permute.xlu0 %3134
        %3138 = vset.pattern.permute.xlu0 0
        %3139 = vperm.xlu0 %3138, %v3101
        %v3140 = vpop.permute.xlu0 %3139
        %3143 = vset.pattern.permute.xlu0 0
        %3144 = vperm.xlu0 %3143, %v3102
        %v3145 = vpop.permute.xlu0 %3144
        %3148 = vset.pattern.permute.xlu0 0
        %3149 = vperm.xlu0 %3148, %v3103
        %v3150 = vpop.permute.xlu0 %3149
        %v3152 = vmul.f32 %v3064, %v3115
        %v3153 = vmul.f32 %v3065, %v3115
        %v3154 = vmul.f32 %v3066, %v3115
        %v3155 = vmul.f32 %v3067, %v3115
        %v3156 = vmul.f32 %v3068, %v3120
        %v3157 = vmul.f32 %v3069, %v3120
        %v3158 = vmul.f32 %v3070, %v3120
        %v3159 = vmul.f32 %v3071, %v3120
        %v3160 = vmul.f32 %v3072, %v3125
        %v3161 = vmul.f32 %v3073, %v3125
        %v3162 = vmul.f32 %v3074, %v3125
        %v3163 = vmul.f32 %v3075, %v3125
        %v3164 = vmul.f32 %v3076, %v3130
        %v3165 = vmul.f32 %v3077, %v3130
        %v3166 = vmul.f32 %v3078, %v3130
        %v3167 = vmul.f32 %v3079, %v3130
        %v3168 = vmul.f32 %v3080, %v3135
        %v3169 = vmul.f32 %v3081, %v3135
        %v3170 = vmul.f32 %v3082, %v3135
        %v3171 = vmul.f32 %v3083, %v3135
        %v3172 = vmul.f32 %v3084, %v3140
        %v3173 = vmul.f32 %v3085, %v3140
        %v3174 = vmul.f32 %v3086, %v3140
        %v3175 = vmul.f32 %v3087, %v3140
        %v3176 = vmul.f32 %v3088, %v3145
        %v3177 = vmul.f32 %v3089, %v3145
        %v3178 = vmul.f32 %v3090, %v3145
        %v3179 = vmul.f32 %v3091, %v3145
        %v3180 = vmul.f32 %v3092, %v3150
        %v3181 = vmul.f32 %v3093, %v3150
        %v3182 = vmul.f32 %v3094, %v3150
        %v3183 = vmul.f32 %v3095, %v3150
        %3185 = vset.pattern.permute.xlu0 0
        %3186 = vperm.xlu0 %3185, %v3104
        %v3187 = vpop.permute.xlu0 %3186
        %3190 = vset.pattern.permute.xlu0 0
        %3191 = vperm.xlu0 %3190, %v3105
        %v3192 = vpop.permute.xlu0 %3191
        %3195 = vset.pattern.permute.xlu0 0
        %3196 = vperm.xlu0 %3195, %v3106
        %v3197 = vpop.permute.xlu0 %3196
        %3200 = vset.pattern.permute.xlu0 0
        %3201 = vperm.xlu0 %3200, %v3107
        %v3202 = vpop.permute.xlu0 %3201
        %3205 = vset.pattern.permute.xlu0 0
        %3206 = vperm.xlu0 %3205, %v3108
        %v3207 = vpop.permute.xlu0 %3206
        %3210 = vset.pattern.permute.xlu0 0
        %3211 = vperm.xlu0 %3210, %v3109
        %v3212 = vpop.permute.xlu0 %3211
        %3215 = vset.pattern.permute.xlu0 0
        %3216 = vperm.xlu0 %3215, %v3110
        %v3217 = vpop.permute.xlu0 %3216
        %3220 = vset.pattern.permute.xlu0 0
        %3221 = vperm.xlu0 %3220, %v3111
        %v3222 = vpop.permute.xlu0 %3221
        %v3224 = vadd.f32 %v3152, %v3187
        %v3225 = vadd.f32 %v3153, %v3187
        %v3226 = vadd.f32 %v3154, %v3187
        %v3227 = vadd.f32 %v3155, %v3187
        %v3228 = vadd.f32 %v3156, %v3192
        %v3229 = vadd.f32 %v3157, %v3192
        %v3230 = vadd.f32 %v3158, %v3192
        %v3231 = vadd.f32 %v3159, %v3192
        %v3232 = vadd.f32 %v3160, %v3197
        %v3233 = vadd.f32 %v3161, %v3197
        %v3234 = vadd.f32 %v3162, %v3197
        %v3235 = vadd.f32 %v3163, %v3197
        %v3236 = vadd.f32 %v3164, %v3202
        %v3237 = vadd.f32 %v3165, %v3202
        %v3238 = vadd.f32 %v3166, %v3202
        %v3239 = vadd.f32 %v3167, %v3202
        %v3240 = vadd.f32 %v3168, %v3207
        %v3241 = vadd.f32 %v3169, %v3207
        %v3242 = vadd.f32 %v3170, %v3207
        %v3243 = vadd.f32 %v3171, %v3207
        %v3244 = vadd.f32 %v3172, %v3212
        %v3245 = vadd.f32 %v3173, %v3212
        %v3246 = vadd.f32 %v3174, %v3212
        %v3247 = vadd.f32 %v3175, %v3212
        %v3248 = vadd.f32 %v3176, %v3217
        %v3249 = vadd.f32 %v3177, %v3217
        %v3250 = vadd.f32 %v3178, %v3217
        %v3251 = vadd.f32 %v3179, %v3217
        %v3252 = vadd.f32 %v3180, %v3222
        %v3253 = vadd.f32 %v3181, %v3222
        %v3254 = vadd.f32 %v3182, %v3222
        %v3255 = vadd.f32 %v3183, %v3222
        %v3256 = vmax.f32 %v3224, 0.0
        %v3257 = vmax.f32 %v3225, 0.0
        %v3258 = vmax.f32 %v3226, 0.0
        %v3259 = vmax.f32 %v3227, 0.0
        %v3260 = vmax.f32 %v3228, 0.0
        %v3261 = vmax.f32 %v3229, 0.0
        %v3262 = vmax.f32 %v3230, 0.0
        %v3263 = vmax.f32 %v3231, 0.0
        %v3264 = vmax.f32 %v3232, 0.0
        %v3265 = vmax.f32 %v3233, 0.0
        %v3266 = vmax.f32 %v3234, 0.0
        %v3267 = vmax.f32 %v3235, 0.0
        %v3268 = vmax.f32 %v3236, 0.0
        %v3269 = vmax.f32 %v3237, 0.0
        %v3270 = vmax.f32 %v3238, 0.0
        %v3271 = vmax.f32 %v3239, 0.0
        %v3272 = vmax.f32 %v3240, 0.0
        %v3273 = vmax.f32 %v3241, 0.0
        %v3274 = vmax.f32 %v3242, 0.0
        %v3275 = vmax.f32 %v3243, 0.0
        %v3276 = vmax.f32 %v3244, 0.0
        %v3277 = vmax.f32 %v3245, 0.0
        %v3278 = vmax.f32 %v3246, 0.0
        %v3279 = vmax.f32 %v3247, 0.0
        %v3280 = vmax.f32 %v3248, 0.0
        %v3281 = vmax.f32 %v3249, 0.0
        %v3282 = vmax.f32 %v3250, 0.0
        %v3283 = vmax.f32 %v3251, 0.0
        %v3284 = vmax.f32 %v3252, 0.0
        %v3285 = vmax.f32 %v3253, 0.0
        %v3286 = vmax.f32 %v3254, 0.0
        %v3287 = vmax.f32 %v3255, 0.0
        %v3288 = vld [vmem:[%s7 + $0x300] sm:$0x1]
        %v3289 = vld [vmem:[%s6] sm:$0x1]
        %3291 = vset.pattern.permute.xlu0 0
        %3292 = vperm.xlu0 %3291, %v3288
        %v3293 = vpop.permute.xlu0 %3292
        %v3296 = vsel %vm1123, %v3289, 0
        %3298 = vmatprep.subr.mxu0 0.0
        %3299 = vmatpush1.msra.mxu0 0.0
        %3300 = vmatprep.subr.mxu0 0.0
        %3301 = vmatpush1.msra.mxu0 0.0
        %3302 = vmatprep.subr.mxu0 0.0
        %3303 = vmatpush1.msra.mxu0 0.0
        %3304 = vmatprep.subr.mxu0 0.0
        %3305 = vmatpush1.msra.mxu0 0.0
        %3306 = vmatprep.subr.mxu0 0.0
        %3307 = vmatpush1.msra.mxu0 0.0
        %3308 = vmatprep.subr.mxu0 0.0
        %3309 = vmatpush1.msra.mxu0 0.0
        %3310 = vmatprep.subr.mxu0 0.0
        %3311 = vmatpush1.msra.mxu0 0.0
        %3312 = vmatprep.subr.mxu0 0.0
        %3313 = vmatpush1.msra.mxu0 0.0
        %3314 = vmatprep.subr.mxu0 %v3285
        %3315 = vmatpush1.msra.mxu0 %v3284
        %3316 = vmatprep.subr.mxu0 %v3281
        %3317 = vmatpush1.msra.mxu0 %v3280
        %3318 = vmatprep.subr.mxu0 %v3277
        %3319 = vmatpush1.msra.mxu0 %v3276
        %3320 = vmatprep.subr.mxu0 %v3273
        %3321 = vmatpush1.msra.mxu0 %v3272
        %3322 = vmatprep.subr.mxu0 %v3269
        %3323 = vmatpush1.msra.mxu0 %v3268
        %3324 = vmatprep.subr.mxu0 %v3265
        %3325 = vmatpush1.msra.mxu0 %v3264
        %3326 = vmatprep.subr.mxu0 %v3261
        %3327 = vmatpush1.msra.mxu0 %v3260
        %3328 = vmatprep.subr.mxu0 %v3257
        %3329 = vmatpush1.msra.mxu0 %v3256
        %3330 = vmatprep.subr.mxu0 0.0
        %3331 = vmatpush2.msra.mxu0 0.0
        %3332 = vmatprep.subr.mxu0 0.0
        %3333 = vmatpush2.msra.mxu0 0.0
        %3334 = vmatprep.subr.mxu0 0.0
        %3335 = vmatpush2.msra.mxu0 0.0
        %3336 = vmatprep.subr.mxu0 0.0
        %3337 = vmatpush2.msra.mxu0 0.0
        %3338 = vmatprep.subr.mxu0 0.0
        %3339 = vmatpush2.msra.mxu0 0.0
        %3340 = vmatprep.subr.mxu0 0.0
        %3341 = vmatpush2.msra.mxu0 0.0
        %3342 = vmatprep.subr.mxu0 0.0
        %3343 = vmatpush2.msra.mxu0 0.0
        %3344 = vmatprep.subr.mxu0 0.0
        %3345 = vmatpush2.msra.mxu0 0.0
        %3346 = vmatprep.subr.mxu0 0.0
        %3347 = vmatpush2.msra.mxu0 0.0
        %3348 = vmatprep.subr.mxu0 0.0
        %3349 = vmatpush2.msra.mxu0 0.0
        %3350 = vmatprep.subr.mxu0 0.0
        %3351 = vmatpush2.msra.mxu0 0.0
        %3352 = vmatprep.subr.mxu0 0.0
        %3353 = vmatpush2.msra.mxu0 0.0
        %3354 = vmatprep.subr.mxu0 0.0
        %3355 = vmatpush2.msra.mxu0 0.0
        %3356 = vmatprep.subr.mxu0 0.0
        %3357 = vmatpush2.msra.mxu0 0.0
        %3358 = vmatprep.subr.mxu0 0.0
        %3359 = vmatpush2.msra.mxu0 0.0
        %3360 = vmatprep.subr.mxu0 0.0
        %3361 = vmatpush2.msra.mxu0 0.0
        %3362 = vmatprep.mubr.f32.mxu0 0.0
        %3363 = vmatmul.mubr.f32.gmra.mxu0 %v3296
        %v3364 = vpop.f32.mrf.mxu0
        %v3365 = vadd.f32 %v3293, %v3364
        %v3366 = vpop.f32.mrf.mxu0
        %v3367 = vadd.f32 %v3293, %v3366
        %3368 = vdwg.mxu0
        %3369 = vmatprep.subr.mxu0 0.0
        %3370 = vmatpush1.msra.mxu0 0.0
        %3371 = vmatprep.subr.mxu0 0.0
        %3372 = vmatpush1.msra.mxu0 0.0
        %3373 = vmatprep.subr.mxu0 0.0
        %3374 = vmatpush1.msra.mxu0 0.0
        %3375 = vmatprep.subr.mxu0 0.0
        %3376 = vmatpush1.msra.mxu0 0.0
        %3377 = vmatprep.subr.mxu0 0.0
        %3378 = vmatpush1.msra.mxu0 0.0
        %3379 = vmatprep.subr.mxu0 0.0
        %3380 = vmatpush1.msra.mxu0 0.0
        %3381 = vmatprep.subr.mxu0 0.0
        %3382 = vmatpush1.msra.mxu0 0.0
        %3383 = vmatprep.subr.mxu0 0.0
        %3384 = vmatpush1.msra.mxu0 0.0
        %3385 = vmatprep.subr.mxu0 %v3287
        %3386 = vmatpush1.msra.mxu0 %v3286
        %3387 = vmatprep.subr.mxu0 %v3283
        %3388 = vmatpush1.msra.mxu0 %v3282
        %3389 = vmatprep.subr.mxu0 %v3279
        %3390 = vmatpush1.msra.mxu0 %v3278
        %3391 = vmatprep.subr.mxu0 %v3275
        %3392 = vmatpush1.msra.mxu0 %v3274
        %3393 = vmatprep.subr.mxu0 %v3271
        %3394 = vmatpush1.msra.mxu0 %v3270
        %3395 = vmatprep.subr.mxu0 %v3267
        %3396 = vmatpush1.msra.mxu0 %v3266
        %3397 = vmatprep.subr.mxu0 %v3263
        %3398 = vmatpush1.msra.mxu0 %v3262
        %3399 = vmatprep.subr.mxu0 %v3259
        %3400 = vmatpush1.msra.mxu0 %v3258
        %3401 = vmatprep.subr.mxu0 0.0
        %3402 = vmatpush2.msra.mxu0 0.0
        %3403 = vmatprep.subr.mxu0 0.0
        %3404 = vmatpush2.msra.mxu0 0.0
        %3405 = vmatprep.subr.mxu0 0.0
        %3406 = vmatpush2.msra.mxu0 0.0
        %3407 = vmatprep.subr.mxu0 0.0
        %3408 = vmatpush2.msra.mxu0 0.0
        %3409 = vmatprep.subr.mxu0 0.0
        %3410 = vmatpush2.msra.mxu0 0.0
        %3411 = vmatprep.subr.mxu0 0.0
        %3412 = vmatpush2.msra.mxu0 0.0
        %3413 = vmatprep.subr.mxu0 0.0
        %3414 = vmatpush2.msra.mxu0 0.0
        %3415 = vmatprep.subr.mxu0 0.0
        %3416 = vmatpush2.msra.mxu0 0.0
        %3417 = vmatprep.subr.mxu0 0.0
        %3418 = vmatpush2.msra.mxu0 0.0
        %3419 = vmatprep.subr.mxu0 0.0
        %3420 = vmatpush2.msra.mxu0 0.0
        %3421 = vmatprep.subr.mxu0 0.0
        %3422 = vmatpush2.msra.mxu0 0.0
        %3423 = vmatprep.subr.mxu0 0.0
        %3424 = vmatpush2.msra.mxu0 0.0
        %3425 = vmatprep.subr.mxu0 0.0
        %3426 = vmatpush2.msra.mxu0 0.0
        %3427 = vmatprep.subr.mxu0 0.0
        %3428 = vmatpush2.msra.mxu0 0.0
        %3429 = vmatprep.subr.mxu0 0.0
        %3430 = vmatpush2.msra.mxu0 0.0
        %3431 = vmatprep.subr.mxu0 0.0
        %3432 = vmatpush2.msra.mxu0 0.0
        %3433 = vmatprep.mubr.f32.mxu0 0.0
        %3434 = vmatmul.mubr.f32.gmra.mxu0 %v3296
        %v3435 = vpop.f32.mrf.mxu0
        %v3436 = vadd.f32 %v3293, %v3435
        %v3437 = vpop.f32.mrf.mxu0
        %v3438 = vadd.f32 %v3293, %v3437
        %3439 = vdwg.mxu0
        %v3440 = vtanh.pop %v3365
        %v3441 = vtanh.pop %v3367
        %v3442 = vtanh.pop %v3436
        %v3443 = vtanh.pop %v3438
        %v3448 = vcombine.low %v3440, %v3441
        %v3449 = vcombine.low %v3442, %v3443
        %v3451 = vunpack.c.l.s4 1966171168
        %v3452 = vunpack.c.0.s8 %v3451
        %v3453 = vlaneseq
        %v3454 = vshrl.u32 %v3453, 7
        %v3455 = vsub.s32 %v3452, %v3454
        %v3456 = vrot.slane %v3448, %v3455
        %v3458 = vunpack.c.l.s4 1966171168
        %v3459 = vunpack.c.0.s8 %v3458
        %v3460 = vlaneseq
        %v3461 = vshrl.u32 %v3460, 7
        %v3462 = vsub.s32 %v3459, %v3461
        %v3463 = vrot.slane %v3449, %v3462
        %v3464 = vcombine.low %v3456, %v3463
        %v3466 = vunpack.c.l.s4 1966171168
        %v3467 = vunpack.c.0.s8 %v3466
        %v3468 = vlaneseq
        %v3469 = vshrl.u32 %v3468, 7
        %v3470 = vsub.s32 %v3467, %v3469
        %v3471 = vrot.slane %v3464, %v3470
        %v3473 = vlaneseq
        %vm3474 = vcmp.ge.s32.totalorder %v3473, 0
        %vm3475 = vcmp.lt.s32.totalorder %v3473, 512
        %vm3476 = vmand %vm3474, %vm3475
        %3477 = vst.msk [vmem:[%s353] sm:$0xf] %vm3476, %v3471
        %s3478 = sand.u32 %s203, 1
        %s3479 = scalar_lea.sflag [#allocation4], %s3478
        %s3480 = sand.u32 %s203, 1
        %s3481 = smul.addr %s3480, 4
        %s3482 = scalar_lea.vmem [#allocation3], %s3481
        // Predicated region
        $region76: #{_lambda_.1} parent=70 // pred_check
          %p3483 = pneg %p213
        $region77: #{_lambda_.1} parent=70 // pred_check_branch
          %3485 = sbr.rel (%p3483) target = $region79
        $region78: #{_lambda_.1} parent=70 // pred_region
          %s3486 = smul.u32 4, %s22
          %s3488 = ssub.s32 64, 64
          %3489 = vsyncadd %s3479, %s3488
          %s3490 = smul.addr %s3486, 16
          %s3491 = scalar_lea.hbm %s8, %s3490
          %s3493 = sshll.u32 %s3482, 4
          %s3494 = int_to_ptr.vmem [resolvable:$true] %s3493
          %3496 = dma.vmem_to_hbm [thread:$0]  %s3494, 64, %s3491, %s3479
        $region79: #{_lambda_.1} parent=70 // pred_fallthru
          _
      $region71: #{_lambda_.1} parent=5 // pred_fallthru
        _
      %p3497 = scmp.le.s32.totalorder 2, %s17
      // Predicated region
      $region80: #{_lambda_.1} parent=5 // pred_check
        %p3498 = pneg %p3497
      $region81: #{_lambda_.1} parent=5 // pred_check_branch
        %3500 = sbr.rel (%p3498) target = $region83
      $region82: #{_lambda_.1} parent=5 // pred_region
        %s3501 = ssub.s32 %s17, 2
        // Predicated region
        $region84: #{_lambda_.1} parent=82 // pred_check
          %p3502 = pneg %p219
        $region85: #{_lambda_.1} parent=82 // pred_check_branch
          %3504 = sbr.rel (%p3502) target = $region87
        $region86: #{_lambda_.1} parent=82 // pred_region
          %s3505 = sand.u32 %s204, 1
          %s3506 = scalar_lea.sflag [#allocation4], %s3505
          %s3507 = sand.u32 %s204, 1
          %s3508 = smul.addr %s3507, 4
          %s3509 = scalar_lea.vmem [#allocation3], %s3508
          %3510 = dma.done %s3506, 64
        $region87: #{_lambda_.1} parent=82 // pred_fallthru
          _
      $region83: #{_lambda_.1} parent=5 // pred_fallthru
        _
    $region6: #{_lambda_.1} parent=1 // loop_footer
      %s21 = sadd.s32 1, %s17
    $region7: #{_lambda_.1} parent=1 // loop_footer_branch
      %16 = sbr.rel target = $region3
    $region8: #{_lambda_.1} parent=1 // loop_exit
      _
    %3511 = vsyncpa [#allocation4], 1
    %s3512 = scalar_lea.sflag [#allocation4], 1
    %3513 = vsyncpa %s3512, 1

</llo_original>
